<compile_context>
chip_gen: v5e
topology: v5e:2x2
jax: 0.10.0
libtpu: 0.0.40
codegen_flags: <defaults>
</compile_context>

<pallas_src>
import functools

import jax
import jax.numpy as jnp
from jax.experimental import pallas as pl
from jax.experimental.pallas import tpu as pltpu


def _window_attention_kernel(
    x_ref, wqkv_ref, bqkv_ref, wp_ref, bp_ref, bias_ref, out_ref,
    *, num_heads, head_dim, bw, n,
):
    HD = num_heads * head_dim
    M = bw * n
    C = wp_ref.shape[-1]

    x = x_ref[...]                                               # (Bw*N, C)

    # Fused QKV projection on the MXU: (Bw*N, C) @ (C, 3*HD) + bias.
    # The softmax scale is already folded into the q columns of wqkv/bqkv.
    qkv = jnp.dot(x, wqkv_ref[...],
                  preferred_element_type=jnp.float32) + bqkv_ref[0]
    qkv3 = qkv.reshape(bw, n, 3 * HD)                            # (Bw, N, 3*HD)

    bias = bias_ref[...]                                         # (Bw, H, N, N)

    acc = jnp.zeros((M, C), jnp.float32)
    for h in range(num_heads):                                   # H is small; static unroll
        lo = h * head_dim
        q = qkv3[:, :, lo:lo + head_dim]                         # (Bw, N, D) (pre-scaled)
        k = qkv3[:, :, HD + lo:HD + lo + head_dim]               # (Bw, N, D)
        v = qkv3[:, :, 2 * HD + lo:2 * HD + lo + head_dim]       # (Bw, N, D)

        # Window-batched scores: (Bw, N, N)
        s = jnp.einsum('bnd,bmd->bnm', q, k,
                       preferred_element_type=jnp.float32)
        s = s + bias[:, h]                                       # rel-pos bias (+ shift mask)

        # Numerically-stable softmax; denominator reciprocal on the EUP.
        mx = jnp.max(s, axis=-1, keepdims=True)
        e = jnp.exp(s - mx)
        p = e * pl.reciprocal(jnp.sum(e, axis=-1, keepdims=True), approx=True)

        # attn @ v, then distribute the output projection over heads
        # (avoids concatenating heads along lanes).
        o = jnp.einsum('bnm,bmd->bnd', p, v,
                       preferred_element_type=jnp.float32)       # (Bw, N, D)
        acc = acc + jnp.dot(o.reshape(M, head_dim), wp_ref[h],
                            preferred_element_type=jnp.float32)  # (M, C)

    out_ref[...] = (acc + bp_ref[0]).astype(out_ref.dtype)


def _pick_block_windows(B_, nW, N, target_rows=512):
    """Bw = nW * k, k | (B_ // nW), with Bw*N close to (<=) target_rows."""
    reps = B_ // nW
    k = 1
    for d in range(1, reps + 1):
        if reps % d == 0 and nW * d * N <= target_rows:
            k = d
    return nW * k


def window_attention(x, params, rel_pos_bias, mask, *, num_heads, head_dim,
                     block_windows=None):
    """x: (B_, N, C) float32.  mask: (nW, N, N) or None."""
    B_, N, C = x.shape
    H, D = num_heads, head_dim
    HD = H * D
    scale = D ** (-0.5)

    wq, bq, wk, bk, wv, bv, wp, bp = params

    # Fuse q/k/v into one matmul and fold the softmax scale into the q part.
    wqkv = jnp.concatenate([wq * scale, wk, wv], axis=1)         # (C, 3*HD)
    bqkv = jnp.concatenate([bq * scale, bk, bv], axis=1)         # (1, 3*HD)
    wp3 = wp.reshape(H, D, C)                                    # (H, D, C)

    # Pre-combine relative-position bias and (optional) shift mask.
    if mask is None:
        comb = rel_pos_bias[None]                                # (1, H, N, N)
    else:
        comb = rel_pos_bias[None] + mask[:, None]                # (nW, H, N, N)
    nW = comb.shape[0]
    assert B_ % nW == 0, "number of windows must be a multiple of nW"

    # Windows folded per grid step.  Bw % nW == 0 so the per-block bias/mask
    # pattern is identical for every block -> constant index_map (DMA'd once).
    Bw = _pick_block_windows(B_, nW, N) if block_windows is None else block_windows
    assert B_ % Bw == 0 and Bw % nW == 0
    bias = jnp.tile(comb, (Bw // nW, 1, 1, 1))                   # (Bw, H, N, N)

    # Flatten windows*tokens so the kernel sees a lane/sublane-friendly 2-D slab.
    xf = x.reshape(B_ * N, C)
    M = Bw * N

    kernel = functools.partial(
        _window_attention_kernel,
        num_heads=H, head_dim=D, bw=Bw, n=N,
    )

    const2 = lambda g: (0, 0)

    out = pl.pallas_call(
        kernel,
        out_shape=jax.ShapeDtypeStruct((B_ * N, C), x.dtype),
        grid_spec=pltpu.PrefetchScalarGridSpec(
            num_scalar_prefetch=0,
            grid=(B_ // Bw,),
            in_specs=[
                pl.BlockSpec((M, C), lambda g: (g, 0)),          # x slab
                pl.BlockSpec((C, 3 * HD), const2),               # fused wqkv
                pl.BlockSpec((1, 3 * HD), const2),               # fused bqkv
                pl.BlockSpec((H, D, C), lambda g: (0, 0, 0)),    # wproj (H, D, C)
                pl.BlockSpec((1, C), const2),                    # bproj
                pl.BlockSpec((Bw, H, N, N), lambda g: (0, 0, 0, 0)),  # bias(+mask)
            ],
            out_specs=pl.BlockSpec((M, C), lambda g: (g, 0)),
        ),
        compiler_params=pltpu.CompilerParams(
            dimension_semantics=("parallel",)),
    )(xf, wqkv, bqkv, wp3, bp, bias)

    return out.reshape(B_, N, C)


def make_relative_position_index(window_size):
    Wh, Ww = window_size
    coords_h = jnp.arange(Wh)
    coords_w = jnp.arange(Ww)
    coords = jnp.stack(jnp.meshgrid(coords_h, coords_w, indexing="ij"))   # (2, Wh, Ww)
    coords_flat = coords.reshape(2, -1)                                    # (2, N)
    rel = coords_flat[:, :, None] - coords_flat[:, None, :]                # (2, N, N)
    rel = jnp.transpose(rel, (1, 2, 0))                                    # (N, N, 2)
    rel = rel.at[:, :, 0].add(Wh - 1)
    rel = rel.at[:, :, 1].add(Ww - 1)
    rel = rel.at[:, :, 0].multiply(2 * Ww - 1)
    return rel.sum(-1)                                                     # (N, N)


def reference_forward(x, params, rel_pos_bias, mask, *, num_heads, head_dim):
    """Pure-JAX reference matching the PyTorch forward (dropout p=0)."""
    B_, N, C = x.shape
    wq, bq, wk, bk, wv, bv, wp, bp = params
    scale = head_dim ** (-0.5)

    def heads(y):  # (B_, N, H*D) -> (B_, H, N, D)
        return jnp.transpose(y.reshape(B_, N, num_heads, head_dim), (0, 2, 1, 3))

    q = heads(x @ wq + bq[0])
    k = heads(x @ wk + bk[0])
    v = heads(x @ wv + bv[0])
    attn = jnp.einsum("bhnd,bhmd->bhnm", q, k) * scale
    attn = attn + rel_pos_bias[None]
    if mask is not None:
        nW = mask.shape[0]
        attn = attn.reshape(B_ // nW, nW, num_heads, N, N) + mask[None, :, None]
        attn = attn.reshape(B_, num_heads, N, N)
    attn = jax.nn.softmax(attn, axis=-1)
    out = jnp.einsum("bhnm,bhmd->bhnd", attn, v)
    out = jnp.transpose(out, (0, 2, 1, 3)).reshape(B_, N, num_heads * head_dim)
    return out @ wp + bp[0]


if __name__ == "__main__":
    # Small config consistent with the module: head_dim is fixed to 16.
    embed_dim = 32
    window_size = (4, 4)
    num_heads = 4
    head_dim = 16
    HD = num_heads * head_dim
    N = window_size[0] * window_size[1]
    B = 2            # images
    nW = 4           # windows per image
    B_ = B * nW      # total windows

    key = jax.random.PRNGKey(0)
    keys = jax.random.split(key, 12)

    # Deterministic parameter init (trunc_normal std=0.02 approximated by normal).
    rpb_table = 0.02 * jax.random.normal(
        keys[0], ((2 * window_size[0] - 1) * (2 * window_size[1] - 1), num_heads),
        jnp.float32)
    wq = 0.02 * jax.random.normal(keys[1], (embed_dim, HD), jnp.float32)
    bq = 0.02 * jax.random.normal(keys[2], (1, HD), jnp.float32)
    wk = 0.02 * jax.random.normal(keys[3], (embed_dim, HD), jnp.float32)
    bk = 0.02 * jax.random.normal(keys[4], (1, HD), jnp.float32)
    wv = 0.02 * jax.random.normal(keys[5], (embed_dim, HD), jnp.float32)
    bv = 0.02 * jax.random.normal(keys[6], (1, HD), jnp.float32)
    wp = 0.02 * jax.random.normal(keys[7], (HD, embed_dim), jnp.float32)
    bp = 0.02 * jax.random.normal(keys[8], (1, embed_dim), jnp.float32)
    params = (wq, bq, wk, bk, wv, bv, wp, bp)

    # Relative position bias gather (glue, plain JAX): (num_heads, N, N)
    rel_idx = make_relative_position_index(window_size)                 # (N, N)
    rel_pos_bias = rpb_table[rel_idx.reshape(-1)].reshape(N, N, num_heads)
    rel_pos_bias = jnp.transpose(rel_pos_bias, (2, 0, 1)).astype(jnp.float32)

    # Inputs: windowed tokens and a shift mask (as produced by SwinIR shifting).
    x = jax.random.normal(keys[9], (B_, N, embed_dim), jnp.float32)
    mask = jnp.where(
        jax.random.bernoulli(keys[10], 0.2, (nW, N, N)), -100.0, 0.0
    ).astype(jnp.float32)

    # TODO(synk): attn_drop / proj_drop have p=0.0 in eval -> identity, not emitted.

    out = window_attention(x, params, rel_pos_bias, mask,
                           num_heads=num_heads, head_dim=head_dim)
    out = jax.block_until_ready(out)

    ref = reference_forward(x, params, rel_pos_bias, mask,
                            num_heads=num_heads, head_dim=head_dim)
    assert out.shape == (B_, N, embed_dim)
    assert jnp.allclose(out, ref, atol=2e-4, rtol=2e-4), "mismatch vs reference"

    # Also exercise the mask=None path (no shift) once.
    out_nomask = jax.block_until_ready(
        window_attention(x, params, rel_pos_bias, None,
                         num_heads=num_heads, head_dim=head_dim))
    ref_nomask = reference_forward(x, params, rel_pos_bias, None,
                                   num_heads=num_heads, head_dim=head_dim)
    assert jnp.allclose(out_nomask, ref_nomask, atol=2e-4, rtol=2e-4), \
        "mismatch vs reference (mask=None)"

    print("KERNEL_OK")
</pallas_src>

<mosaic_0001>
module attributes {stable_mosaic.version = 11 : i64} {
  func.func @_window_attention_kernel(%arg0: i32, %arg1: memref<128x32xf32, #tpu.memory_space<vmem>>, %arg2: memref<32x192xf32, #tpu.memory_space<vmem>>, %arg3: memref<1x192xf32, #tpu.memory_space<vmem>>, %arg4: memref<4x16x32xf32, #tpu.memory_space<vmem>>, %arg5: memref<1x32xf32, #tpu.memory_space<vmem>>, %arg6: memref<8x4x16x16xf32, #tpu.memory_space<vmem>>, %arg7: memref<128x32xf32, #tpu.memory_space<vmem>>) attributes {dimension_semantics = [#tpu.dimension_semantics<parallel>], iteration_bounds = array<i64: 1>, scalar_prefetch = 0 : i64, scratch_operands = 0 : i64, tpu.core_type = #tpu.core_type<tc>, window_params = [{transform_indices = @transform_0, window_bounds = array<i64: 128, 32>}, {pipeline_mode = #tpu.pipeline_mode<synchronous>, transform_indices = @transform_1, window_bounds = array<i64: 32, 192>}, {pipeline_mode = #tpu.pipeline_mode<synchronous>, transform_indices = @transform_2, window_bounds = array<i64: 1, 192>}, {pipeline_mode = #tpu.pipeline_mode<synchronous>, transform_indices = @transform_3, window_bounds = array<i64: 4, 16, 32>}, {pipeline_mode = #tpu.pipeline_mode<synchronous>, transform_indices = @transform_4, window_bounds = array<i64: 1, 32>}, {pipeline_mode = #tpu.pipeline_mode<synchronous>, transform_indices = @transform_5, window_bounds = array<i64: 8, 4, 16, 16>}, {transform_indices = @transform_6, window_bounds = array<i64: 128, 32>}]} {
    %c0 = arith.constant 0 : index
    %c0_0 = arith.constant 0 : index
    %0 = vector.load %arg1[%c0, %c0_0] : memref<128x32xf32, #tpu.memory_space<vmem>>, vector<128x32xf32>
    %c0_1 = arith.constant 0 : index
    %c0_2 = arith.constant 0 : index
    %1 = vector.load %arg2[%c0_1, %c0_2] : memref<32x192xf32, #tpu.memory_space<vmem>>, vector<32x192xf32>
    %cst = arith.constant dense<0.000000e+00> : vector<128x192xf32>
    %2 = tpu.matmul %0, %1, %cst {dimension_numbers = #tpu.dot_dimension_numbers<[1], [0], [0], [1], [0, 0, 1, 1], [], []>} : vector<128x32xf32>, vector<32x192xf32>, vector<128x192xf32> -> vector<128x192xf32>
    %c0_3 = arith.constant 0 : index
    %c0_4 = arith.constant 0 : index
    %3 = vector.load %arg3[%c0_3, %c0_4] : memref<1x192xf32, #tpu.memory_space<vmem>>, vector<1x192xf32>
    %4 = vector.shape_cast %3 : vector<1x192xf32> to vector<192xf32>
    %5 = vector.shape_cast %4 : vector<192xf32> to vector<1x192xf32>
    %6 = vector.broadcast %5 : vector<1x192xf32> to vector<128x192xf32>
    %7 = arith.addf %2, %6 : vector<128x192xf32>
    %8 = vector.shape_cast %7 : vector<128x192xf32> to vector<8x16x192xf32>
    %c0_5 = arith.constant 0 : index
    %c0_6 = arith.constant 0 : index
    %c0_7 = arith.constant 0 : index
    %c0_8 = arith.constant 0 : index
    %9 = vector.load %arg6[%c0_5, %c0_6, %c0_7, %c0_8] : memref<8x4x16x16xf32, #tpu.memory_space<vmem>>, vector<8x4x16x16xf32>
    %cst_9 = arith.constant 0.000000e+00 : f32
    %10 = vector.broadcast %cst_9 : f32 to vector<128x32xf32>
    %11 = vector.extract_strided_slice %8 {offsets = [0, 0, 0], sizes = [8, 16, 16], strides = [1, 1, 1]} : vector<8x16x192xf32> to vector<8x16x16xf32>
    %12 = vector.extract_strided_slice %8 {offsets = [0, 0, 64], sizes = [8, 16, 16], strides = [1, 1, 1]} : vector<8x16x192xf32> to vector<8x16x16xf32>
    %13 = vector.extract_strided_slice %8 {offsets = [0, 0, 128], sizes = [8, 16, 16], strides = [1, 1, 1]} : vector<8x16x192xf32> to vector<8x16x16xf32>
    "tpu.trace_start"() <{level = 10 : i32, message = "bnd,bmd->bnm"}> : () -> ()
    %cst_10 = arith.constant dense<0.000000e+00> : vector<8x16x16xf32>
    %14 = tpu.matmul %11, %12, %cst_10 {dimension_numbers = #tpu.dot_dimension_numbers<[2], [2], [1], [1], [0, 0, 0, 1, 1, 1], [0], [0]>} : vector<8x16x16xf32>, vector<8x16x16xf32>, vector<8x16x16xf32> -> vector<8x16x16xf32>
    "tpu.trace_stop"() : () -> ()
    %15 = vector.extract_strided_slice %9 {offsets = [0, 0, 0, 0], sizes = [8, 1, 16, 16], strides = [1, 1, 1, 1]} : vector<8x4x16x16xf32> to vector<8x1x16x16xf32>
    %16 = vector.shape_cast %15 : vector<8x1x16x16xf32> to vector<8x16x16xf32>
    %17 = arith.addf %14, %16 : vector<8x16x16xf32>
    %cst_11 = arith.constant dense<0xFF800000> : vector<8x16xf32>
    %18 = vector.multi_reduction <maximumf>, %17, %cst_11 [2] : vector<8x16x16xf32> to vector<8x16xf32>
    %19 = vector.shape_cast %18 : vector<8x16xf32> to vector<8x16x1xf32>
    %20 = vector.broadcast %19 : vector<8x16x1xf32> to vector<8x16x16xf32>
    %21 = arith.subf %17, %20 : vector<8x16x16xf32>
    %22 = math.exp %21 : vector<8x16x16xf32>
    %cst_12 = arith.constant dense<0.000000e+00> : vector<8x16xf32>
    %23 = vector.multi_reduction <add>, %22, %cst_12 [2] : vector<8x16x16xf32> to vector<8x16xf32>
    %24 = vector.shape_cast %23 : vector<8x16xf32> to vector<8x16x1xf32>
    %25 = tpu.reciprocal %24 {approx = true} : vector<8x16x1xf32> -> vector<8x16x1xf32>
    %26 = vector.broadcast %25 : vector<8x16x1xf32> to vector<8x16x16xf32>
    %27 = arith.mulf %22, %26 : vector<8x16x16xf32>
    "tpu.trace_start"() <{level = 10 : i32, message = "bnm,bmd->bnd"}> : () -> ()
    %cst_13 = arith.constant dense<0.000000e+00> : vector<8x16x16xf32>
    %28 = tpu.matmul %27, %13, %cst_13 {dimension_numbers = #tpu.dot_dimension_numbers<[2], [1], [1], [2], [0, 0, 0, 1, 1, 2], [0], [0]>} : vector<8x16x16xf32>, vector<8x16x16xf32>, vector<8x16x16xf32> -> vector<8x16x16xf32>
    "tpu.trace_stop"() : () -> ()
    %29 = vector.shape_cast %28 : vector<8x16x16xf32> to vector<128x16xf32>
    %c0_14 = arith.constant 0 : index
    %c0_15 = arith.constant 0 : index
    %c0_16 = arith.constant 0 : index
    %30 = vector.load %arg4[%c0_14, %c0_15, %c0_16] : memref<4x16x32xf32, #tpu.memory_space<vmem>>, vector<1x16x32xf32>
    %31 = vector.shape_cast %30 : vector<1x16x32xf32> to vector<16x32xf32>
    %cst_17 = arith.constant dense<0.000000e+00> : vector<128x32xf32>
    %32 = tpu.matmul %29, %31, %cst_17 {dimension_numbers = #tpu.dot_dimension_numbers<[1], [0], [0], [1], [0, 0, 1, 1], [], []>} : vector<128x16xf32>, vector<16x32xf32>, vector<128x32xf32> -> vector<128x32xf32>
    %33 = arith.addf %10, %32 : vector<128x32xf32>
    %34 = vector.extract_strided_slice %8 {offsets = [0, 0, 16], sizes = [8, 16, 16], strides = [1, 1, 1]} : vector<8x16x192xf32> to vector<8x16x16xf32>
    %35 = vector.extract_strided_slice %8 {offsets = [0, 0, 80], sizes = [8, 16, 16], strides = [1, 1, 1]} : vector<8x16x192xf32> to vector<8x16x16xf32>
    %36 = vector.extract_strided_slice %8 {offsets = [0, 0, 144], sizes = [8, 16, 16], strides = [1, 1, 1]} : vector<8x16x192xf32> to vector<8x16x16xf32>
    "tpu.trace_start"() <{level = 10 : i32, message = "bnd,bmd->bnm"}> : () -> ()
    %cst_18 = arith.constant dense<0.000000e+00> : vector<8x16x16xf32>
    %37 = tpu.matmul %34, %35, %cst_18 {dimension_numbers = #tpu.dot_dimension_numbers<[2], [2], [1], [1], [0, 0, 0, 1, 1, 1], [0], [0]>} : vector<8x16x16xf32>, vector<8x16x16xf32>, vector<8x16x16xf32> -> vector<8x16x16xf32>
    "tpu.trace_stop"() : () -> ()
    %38 = vector.extract_strided_slice %9 {offsets = [0, 1, 0, 0], sizes = [8, 1, 16, 16], strides = [1, 1, 1, 1]} : vector<8x4x16x16xf32> to vector<8x1x16x16xf32>
    %39 = vector.shape_cast %38 : vector<8x1x16x16xf32> to vector<8x16x16xf32>
    %40 = arith.addf %37, %39 : vector<8x16x16xf32>
    %cst_19 = arith.constant dense<0xFF800000> : vector<8x16xf32>
    %41 = vector.multi_reduction <maximumf>, %40, %cst_19 [2] : vector<8x16x16xf32> to vector<8x16xf32>
    %42 = vector.shape_cast %41 : vector<8x16xf32> to vector<8x16x1xf32>
    %43 = vector.broadcast %42 : vector<8x16x1xf32> to vector<8x16x16xf32>
    %44 = arith.subf %40, %43 : vector<8x16x16xf32>
    %45 = math.exp %44 : vector<8x16x16xf32>
    %cst_20 = arith.constant dense<0.000000e+00> : vector<8x16xf32>
    %46 = vector.multi_reduction <add>, %45, %cst_20 [2] : vector<8x16x16xf32> to vector<8x16xf32>
    %47 = vector.shape_cast %46 : vector<8x16xf32> to vector<8x16x1xf32>
    %48 = tpu.reciprocal %47 {approx = true} : vector<8x16x1xf32> -> vector<8x16x1xf32>
    %49 = vector.broadcast %48 : vector<8x16x1xf32> to vector<8x16x16xf32>
    %50 = arith.mulf %45, %49 : vector<8x16x16xf32>
    "tpu.trace_start"() <{level = 10 : i32, message = "bnm,bmd->bnd"}> : () -> ()
    %cst_21 = arith.constant dense<0.000000e+00> : vector<8x16x16xf32>
    %51 = tpu.matmul %50, %36, %cst_21 {dimension_numbers = #tpu.dot_dimension_numbers<[2], [1], [1], [2], [0, 0, 0, 1, 1, 2], [0], [0]>} : vector<8x16x16xf32>, vector<8x16x16xf32>, vector<8x16x16xf32> -> vector<8x16x16xf32>
    "tpu.trace_stop"() : () -> ()
    %52 = vector.shape_cast %51 : vector<8x16x16xf32> to vector<128x16xf32>
    %c1 = arith.constant 1 : index
    %c0_22 = arith.constant 0 : index
    %c0_23 = arith.constant 0 : index
    %53 = vector.load %arg4[%c1, %c0_22, %c0_23] : memref<4x16x32xf32, #tpu.memory_space<vmem>>, vector<1x16x32xf32>
    %54 = vector.shape_cast %53 : vector<1x16x32xf32> to vector<16x32xf32>
    %cst_24 = arith.constant dense<0.000000e+00> : vector<128x32xf32>
    %55 = tpu.matmul %52, %54, %cst_24 {dimension_numbers = #tpu.dot_dimension_numbers<[1], [0], [0], [1], [0, 0, 1, 1], [], []>} : vector<128x16xf32>, vector<16x32xf32>, vector<128x32xf32> -> vector<128x32xf32>
    %56 = arith.addf %33, %55 : vector<128x32xf32>
    %57 = vector.extract_strided_slice %8 {offsets = [0, 0, 32], sizes = [8, 16, 16], strides = [1, 1, 1]} : vector<8x16x192xf32> to vector<8x16x16xf32>
    %58 = vector.extract_strided_slice %8 {offsets = [0, 0, 96], sizes = [8, 16, 16], strides = [1, 1, 1]} : vector<8x16x192xf32> to vector<8x16x16xf32>
    %59 = vector.extract_strided_slice %8 {offsets = [0, 0, 160], sizes = [8, 16, 16], strides = [1, 1, 1]} : vector<8x16x192xf32> to vector<8x16x16xf32>
    "tpu.trace_start"() <{level = 10 : i32, message = "bnd,bmd->bnm"}> : () -> ()
    %cst_25 = arith.constant dense<0.000000e+00> : vector<8x16x16xf32>
    %60 = tpu.matmul %57, %58, %cst_25 {dimension_numbers = #tpu.dot_dimension_numbers<[2], [2], [1], [1], [0, 0, 0, 1, 1, 1], [0], [0]>} : vector<8x16x16xf32>, vector<8x16x16xf32>, vector<8x16x16xf32> -> vector<8x16x16xf32>
    "tpu.trace_stop"() : () -> ()
    %61 = vector.extract_strided_slice %9 {offsets = [0, 2, 0, 0], sizes = [8, 1, 16, 16], strides = [1, 1, 1, 1]} : vector<8x4x16x16xf32> to vector<8x1x16x16xf32>
    %62 = vector.shape_cast %61 : vector<8x1x16x16xf32> to vector<8x16x16xf32>
    %63 = arith.addf %60, %62 : vector<8x16x16xf32>
    %cst_26 = arith.constant dense<0xFF800000> : vector<8x16xf32>
    %64 = vector.multi_reduction <maximumf>, %63, %cst_26 [2] : vector<8x16x16xf32> to vector<8x16xf32>
    %65 = vector.shape_cast %64 : vector<8x16xf32> to vector<8x16x1xf32>
    %66 = vector.broadcast %65 : vector<8x16x1xf32> to vector<8x16x16xf32>
    %67 = arith.subf %63, %66 : vector<8x16x16xf32>
    %68 = math.exp %67 : vector<8x16x16xf32>
    %cst_27 = arith.constant dense<0.000000e+00> : vector<8x16xf32>
    %69 = vector.multi_reduction <add>, %68, %cst_27 [2] : vector<8x16x16xf32> to vector<8x16xf32>
    %70 = vector.shape_cast %69 : vector<8x16xf32> to vector<8x16x1xf32>
    %71 = tpu.reciprocal %70 {approx = true} : vector<8x16x1xf32> -> vector<8x16x1xf32>
    %72 = vector.broadcast %71 : vector<8x16x1xf32> to vector<8x16x16xf32>
    %73 = arith.mulf %68, %72 : vector<8x16x16xf32>
    "tpu.trace_start"() <{level = 10 : i32, message = "bnm,bmd->bnd"}> : () -> ()
    %cst_28 = arith.constant dense<0.000000e+00> : vector<8x16x16xf32>
    %74 = tpu.matmul %73, %59, %cst_28 {dimension_numbers = #tpu.dot_dimension_numbers<[2], [1], [1], [2], [0, 0, 0, 1, 1, 2], [0], [0]>} : vector<8x16x16xf32>, vector<8x16x16xf32>, vector<8x16x16xf32> -> vector<8x16x16xf32>
    "tpu.trace_stop"() : () -> ()
    %75 = vector.shape_cast %74 : vector<8x16x16xf32> to vector<128x16xf32>
    %c2 = arith.constant 2 : index
    %c0_29 = arith.constant 0 : index
    %c0_30 = arith.constant 0 : index
    %76 = vector.load %arg4[%c2, %c0_29, %c0_30] : memref<4x16x32xf32, #tpu.memory_space<vmem>>, vector<1x16x32xf32>
    %77 = vector.shape_cast %76 : vector<1x16x32xf32> to vector<16x32xf32>
    %cst_31 = arith.constant dense<0.000000e+00> : vector<128x32xf32>
    %78 = tpu.matmul %75, %77, %cst_31 {dimension_numbers = #tpu.dot_dimension_numbers<[1], [0], [0], [1], [0, 0, 1, 1], [], []>} : vector<128x16xf32>, vector<16x32xf32>, vector<128x32xf32> -> vector<128x32xf32>
    %79 = arith.addf %56, %78 : vector<128x32xf32>
    %80 = vector.extract_strided_slice %8 {offsets = [0, 0, 48], sizes = [8, 16, 16], strides = [1, 1, 1]} : vector<8x16x192xf32> to vector<8x16x16xf32>
    %81 = vector.extract_strided_slice %8 {offsets = [0, 0, 112], sizes = [8, 16, 16], strides = [1, 1, 1]} : vector<8x16x192xf32> to vector<8x16x16xf32>
    %82 = vector.extract_strided_slice %8 {offsets = [0, 0, 176], sizes = [8, 16, 16], strides = [1, 1, 1]} : vector<8x16x192xf32> to vector<8x16x16xf32>
    "tpu.trace_start"() <{level = 10 : i32, message = "bnd,bmd->bnm"}> : () -> ()
    %cst_32 = arith.constant dense<0.000000e+00> : vector<8x16x16xf32>
    %83 = tpu.matmul %80, %81, %cst_32 {dimension_numbers = #tpu.dot_dimension_numbers<[2], [2], [1], [1], [0, 0, 0, 1, 1, 1], [0], [0]>} : vector<8x16x16xf32>, vector<8x16x16xf32>, vector<8x16x16xf32> -> vector<8x16x16xf32>
    "tpu.trace_stop"() : () -> ()
    %84 = vector.extract_strided_slice %9 {offsets = [0, 3, 0, 0], sizes = [8, 1, 16, 16], strides = [1, 1, 1, 1]} : vector<8x4x16x16xf32> to vector<8x1x16x16xf32>
    %85 = vector.shape_cast %84 : vector<8x1x16x16xf32> to vector<8x16x16xf32>
    %86 = arith.addf %83, %85 : vector<8x16x16xf32>
    %cst_33 = arith.constant dense<0xFF800000> : vector<8x16xf32>
    %87 = vector.multi_reduction <maximumf>, %86, %cst_33 [2] : vector<8x16x16xf32> to vector<8x16xf32>
    %88 = vector.shape_cast %87 : vector<8x16xf32> to vector<8x16x1xf32>
    %89 = vector.broadcast %88 : vector<8x16x1xf32> to vector<8x16x16xf32>
    %90 = arith.subf %86, %89 : vector<8x16x16xf32>
    %91 = math.exp %90 : vector<8x16x16xf32>
    %cst_34 = arith.constant dense<0.000000e+00> : vector<8x16xf32>
    %92 = vector.multi_reduction <add>, %91, %cst_34 [2] : vector<8x16x16xf32> to vector<8x16xf32>
    %93 = vector.shape_cast %92 : vector<8x16xf32> to vector<8x16x1xf32>
    %94 = tpu.reciprocal %93 {approx = true} : vector<8x16x1xf32> -> vector<8x16x1xf32>
    %95 = vector.broadcast %94 : vector<8x16x1xf32> to vector<8x16x16xf32>
    %96 = arith.mulf %91, %95 : vector<8x16x16xf32>
    "tpu.trace_start"() <{level = 10 : i32, message = "bnm,bmd->bnd"}> : () -> ()
    %cst_35 = arith.constant dense<0.000000e+00> : vector<8x16x16xf32>
    %97 = tpu.matmul %96, %82, %cst_35 {dimension_numbers = #tpu.dot_dimension_numbers<[2], [1], [1], [2], [0, 0, 0, 1, 1, 2], [0], [0]>} : vector<8x16x16xf32>, vector<8x16x16xf32>, vector<8x16x16xf32> -> vector<8x16x16xf32>
    "tpu.trace_stop"() : () -> ()
    %98 = vector.shape_cast %97 : vector<8x16x16xf32> to vector<128x16xf32>
    %c3 = arith.constant 3 : index
    %c0_36 = arith.constant 0 : index
    %c0_37 = arith.constant 0 : index
    %99 = vector.load %arg4[%c3, %c0_36, %c0_37] : memref<4x16x32xf32, #tpu.memory_space<vmem>>, vector<1x16x32xf32>
    %100 = vector.shape_cast %99 : vector<1x16x32xf32> to vector<16x32xf32>
    %cst_38 = arith.constant dense<0.000000e+00> : vector<128x32xf32>
    %101 = tpu.matmul %98, %100, %cst_38 {dimension_numbers = #tpu.dot_dimension_numbers<[1], [0], [0], [1], [0, 0, 1, 1], [], []>} : vector<128x16xf32>, vector<16x32xf32>, vector<128x32xf32> -> vector<128x32xf32>
    %102 = arith.addf %79, %101 : vector<128x32xf32>
    %c0_39 = arith.constant 0 : index
    %c0_40 = arith.constant 0 : index
    %103 = vector.load %arg5[%c0_39, %c0_40] : memref<1x32xf32, #tpu.memory_space<vmem>>, vector<1x32xf32>
    %104 = vector.shape_cast %103 : vector<1x32xf32> to vector<32xf32>
    %105 = vector.shape_cast %104 : vector<32xf32> to vector<1x32xf32>
    %106 = vector.broadcast %105 : vector<1x32xf32> to vector<128x32xf32>
    %107 = arith.addf %102, %106 : vector<128x32xf32>
    %c0_41 = arith.constant 0 : index
    %c0_42 = arith.constant 0 : index
    %108 = vector.load %arg7[%c0_41, %c0_42] : memref<128x32xf32, #tpu.memory_space<vmem>>, vector<128x32xf32>
    tpu.vector_store %arg7[%c0_41, %c0_42], %107 {strides = array<i32>} : memref<128x32xf32, #tpu.memory_space<vmem>>, vector<128x32xf32>,
    return
  }
  func.func @transform_0(%arg0: i32) -> (i32, i32) {
    %c0_i32 = arith.constant 0 : i32
    %c0_i32_0 = arith.constant 0 : i32
    return %arg0, %c0_i32 : i32, i32
  }
  func.func @transform_1(%arg0: i32) -> (i32, i32) {
    %c0_i32 = arith.constant 0 : i32
    %c0_i32_0 = arith.constant 0 : i32
    %c0_i32_1 = arith.constant 0 : i32
    return %c0_i32, %c0_i32_0 : i32, i32
  }
  func.func @transform_2(%arg0: i32) -> (i32, i32) {
    %c0_i32 = arith.constant 0 : i32
    %c0_i32_0 = arith.constant 0 : i32
    %c0_i32_1 = arith.constant 0 : i32
    return %c0_i32, %c0_i32_0 : i32, i32
  }
  func.func @transform_3(%arg0: i32) -> (i32, i32, i32) {
    %c0_i32 = arith.constant 0 : i32
    %c0_i32_0 = arith.constant 0 : i32
    %c0_i32_1 = arith.constant 0 : i32
    %c0_i32_2 = arith.constant 0 : i32
    return %c0_i32, %c0_i32_0, %c0_i32_1 : i32, i32, i32
  }
  func.func @transform_4(%arg0: i32) -> (i32, i32) {
    %c0_i32 = arith.constant 0 : i32
    %c0_i32_0 = arith.constant 0 : i32
    %c0_i32_1 = arith.constant 0 : i32
    return %c0_i32, %c0_i32_0 : i32, i32
  }
  func.func @transform_5(%arg0: i32) -> (i32, i32, i32, i32) {
    %c0_i32 = arith.constant 0 : i32
    %c0_i32_0 = arith.constant 0 : i32
    %c0_i32_1 = arith.constant 0 : i32
    %c0_i32_2 = arith.constant 0 : i32
    %c0_i32_3 = arith.constant 0 : i32
    return %c0_i32, %c0_i32_0, %c0_i32_1, %c0_i32_2 : i32, i32, i32, i32
  }
  func.func @transform_6(%arg0: i32) -> (i32, i32) {
    %c0_i32 = arith.constant 0 : i32
    %c0_i32_0 = arith.constant 0 : i32
    return %arg0, %c0_i32 : i32, i32
  }
}

</mosaic_0001>

<llo_original>
// kernel: tpu_custom_call.1
$region0: #{tpu_custom_call.1}
  #allocation0 [shape = 'u32[]', space=smem, size = 0x4, offset = 0x4, fixed_abs, tag = 'smem constant byte address 0x4 - core index']
  #allocation1 [shape = 'u32[72,128]{1,0:T(1,128)}', space=vmem, size = 0x9000, scoped, tag = 'internal scratch']
  %s0 = inlined_call_operand.vmem [shape: f32[128,32], index: 0, kind: input, shape index: {}]
  %s1 = inlined_call_operand.vmem [shape: f32[32,192], index: 1, kind: input, shape index: {}]
  %s2 = inlined_call_operand.vmem [shape: f32[1,192], index: 2, kind: input, shape index: {}]
  %s3 = inlined_call_operand.vmem [shape: f32[4,16,32], index: 3, kind: input, shape index: {}]
  %s4 = inlined_call_operand.vmem [shape: f32[1,32], index: 4, kind: input, shape index: {}]
  %s5 = inlined_call_operand.hbm [shape: f32[8,4,16,16], index: 5, kind: input, shape index: {}]
  %s6 = inlined_call_operand.vmem [shape: f32[128,32], index: 6, kind: output, shape index: {}]
  %s7 = sld [smem:[#allocation0]]
  $region38: #{tpu_custom_call.1} parent=0
    _
  %s9 = ssub.s32 1, %s7
  %s10 = scalar_select 0, %s9, %s7
  $region1: #{tpu_custom_call.1} parent=0
    #allocation2 [shape = 'u8[262144]{0}', space=vmem, size = 0x40000, scoped, tag = 'input window, operand 5, single buffered']
    #allocation3 [shape = 's32[1]{0}', space=sflag, size = 0x4, scoped, tag = 'scoped memory for tpu_custom_call.1']
    %11 = vsyncpa [#allocation3], 0
    // Predicated region
    $region2: #{tpu_custom_call.1} parent=1 // pred_check
      _
    $region3: #{tpu_custom_call.1} parent=1 // pred_check_branch
      %13 = sbr.rel (0) target = $region5
    $region4: #{tpu_custom_call.1} parent=1 // pred_region
      _
    $region5: #{tpu_custom_call.1} parent=1 // pred_fallthru
      _
    // Predicated region
    $region6: #{tpu_custom_call.1} parent=1 // pred_check
      _
    $region7: #{tpu_custom_call.1} parent=1 // pred_check_branch
      %15 = sbr.rel (0) target = $region9
    $region8: #{tpu_custom_call.1} parent=1 // pred_region
      _
    $region9: #{tpu_custom_call.1} parent=1 // pred_fallthru
      _
    // Predicated region
    $region10: #{tpu_custom_call.1} parent=1 // pred_check
      _
    $region11: #{tpu_custom_call.1} parent=1 // pred_check_branch
      %17 = sbr.rel (0) target = $region13
    $region12: #{tpu_custom_call.1} parent=1 // pred_region
      _
    $region13: #{tpu_custom_call.1} parent=1 // pred_fallthru
      _
    // Predicated region
    $region14: #{tpu_custom_call.1} parent=1 // pred_check
      _
    $region15: #{tpu_custom_call.1} parent=1 // pred_check_branch
      %19 = sbr.rel (0) target = $region17
    $region16: #{tpu_custom_call.1} parent=1 // pred_region
      _
    $region17: #{tpu_custom_call.1} parent=1 // pred_fallthru
      _
    // Predicated region
    $region18: #{tpu_custom_call.1} parent=1 // pred_check
      _
    $region19: #{tpu_custom_call.1} parent=1 // pred_check_branch
      %21 = sbr.rel (0) target = $region21
    $region20: #{tpu_custom_call.1} parent=1 // pred_region
      _
    $region21: #{tpu_custom_call.1} parent=1 // pred_fallthru
      _
    // Predicated region
    $region22: #{tpu_custom_call.1} parent=1 // pred_check
      _
    $region23: #{tpu_custom_call.1} parent=1 // pred_check_branch
      %23 = sbr.rel (0) target = $region25
    $region24: #{tpu_custom_call.1} parent=1 // pred_region
      %25 = vsyncadd [#allocation3], 0
      %s26 = sshll.u32 %s5, 4
      %s27 = int_to_ptr.hbm [resolvable:$true] %s26
      %s28 = sshll.u32 [#allocation2], 4
      %s29 = int_to_ptr.vmem [resolvable:$true] %s28
      %34 = dma.hbm_to_vmem [thread:$0]  %s27, 8192, %s29, [#allocation3], 128, 128, 8
    $region25: #{tpu_custom_call.1} parent=1 // pred_fallthru
      _
    // Predicated region
    $region26: #{tpu_custom_call.1} parent=1 // pred_check
      _
    $region27: #{tpu_custom_call.1} parent=1 // pred_check_branch
      %36 = sbr.rel (0) target = $region29
    $region28: #{tpu_custom_call.1} parent=1 // pred_region
      %38 = dma.done [#allocation3], 8192
    $region29: #{tpu_custom_call.1} parent=1 // pred_fallthru
      _
    %v39 = vld [vmem:[%s0] sm:$0xff]
    %v40 = vld [vmem:[%s0 + $0x8] sm:$0xff]
    %v41 = vld [vmem:[%s0 + $0x10] sm:$0xff]
    %v42 = vld [vmem:[%s0 + $0x18] sm:$0xff]
    %v43 = vld [vmem:[%s0 + $0x20] sm:$0xff]
    %v44 = vld [vmem:[%s0 + $0x28] sm:$0xff]
    %v45 = vld [vmem:[%s0 + $0x30] sm:$0xff]
    %v46 = vld [vmem:[%s0 + $0x38] sm:$0xff]
    %v47 = vld [vmem:[%s0 + $0x40] sm:$0xff]
    %v48 = vld [vmem:[%s0 + $0x48] sm:$0xff]
    %v49 = vld [vmem:[%s0 + $0x50] sm:$0xff]
    %v50 = vld [vmem:[%s0 + $0x58] sm:$0xff]
    %v51 = vld [vmem:[%s0 + $0x60] sm:$0xff]
    %v52 = vld [vmem:[%s0 + $0x68] sm:$0xff]
    %v53 = vld [vmem:[%s0 + $0x70] sm:$0xff]
    %v54 = vld [vmem:[%s0 + $0x78] sm:$0xff]
    %v55 = vld [vmem:[%s1] sm:$0xff]
    %v56 = vld [vmem:[%s1 + $0x8] sm:$0xff]
    %v57 = vld [vmem:[%s1 + $0x10] sm:$0xff]
    %v58 = vld [vmem:[%s1 + $0x18] sm:$0xff]
    %v59 = vld [vmem:[%s1 + $0x20] sm:$0xff]
    %v60 = vld [vmem:[%s1 + $0x28] sm:$0xff]
    %v61 = vld [vmem:[%s1 + $0x30] sm:$0xff]
    %v62 = vld [vmem:[%s1 + $0x38] sm:$0xff]
    %v63 = vld [vmem:[%s2] sm:$0x3]
    %v65 = vperm.slane %v63, 0
    %v66 = vperm.slane %v63, 1
    %vm69 = vcmask 261120
    %v71 = vsel %vm69, %v39, 0
    %v74 = vsel %vm69, %v40, 0
    %v77 = vsel %vm69, %v41, 0
    %v80 = vsel %vm69, %v42, 0
    %v83 = vsel %vm69, %v43, 0
    %v86 = vsel %vm69, %v44, 0
    %v89 = vsel %vm69, %v45, 0
    %v92 = vsel %vm69, %v46, 0
    %v95 = vsel %vm69, %v47, 0
    %v98 = vsel %vm69, %v48, 0
    %v101 = vsel %vm69, %v49, 0
    %v104 = vsel %vm69, %v50, 0
    %v107 = vsel %vm69, %v51, 0
    %v110 = vsel %vm69, %v52, 0
    %v113 = vsel %vm69, %v53, 0
    %v116 = vsel %vm69, %v54, 0
    %118 = vmatpush.msra.mxu0 0.0
    %119 = vmatpush.msra.mxu0 0.0
    %120 = vmatpush.msra.mxu0 0.0
    %121 = vmatpush.msra.mxu0 0.0
    %122 = vmatpush.msra.mxu0 0.0
    %123 = vmatpush.msra.mxu0 0.0
    %124 = vmatpush.msra.mxu0 0.0
    %125 = vmatpush.msra.mxu0 0.0
    %126 = vmatpush.msra.mxu0 0.0
    %127 = vmatpush.msra.mxu0 0.0
    %128 = vmatpush.msra.mxu0 0.0
    %129 = vmatpush.msra.mxu0 0.0
    %130 = vmatpush.msra.mxu0 %v61
    %131 = vmatpush.msra.mxu0 %v59
    %132 = vmatpush.msra.mxu0 %v57
    %133 = vmatpush.msra.mxu0 %v55
    %134 = vmatmul.f32.gmra.mxu0 %v71
    %v135 = vpop.f32.mrf.mxu0
    %v136 = vadd.f32 %v65, %v135
    %137 = vmatmul.f32.gmra.mxu0 %v74
    %v138 = vpop.f32.mrf.mxu0
    %v139 = vadd.f32 %v65, %v138
    %140 = vmatmul.f32.gmra.mxu0 %v77
    %v141 = vpop.f32.mrf.mxu0
    %v142 = vadd.f32 %v65, %v141
    %143 = vmatmul.f32.gmra.mxu0 %v80
    %v144 = vpop.f32.mrf.mxu0
    %v145 = vadd.f32 %v65, %v144
    %146 = vmatmul.f32.gmra.mxu0 %v83
    %v147 = vpop.f32.mrf.mxu0
    %v148 = vadd.f32 %v65, %v147
    %149 = vmatmul.f32.gmra.mxu0 %v86
    %v150 = vpop.f32.mrf.mxu0
    %v151 = vadd.f32 %v65, %v150
    %152 = vmatmul.f32.gmra.mxu0 %v89
    %v153 = vpop.f32.mrf.mxu0
    %v154 = vadd.f32 %v65, %v153
    %155 = vmatmul.f32.gmra.mxu0 %v92
    %v156 = vpop.f32.mrf.mxu0
    %v157 = vadd.f32 %v65, %v156
    %158 = vmatmul.f32.gmra.mxu0 %v95
    %v159 = vpop.f32.mrf.mxu0
    %v160 = vadd.f32 %v65, %v159
    %161 = vmatmul.f32.gmra.mxu0 %v98
    %v162 = vpop.f32.mrf.mxu0
    %v163 = vadd.f32 %v65, %v162
    %164 = vmatmul.f32.gmra.mxu0 %v101
    %v165 = vpop.f32.mrf.mxu0
    %v166 = vadd.f32 %v65, %v165
    %167 = vmatmul.f32.gmra.mxu0 %v104
    %v168 = vpop.f32.mrf.mxu0
    %v169 = vadd.f32 %v65, %v168
    %170 = vmatmul.f32.gmra.mxu0 %v107
    %v171 = vpop.f32.mrf.mxu0
    %v172 = vadd.f32 %v65, %v171
    %173 = vmatmul.f32.gmra.mxu0 %v110
    %v174 = vpop.f32.mrf.mxu0
    %v175 = vadd.f32 %v65, %v174
    %176 = vmatmul.f32.gmra.mxu0 %v113
    %v177 = vpop.f32.mrf.mxu0
    %v178 = vadd.f32 %v65, %v177
    %179 = vmatmul.f32.gmra.mxu0 %v116
    %v180 = vpop.f32.mrf.mxu0
    %v181 = vadd.f32 %v65, %v180
    %182 = vdwg.mxu0
    %183 = vmatpush.msra.mxu0 0.0
    %184 = vmatpush.msra.mxu0 0.0
    %185 = vmatpush.msra.mxu0 0.0
    %186 = vmatpush.msra.mxu0 0.0
    %187 = vmatpush.msra.mxu0 0.0
    %188 = vmatpush.msra.mxu0 0.0
    %189 = vmatpush.msra.mxu0 0.0
    %190 = vmatpush.msra.mxu0 0.0
    %191 = vmatpush.msra.mxu0 0.0
    %192 = vmatpush.msra.mxu0 0.0
    %193 = vmatpush.msra.mxu0 0.0
    %194 = vmatpush.msra.mxu0 0.0
    %195 = vmatpush.msra.mxu0 %v62
    %196 = vmatpush.msra.mxu0 %v60
    %197 = vmatpush.msra.mxu0 %v58
    %198 = vmatpush.msra.mxu0 %v56
    %199 = vmatmul.f32.gmra.mxu0 %v71
    %v200 = vpop.f32.mrf.mxu0
    %v201 = vadd.f32 %v66, %v200
    %202 = vmatmul.f32.gmra.mxu0 %v74
    %v203 = vpop.f32.mrf.mxu0
    %v204 = vadd.f32 %v66, %v203
    %205 = vmatmul.f32.gmra.mxu0 %v77
    %v206 = vpop.f32.mrf.mxu0
    %v207 = vadd.f32 %v66, %v206
    %208 = vmatmul.f32.gmra.mxu0 %v80
    %v209 = vpop.f32.mrf.mxu0
    %v210 = vadd.f32 %v66, %v209
    %211 = vmatmul.f32.gmra.mxu0 %v83
    %v212 = vpop.f32.mrf.mxu0
    %v213 = vadd.f32 %v66, %v212
    %214 = vmatmul.f32.gmra.mxu0 %v86
    %v215 = vpop.f32.mrf.mxu0
    %v216 = vadd.f32 %v66, %v215
    %217 = vmatmul.f32.gmra.mxu0 %v89
    %v218 = vpop.f32.mrf.mxu0
    %v219 = vadd.f32 %v66, %v218
    %220 = vmatmul.f32.gmra.mxu0 %v92
    %v221 = vpop.f32.mrf.mxu0
    %v222 = vadd.f32 %v66, %v221
    %223 = vmatmul.f32.gmra.mxu0 %v95
    %v224 = vpop.f32.mrf.mxu0
    %v225 = vadd.f32 %v66, %v224
    %226 = vmatmul.f32.gmra.mxu0 %v98
    %v227 = vpop.f32.mrf.mxu0
    %v228 = vadd.f32 %v66, %v227
    %229 = vmatmul.f32.gmra.mxu0 %v101
    %v230 = vpop.f32.mrf.mxu0
    %v231 = vadd.f32 %v66, %v230
    %232 = vmatmul.f32.gmra.mxu0 %v104
    %v233 = vpop.f32.mrf.mxu0
    %v234 = vadd.f32 %v66, %v233
    %235 = vmatmul.f32.gmra.mxu0 %v107
    %v236 = vpop.f32.mrf.mxu0
    %v237 = vadd.f32 %v66, %v236
    %238 = vmatmul.f32.gmra.mxu0 %v110
    %v239 = vpop.f32.mrf.mxu0
    %v240 = vadd.f32 %v66, %v239
    %241 = vmatmul.f32.gmra.mxu0 %v113
    %v242 = vpop.f32.mrf.mxu0
    %v243 = vadd.f32 %v66, %v242
    %244 = vmatmul.f32.gmra.mxu0 %v116
    %v245 = vpop.f32.mrf.mxu0
    %v246 = vadd.f32 %v66, %v245
    %247 = vdwg.mxu0
    %v248 = vld [vmem:[#allocation2] sm:$0xff]
    %v249 = vld [vmem:[#allocation2 + $0x8] sm:$0xff]
    %v250 = vld [vmem:[#allocation2 + $0x10] sm:$0xff]
    %v251 = vld [vmem:[#allocation2 + $0x18] sm:$0xff]
    %v252 = vld [vmem:[#allocation2 + $0x20] sm:$0xff]
    %v253 = vld [vmem:[#allocation2 + $0x28] sm:$0xff]
    %v254 = vld [vmem:[#allocation2 + $0x30] sm:$0xff]
    %v255 = vld [vmem:[#allocation2 + $0x38] sm:$0xff]
    %v256 = vld [vmem:[#allocation2 + $0x40] sm:$0xff]
    %v257 = vld [vmem:[#allocation2 + $0x48] sm:$0xff]
    %v258 = vld [vmem:[#allocation2 + $0x50] sm:$0xff]
    %v259 = vld [vmem:[#allocation2 + $0x58] sm:$0xff]
    %v260 = vld [vmem:[#allocation2 + $0x60] sm:$0xff]
    %v261 = vld [vmem:[#allocation2 + $0x68] sm:$0xff]
    %v262 = vld [vmem:[#allocation2 + $0x70] sm:$0xff]
    %v263 = vld [vmem:[#allocation2 + $0x78] sm:$0xff]
    %v264 = vld [vmem:[#allocation2 + $0x80] sm:$0xff]
    %v265 = vld [vmem:[#allocation2 + $0x88] sm:$0xff]
    %v266 = vld [vmem:[#allocation2 + $0x90] sm:$0xff]
    %v267 = vld [vmem:[#allocation2 + $0x98] sm:$0xff]
    %v268 = vld [vmem:[#allocation2 + $0xa0] sm:$0xff]
    %v269 = vld [vmem:[#allocation2 + $0xa8] sm:$0xff]
    %v270 = vld [vmem:[#allocation2 + $0xb0] sm:$0xff]
    %v271 = vld [vmem:[#allocation2 + $0xb8] sm:$0xff]
    %v272 = vld [vmem:[#allocation2 + $0xc0] sm:$0xff]
    %v273 = vld [vmem:[#allocation2 + $0xc8] sm:$0xff]
    %v274 = vld [vmem:[#allocation2 + $0xd0] sm:$0xff]
    %v275 = vld [vmem:[#allocation2 + $0xd8] sm:$0xff]
    %v276 = vld [vmem:[#allocation2 + $0xe0] sm:$0xff]
    %v277 = vld [vmem:[#allocation2 + $0xe8] sm:$0xff]
    %v278 = vld [vmem:[#allocation2 + $0xf0] sm:$0xff]
    %v279 = vld [vmem:[#allocation2 + $0xf8] sm:$0xff]
    %v280 = vld [vmem:[#allocation2 + $0x100] sm:$0xff]
    %v281 = vld [vmem:[#allocation2 + $0x108] sm:$0xff]
    %v282 = vld [vmem:[#allocation2 + $0x110] sm:$0xff]
    %v283 = vld [vmem:[#allocation2 + $0x118] sm:$0xff]
    %v284 = vld [vmem:[#allocation2 + $0x120] sm:$0xff]
    %v285 = vld [vmem:[#allocation2 + $0x128] sm:$0xff]
    %v286 = vld [vmem:[#allocation2 + $0x130] sm:$0xff]
    %v287 = vld [vmem:[#allocation2 + $0x138] sm:$0xff]
    %v288 = vld [vmem:[#allocation2 + $0x140] sm:$0xff]
    %v289 = vld [vmem:[#allocation2 + $0x148] sm:$0xff]
    %v290 = vld [vmem:[#allocation2 + $0x150] sm:$0xff]
    %v291 = vld [vmem:[#allocation2 + $0x158] sm:$0xff]
    %v292 = vld [vmem:[#allocation2 + $0x160] sm:$0xff]
    %v293 = vld [vmem:[#allocation2 + $0x168] sm:$0xff]
    %v294 = vld [vmem:[#allocation2 + $0x170] sm:$0xff]
    %v295 = vld [vmem:[#allocation2 + $0x178] sm:$0xff]
    %v296 = vld [vmem:[#allocation2 + $0x180] sm:$0xff]
    %v297 = vld [vmem:[#allocation2 + $0x188] sm:$0xff]
    %v298 = vld [vmem:[#allocation2 + $0x190] sm:$0xff]
    %v299 = vld [vmem:[#allocation2 + $0x198] sm:$0xff]
    %v300 = vld [vmem:[#allocation2 + $0x1a0] sm:$0xff]
    %v301 = vld [vmem:[#allocation2 + $0x1a8] sm:$0xff]
    %v302 = vld [vmem:[#allocation2 + $0x1b0] sm:$0xff]
    %v303 = vld [vmem:[#allocation2 + $0x1b8] sm:$0xff]
    %v304 = vld [vmem:[#allocation2 + $0x1c0] sm:$0xff]
    %v305 = vld [vmem:[#allocation2 + $0x1c8] sm:$0xff]
    %v306 = vld [vmem:[#allocation2 + $0x1d0] sm:$0xff]
    %v307 = vld [vmem:[#allocation2 + $0x1d8] sm:$0xff]
    %v308 = vld [vmem:[#allocation2 + $0x1e0] sm:$0xff]
    %v309 = vld [vmem:[#allocation2 + $0x1e8] sm:$0xff]
    %v310 = vld [vmem:[#allocation2 + $0x1f0] sm:$0xff]
    %v311 = vld [vmem:[#allocation2 + $0x1f8] sm:$0xff]
    %314 = vrot.lane.b32.xlu0 %v136, 64
    %v315 = vpop.permute.xlu0 %314
    %316 = vrot.lane.b32.xlu0 %v139, 64
    %v317 = vpop.permute.xlu0 %316
    %vm318 = vcmask 130048
    %v319 = vsel %vm318, %v136, 0
    %v321 = vsel %vm318, %v139, 0
    %v323 = vsel %vm318, %v315, 0
    %v325 = vsel %vm318, %v317, 0
    %327 = vmatpush.xpose.msra.mxu0 0.0
    %328 = vmatpush.xpose.msra.mxu0 0.0
    %329 = vmatpush.xpose.msra.mxu0 0.0
    %330 = vmatpush.xpose.msra.mxu0 0.0
    %331 = vmatpush.xpose.msra.mxu0 0.0
    %332 = vmatpush.xpose.msra.mxu0 0.0
    %333 = vmatpush.xpose.msra.mxu0 0.0
    %334 = vmatpush.xpose.msra.mxu0 0.0
    %335 = vmatpush.xpose.msra.mxu0 0.0
    %336 = vmatpush.xpose.msra.mxu0 0.0
    %337 = vmatpush.xpose.msra.mxu0 0.0
    %338 = vmatpush.xpose.msra.mxu0 0.0
    %339 = vmatpush.xpose.msra.mxu0 0.0
    %340 = vmatpush.xpose.msra.mxu0 0.0
    %341 = vmatpush.xpose.msra.mxu0 %v325
    %342 = vmatpush.xpose.msra.mxu0 %v323
    %343 = vmatmul.f32.gmra.mxu0 %v319
    %v344 = vpop.f32.mrf.mxu0
    %v345 = vadd.f32 %v248, %v344
    %346 = vmatmul.f32.gmra.mxu0 %v321
    %v347 = vpop.f32.mrf.mxu0
    %v348 = vadd.f32 %v249, %v347
    %349 = vdwg.mxu0
    %352 = vrot.lane.b32.xlu0 %v142, 64
    %v353 = vpop.permute.xlu0 %352
    %354 = vrot.lane.b32.xlu0 %v145, 64
    %v355 = vpop.permute.xlu0 %354
    %v356 = vsel %vm318, %v142, 0
    %v358 = vsel %vm318, %v145, 0
    %v360 = vsel %vm318, %v353, 0
    %v362 = vsel %vm318, %v355, 0
    %364 = vmatpush.xpose.msra.mxu0 0.0
    %365 = vmatpush.xpose.msra.mxu0 0.0
    %366 = vmatpush.xpose.msra.mxu0 0.0
    %367 = vmatpush.xpose.msra.mxu0 0.0
    %368 = vmatpush.xpose.msra.mxu0 0.0
    %369 = vmatpush.xpose.msra.mxu0 0.0
    %370 = vmatpush.xpose.msra.mxu0 0.0
    %371 = vmatpush.xpose.msra.mxu0 0.0
    %372 = vmatpush.xpose.msra.mxu0 0.0
    %373 = vmatpush.xpose.msra.mxu0 0.0
    %374 = vmatpush.xpose.msra.mxu0 0.0
    %375 = vmatpush.xpose.msra.mxu0 0.0
    %376 = vmatpush.xpose.msra.mxu0 0.0
    %377 = vmatpush.xpose.msra.mxu0 0.0
    %378 = vmatpush.xpose.msra.mxu0 %v362
    %379 = vmatpush.xpose.msra.mxu0 %v360
    %380 = vmatmul.f32.gmra.mxu0 %v356
    %v381 = vpop.f32.mrf.mxu0
    %v382 = vadd.f32 %v256, %v381
    %383 = vmatmul.f32.gmra.mxu0 %v358
    %v384 = vpop.f32.mrf.mxu0
    %v385 = vadd.f32 %v257, %v384
    %386 = vdwg.mxu0
    %389 = vrot.lane.b32.xlu0 %v148, 64
    %v390 = vpop.permute.xlu0 %389
    %391 = vrot.lane.b32.xlu0 %v151, 64
    %v392 = vpop.permute.xlu0 %391
    %v393 = vsel %vm318, %v148, 0
    %v395 = vsel %vm318, %v151, 0
    %v397 = vsel %vm318, %v390, 0
    %v399 = vsel %vm318, %v392, 0
    %401 = vmatpush.xpose.msra.mxu0 0.0
    %402 = vmatpush.xpose.msra.mxu0 0.0
    %403 = vmatpush.xpose.msra.mxu0 0.0
    %404 = vmatpush.xpose.msra.mxu0 0.0
    %405 = vmatpush.xpose.msra.mxu0 0.0
    %406 = vmatpush.xpose.msra.mxu0 0.0
    %407 = vmatpush.xpose.msra.mxu0 0.0
    %408 = vmatpush.xpose.msra.mxu0 0.0
    %409 = vmatpush.xpose.msra.mxu0 0.0
    %410 = vmatpush.xpose.msra.mxu0 0.0
    %411 = vmatpush.xpose.msra.mxu0 0.0
    %412 = vmatpush.xpose.msra.mxu0 0.0
    %413 = vmatpush.xpose.msra.mxu0 0.0
    %414 = vmatpush.xpose.msra.mxu0 0.0
    %415 = vmatpush.xpose.msra.mxu0 %v399
    %416 = vmatpush.xpose.msra.mxu0 %v397
    %417 = vmatmul.f32.gmra.mxu0 %v393
    %v418 = vpop.f32.mrf.mxu0
    %v419 = vadd.f32 %v264, %v418
    %420 = vmatmul.f32.gmra.mxu0 %v395
    %v421 = vpop.f32.mrf.mxu0
    %v422 = vadd.f32 %v265, %v421
    %423 = vdwg.mxu0
    %426 = vrot.lane.b32.xlu0 %v154, 64
    %v427 = vpop.permute.xlu0 %426
    %428 = vrot.lane.b32.xlu0 %v157, 64
    %v429 = vpop.permute.xlu0 %428
    %v430 = vsel %vm318, %v154, 0
    %v432 = vsel %vm318, %v157, 0
    %v434 = vsel %vm318, %v427, 0
    %v436 = vsel %vm318, %v429, 0
    %438 = vmatpush.xpose.msra.mxu0 0.0
    %439 = vmatpush.xpose.msra.mxu0 0.0
    %440 = vmatpush.xpose.msra.mxu0 0.0
    %441 = vmatpush.xpose.msra.mxu0 0.0
    %442 = vmatpush.xpose.msra.mxu0 0.0
    %443 = vmatpush.xpose.msra.mxu0 0.0
    %444 = vmatpush.xpose.msra.mxu0 0.0
    %445 = vmatpush.xpose.msra.mxu0 0.0
    %446 = vmatpush.xpose.msra.mxu0 0.0
    %447 = vmatpush.xpose.msra.mxu0 0.0
    %448 = vmatpush.xpose.msra.mxu0 0.0
    %449 = vmatpush.xpose.msra.mxu0 0.0
    %450 = vmatpush.xpose.msra.mxu0 0.0
    %451 = vmatpush.xpose.msra.mxu0 0.0
    %452 = vmatpush.xpose.msra.mxu0 %v436
    %453 = vmatpush.xpose.msra.mxu0 %v434
    %454 = vmatmul.f32.gmra.mxu0 %v430
    %v455 = vpop.f32.mrf.mxu0
    %v456 = vadd.f32 %v272, %v455
    %457 = vmatmul.f32.gmra.mxu0 %v432
    %v458 = vpop.f32.mrf.mxu0
    %v459 = vadd.f32 %v273, %v458
    %460 = vdwg.mxu0
    %463 = vrot.lane.b32.xlu0 %v160, 64
    %v464 = vpop.permute.xlu0 %463
    %465 = vrot.lane.b32.xlu0 %v163, 64
    %v466 = vpop.permute.xlu0 %465
    %v467 = vsel %vm318, %v160, 0
    %v469 = vsel %vm318, %v163, 0
    %v471 = vsel %vm318, %v464, 0
    %v473 = vsel %vm318, %v466, 0
    %475 = vmatpush.xpose.msra.mxu0 0.0
    %476 = vmatpush.xpose.msra.mxu0 0.0
    %477 = vmatpush.xpose.msra.mxu0 0.0
    %478 = vmatpush.xpose.msra.mxu0 0.0
    %479 = vmatpush.xpose.msra.mxu0 0.0
    %480 = vmatpush.xpose.msra.mxu0 0.0
    %481 = vmatpush.xpose.msra.mxu0 0.0
    %482 = vmatpush.xpose.msra.mxu0 0.0
    %483 = vmatpush.xpose.msra.mxu0 0.0
    %484 = vmatpush.xpose.msra.mxu0 0.0
    %485 = vmatpush.xpose.msra.mxu0 0.0
    %486 = vmatpush.xpose.msra.mxu0 0.0
    %487 = vmatpush.xpose.msra.mxu0 0.0
    %488 = vmatpush.xpose.msra.mxu0 0.0
    %489 = vmatpush.xpose.msra.mxu0 %v473
    %490 = vmatpush.xpose.msra.mxu0 %v471
    %491 = vmatmul.f32.gmra.mxu0 %v467
    %v492 = vpop.f32.mrf.mxu0
    %v493 = vadd.f32 %v280, %v492
    %494 = vmatmul.f32.gmra.mxu0 %v469
    %v495 = vpop.f32.mrf.mxu0
    %v496 = vadd.f32 %v281, %v495
    %497 = vdwg.mxu0
    %500 = vrot.lane.b32.xlu0 %v166, 64
    %v501 = vpop.permute.xlu0 %500
    %502 = vrot.lane.b32.xlu0 %v169, 64
    %v503 = vpop.permute.xlu0 %502
    %v504 = vsel %vm318, %v166, 0
    %v506 = vsel %vm318, %v169, 0
    %v508 = vsel %vm318, %v501, 0
    %v510 = vsel %vm318, %v503, 0
    %512 = vmatpush.xpose.msra.mxu0 0.0
    %513 = vmatpush.xpose.msra.mxu0 0.0
    %514 = vmatpush.xpose.msra.mxu0 0.0
    %515 = vmatpush.xpose.msra.mxu0 0.0
    %516 = vmatpush.xpose.msra.mxu0 0.0
    %517 = vmatpush.xpose.msra.mxu0 0.0
    %518 = vmatpush.xpose.msra.mxu0 0.0
    %519 = vmatpush.xpose.msra.mxu0 0.0
    %520 = vmatpush.xpose.msra.mxu0 0.0
    %521 = vmatpush.xpose.msra.mxu0 0.0
    %522 = vmatpush.xpose.msra.mxu0 0.0
    %523 = vmatpush.xpose.msra.mxu0 0.0
    %524 = vmatpush.xpose.msra.mxu0 0.0
    %525 = vmatpush.xpose.msra.mxu0 0.0
    %526 = vmatpush.xpose.msra.mxu0 %v510
    %527 = vmatpush.xpose.msra.mxu0 %v508
    %528 = vmatmul.f32.gmra.mxu0 %v504
    %v529 = vpop.f32.mrf.mxu0
    %v530 = vadd.f32 %v288, %v529
    %531 = vmatmul.f32.gmra.mxu0 %v506
    %v532 = vpop.f32.mrf.mxu0
    %v533 = vadd.f32 %v289, %v532
    %534 = vdwg.mxu0
    %537 = vrot.lane.b32.xlu0 %v172, 64
    %v538 = vpop.permute.xlu0 %537
    %539 = vrot.lane.b32.xlu0 %v175, 64
    %v540 = vpop.permute.xlu0 %539
    %v541 = vsel %vm318, %v172, 0
    %v543 = vsel %vm318, %v175, 0
    %v545 = vsel %vm318, %v538, 0
    %v547 = vsel %vm318, %v540, 0
    %549 = vmatpush.xpose.msra.mxu0 0.0
    %550 = vmatpush.xpose.msra.mxu0 0.0
    %551 = vmatpush.xpose.msra.mxu0 0.0
    %552 = vmatpush.xpose.msra.mxu0 0.0
    %553 = vmatpush.xpose.msra.mxu0 0.0
    %554 = vmatpush.xpose.msra.mxu0 0.0
    %555 = vmatpush.xpose.msra.mxu0 0.0
    %556 = vmatpush.xpose.msra.mxu0 0.0
    %557 = vmatpush.xpose.msra.mxu0 0.0
    %558 = vmatpush.xpose.msra.mxu0 0.0
    %559 = vmatpush.xpose.msra.mxu0 0.0
    %560 = vmatpush.xpose.msra.mxu0 0.0
    %561 = vmatpush.xpose.msra.mxu0 0.0
    %562 = vmatpush.xpose.msra.mxu0 0.0
    %563 = vmatpush.xpose.msra.mxu0 %v547
    %564 = vmatpush.xpose.msra.mxu0 %v545
    %565 = vmatmul.f32.gmra.mxu0 %v541
    %v566 = vpop.f32.mrf.mxu0
    %v567 = vadd.f32 %v296, %v566
    %568 = vmatmul.f32.gmra.mxu0 %v543
    %v569 = vpop.f32.mrf.mxu0
    %v570 = vadd.f32 %v297, %v569
    %571 = vdwg.mxu0
    %574 = vrot.lane.b32.xlu0 %v178, 64
    %v575 = vpop.permute.xlu0 %574
    %576 = vrot.lane.b32.xlu0 %v181, 64
    %v577 = vpop.permute.xlu0 %576
    %v578 = vsel %vm318, %v178, 0
    %v580 = vsel %vm318, %v181, 0
    %v582 = vsel %vm318, %v575, 0
    %v584 = vsel %vm318, %v577, 0
    %586 = vmatpush.xpose.msra.mxu0 0.0
    %587 = vmatpush.xpose.msra.mxu0 0.0
    %588 = vmatpush.xpose.msra.mxu0 0.0
    %589 = vmatpush.xpose.msra.mxu0 0.0
    %590 = vmatpush.xpose.msra.mxu0 0.0
    %591 = vmatpush.xpose.msra.mxu0 0.0
    %592 = vmatpush.xpose.msra.mxu0 0.0
    %593 = vmatpush.xpose.msra.mxu0 0.0
    %594 = vmatpush.xpose.msra.mxu0 0.0
    %595 = vmatpush.xpose.msra.mxu0 0.0
    %596 = vmatpush.xpose.msra.mxu0 0.0
    %597 = vmatpush.xpose.msra.mxu0 0.0
    %598 = vmatpush.xpose.msra.mxu0 0.0
    %599 = vmatpush.xpose.msra.mxu0 0.0
    %600 = vmatpush.xpose.msra.mxu0 %v584
    %601 = vmatpush.xpose.msra.mxu0 %v582
    %602 = vmatmul.f32.gmra.mxu0 %v578
    %v603 = vpop.f32.mrf.mxu0
    %v604 = vadd.f32 %v304, %v603
    %605 = vmatmul.f32.gmra.mxu0 %v580
    %v606 = vpop.f32.mrf.mxu0
    %v607 = vadd.f32 %v305, %v606
    %608 = vdwg.mxu0
    %v609 = vsel %vm318, %v345, -inf
    %610 = vmax.xlane.f32.xlu0 %v609
    %v611 = vpop.xlane.xlu0 %610
    %v612 = vsel %vm318, %v348, -inf
    %613 = vmax.xlane.f32.xlu0 %v612
    %v614 = vpop.xlane.xlu0 %613
    %v615 = vsel %vm318, %v382, -inf
    %616 = vmax.xlane.f32.xlu0 %v615
    %v617 = vpop.xlane.xlu0 %616
    %v618 = vsel %vm318, %v385, -inf
    %619 = vmax.xlane.f32.xlu0 %v618
    %v620 = vpop.xlane.xlu0 %619
    %v621 = vsel %vm318, %v419, -inf
    %622 = vmax.xlane.f32.xlu0 %v621
    %v623 = vpop.xlane.xlu0 %622
    %v624 = vsel %vm318, %v422, -inf
    %625 = vmax.xlane.f32.xlu0 %v624
    %v626 = vpop.xlane.xlu0 %625
    %v627 = vsel %vm318, %v456, -inf
    %628 = vmax.xlane.f32.xlu0 %v627
    %v629 = vpop.xlane.xlu0 %628
    %v630 = vsel %vm318, %v459, -inf
    %631 = vmax.xlane.f32.xlu0 %v630
    %v632 = vpop.xlane.xlu0 %631
    %v633 = vsel %vm318, %v493, -inf
    %634 = vmax.xlane.f32.xlu0 %v633
    %v635 = vpop.xlane.xlu0 %634
    %v636 = vsel %vm318, %v496, -inf
    %637 = vmax.xlane.f32.xlu0 %v636
    %v638 = vpop.xlane.xlu0 %637
    %v639 = vsel %vm318, %v530, -inf
    %640 = vmax.xlane.f32.xlu0 %v639
    %v641 = vpop.xlane.xlu0 %640
    %v642 = vsel %vm318, %v533, -inf
    %643 = vmax.xlane.f32.xlu0 %v642
    %v644 = vpop.xlane.xlu0 %643
    %v645 = vsel %vm318, %v567, -inf
    %646 = vmax.xlane.f32.xlu0 %v645
    %v647 = vpop.xlane.xlu0 %646
    %v648 = vsel %vm318, %v570, -inf
    %649 = vmax.xlane.f32.xlu0 %v648
    %v650 = vpop.xlane.xlu0 %649
    %v651 = vsel %vm318, %v604, -inf
    %652 = vmax.xlane.f32.xlu0 %v651
    %v653 = vpop.xlane.xlu0 %652
    %v654 = vsel %vm318, %v607, -inf
    %655 = vmax.xlane.f32.xlu0 %v654
    %v656 = vpop.xlane.xlu0 %655
    %v657 = vsub.f32 %v345, %v611
    %v658 = vsub.f32 %v348, %v614
    %v659 = vsub.f32 %v382, %v617
    %v660 = vsub.f32 %v385, %v620
    %v661 = vsub.f32 %v419, %v623
    %v662 = vsub.f32 %v422, %v626
    %v663 = vsub.f32 %v456, %v629
    %v664 = vsub.f32 %v459, %v632
    %v665 = vsub.f32 %v493, %v635
    %v666 = vsub.f32 %v496, %v638
    %v667 = vsub.f32 %v530, %v641
    %v668 = vsub.f32 %v533, %v644
    %v669 = vsub.f32 %v567, %v647
    %v670 = vsub.f32 %v570, %v650
    %v671 = vsub.f32 %v604, %v653
    %v672 = vsub.f32 %v607, %v656
    %v673 = vmul.f32 %v657, 1.442695
    %v674 = vpow.pop %v673
    %v675 = vmul.f32 %v658, 1.442695
    %v676 = vpow.pop %v675
    %v677 = vmul.f32 %v659, 1.442695
    %v678 = vpow.pop %v677
    %v679 = vmul.f32 %v660, 1.442695
    %v680 = vpow.pop %v679
    %v681 = vmul.f32 %v661, 1.442695
    %v682 = vpow.pop %v681
    %v683 = vmul.f32 %v662, 1.442695
    %v684 = vpow.pop %v683
    %v685 = vmul.f32 %v663, 1.442695
    %v686 = vpow.pop %v685
    %v687 = vmul.f32 %v664, 1.442695
    %v688 = vpow.pop %v687
    %v689 = vmul.f32 %v665, 1.442695
    %v690 = vpow.pop %v689
    %v691 = vmul.f32 %v666, 1.442695
    %v692 = vpow.pop %v691
    %v693 = vmul.f32 %v667, 1.442695
    %v694 = vpow.pop %v693
    %v695 = vmul.f32 %v668, 1.442695
    %v696 = vpow.pop %v695
    %v697 = vmul.f32 %v669, 1.442695
    %v698 = vpow.pop %v697
    %v699 = vmul.f32 %v670, 1.442695
    %v700 = vpow.pop %v699
    %v701 = vmul.f32 %v671, 1.442695
    %v702 = vpow.pop %v701
    %v703 = vmul.f32 %v672, 1.442695
    %v704 = vpow.pop %v703
    %v705 = vsel %vm318, %v674, 0.0
    %706 = vadd.xlane.f32.xlu0 %v705
    %v707 = vpop.xlane.xlu0 %706
    %v708 = vsel %vm318, %v676, 0.0
    %709 = vadd.xlane.f32.xlu0 %v708
    %v710 = vpop.xlane.xlu0 %709
    %v711 = vsel %vm318, %v678, 0.0
    %712 = vadd.xlane.f32.xlu0 %v711
    %v713 = vpop.xlane.xlu0 %712
    %v714 = vsel %vm318, %v680, 0.0
    %715 = vadd.xlane.f32.xlu0 %v714
    %v716 = vpop.xlane.xlu0 %715
    %v717 = vsel %vm318, %v682, 0.0
    %718 = vadd.xlane.f32.xlu0 %v717
    %v719 = vpop.xlane.xlu0 %718
    %v720 = vsel %vm318, %v684, 0.0
    %721 = vadd.xlane.f32.xlu0 %v720
    %v722 = vpop.xlane.xlu0 %721
    %v723 = vsel %vm318, %v686, 0.0
    %724 = vadd.xlane.f32.xlu0 %v723
    %v725 = vpop.xlane.xlu0 %724
    %v726 = vsel %vm318, %v688, 0.0
    %727 = vadd.xlane.f32.xlu0 %v726
    %v728 = vpop.xlane.xlu0 %727
    %v729 = vsel %vm318, %v690, 0.0
    %730 = vadd.xlane.f32.xlu0 %v729
    %v731 = vpop.xlane.xlu0 %730
    %v732 = vsel %vm318, %v692, 0.0
    %733 = vadd.xlane.f32.xlu0 %v732
    %v734 = vpop.xlane.xlu0 %733
    %v735 = vsel %vm318, %v694, 0.0
    %736 = vadd.xlane.f32.xlu0 %v735
    %v737 = vpop.xlane.xlu0 %736
    %v738 = vsel %vm318, %v696, 0.0
    %739 = vadd.xlane.f32.xlu0 %v738
    %v740 = vpop.xlane.xlu0 %739
    %v741 = vsel %vm318, %v698, 0.0
    %742 = vadd.xlane.f32.xlu0 %v741
    %v743 = vpop.xlane.xlu0 %742
    %v744 = vsel %vm318, %v700, 0.0
    %745 = vadd.xlane.f32.xlu0 %v744
    %v746 = vpop.xlane.xlu0 %745
    %v747 = vsel %vm318, %v702, 0.0
    %748 = vadd.xlane.f32.xlu0 %v747
    %v749 = vpop.xlane.xlu0 %748
    %v750 = vsel %vm318, %v704, 0.0
    %751 = vadd.xlane.f32.xlu0 %v750
    %v752 = vpop.xlane.xlu0 %751
    %v753 = vrcp.pop %v707
    %v754 = vrcp.pop %v710
    %v755 = vrcp.pop %v713
    %v756 = vrcp.pop %v716
    %v757 = vrcp.pop %v719
    %v758 = vrcp.pop %v722
    %v759 = vrcp.pop %v725
    %v760 = vrcp.pop %v728
    %v761 = vrcp.pop %v731
    %v762 = vrcp.pop %v734
    %v763 = vrcp.pop %v737
    %v764 = vrcp.pop %v740
    %v765 = vrcp.pop %v743
    %v766 = vrcp.pop %v746
    %v767 = vrcp.pop %v749
    %v768 = vrcp.pop %v752
    %v769 = vmul.f32 %v674, %v753
    %v770 = vmul.f32 %v676, %v754
    %v771 = vmul.f32 %v678, %v755
    %v772 = vmul.f32 %v680, %v756
    %v773 = vmul.f32 %v682, %v757
    %v774 = vmul.f32 %v684, %v758
    %v775 = vmul.f32 %v686, %v759
    %v776 = vmul.f32 %v688, %v760
    %v777 = vmul.f32 %v690, %v761
    %v778 = vmul.f32 %v692, %v762
    %v779 = vmul.f32 %v694, %v763
    %v780 = vmul.f32 %v696, %v764
    %v781 = vmul.f32 %v698, %v765
    %v782 = vmul.f32 %v700, %v766
    %v783 = vmul.f32 %v702, %v767
    %v784 = vmul.f32 %v704, %v768
    %v786 = vsel %vm318, %v769, 0
    %v789 = vsel %vm318, %v770, 0
    %791 = vmatpush.msra.mxu0 0.0
    %792 = vmatpush.msra.mxu0 0.0
    %793 = vmatpush.msra.mxu0 0.0
    %794 = vmatpush.msra.mxu0 0.0
    %795 = vmatpush.msra.mxu0 0.0
    %796 = vmatpush.msra.mxu0 0.0
    %797 = vmatpush.msra.mxu0 0.0
    %798 = vmatpush.msra.mxu0 0.0
    %799 = vmatpush.msra.mxu0 0.0
    %800 = vmatpush.msra.mxu0 0.0
    %801 = vmatpush.msra.mxu0 0.0
    %802 = vmatpush.msra.mxu0 0.0
    %803 = vmatpush.msra.mxu0 0.0
    %804 = vmatpush.msra.mxu0 0.0
    %805 = vmatpush.msra.mxu0 %v204
    %806 = vmatpush.msra.mxu0 %v201
    %807 = vmatmul.f32.gmra.mxu0 %v786
    %v808 = vpop.f32.mrf.mxu0
    %v809 = vadd.f32 0.0, %v808
    %810 = vmatmul.f32.gmra.mxu0 %v789
    %v811 = vpop.f32.mrf.mxu0
    %v812 = vadd.f32 0.0, %v811
    %813 = vdwg.mxu0
    %v815 = vsel %vm318, %v771, 0
    %v818 = vsel %vm318, %v772, 0
    %820 = vmatpush.msra.mxu0 0.0
    %821 = vmatpush.msra.mxu0 0.0
    %822 = vmatpush.msra.mxu0 0.0
    %823 = vmatpush.msra.mxu0 0.0
    %824 = vmatpush.msra.mxu0 0.0
    %825 = vmatpush.msra.mxu0 0.0
    %826 = vmatpush.msra.mxu0 0.0
    %827 = vmatpush.msra.mxu0 0.0
    %828 = vmatpush.msra.mxu0 0.0
    %829 = vmatpush.msra.mxu0 0.0
    %830 = vmatpush.msra.mxu0 0.0
    %831 = vmatpush.msra.mxu0 0.0
    %832 = vmatpush.msra.mxu0 0.0
    %833 = vmatpush.msra.mxu0 0.0
    %834 = vmatpush.msra.mxu0 %v210
    %835 = vmatpush.msra.mxu0 %v207
    %836 = vmatmul.f32.gmra.mxu0 %v815
    %v837 = vpop.f32.mrf.mxu0
    %v838 = vadd.f32 0.0, %v837
    %839 = vmatmul.f32.gmra.mxu0 %v818
    %v840 = vpop.f32.mrf.mxu0
    %v841 = vadd.f32 0.0, %v840
    %842 = vdwg.mxu0
    %v844 = vsel %vm318, %v773, 0
    %v847 = vsel %vm318, %v774, 0
    %849 = vmatpush.msra.mxu0 0.0
    %850 = vmatpush.msra.mxu0 0.0
    %851 = vmatpush.msra.mxu0 0.0
    %852 = vmatpush.msra.mxu0 0.0
    %853 = vmatpush.msra.mxu0 0.0
    %854 = vmatpush.msra.mxu0 0.0
    %855 = vmatpush.msra.mxu0 0.0
    %856 = vmatpush.msra.mxu0 0.0
    %857 = vmatpush.msra.mxu0 0.0
    %858 = vmatpush.msra.mxu0 0.0
    %859 = vmatpush.msra.mxu0 0.0
    %860 = vmatpush.msra.mxu0 0.0
    %861 = vmatpush.msra.mxu0 0.0
    %862 = vmatpush.msra.mxu0 0.0
    %863 = vmatpush.msra.mxu0 %v216
    %864 = vmatpush.msra.mxu0 %v213
    %865 = vmatmul.f32.gmra.mxu0 %v844
    %v866 = vpop.f32.mrf.mxu0
    %v867 = vadd.f32 0.0, %v866
    %868 = vmatmul.f32.gmra.mxu0 %v847
    %v869 = vpop.f32.mrf.mxu0
    %v870 = vadd.f32 0.0, %v869
    %871 = vdwg.mxu0
    %v873 = vsel %vm318, %v775, 0
    %v876 = vsel %vm318, %v776, 0
    %878 = vmatpush.msra.mxu0 0.0
    %879 = vmatpush.msra.mxu0 0.0
    %880 = vmatpush.msra.mxu0 0.0
    %881 = vmatpush.msra.mxu0 0.0
    %882 = vmatpush.msra.mxu0 0.0
    %883 = vmatpush.msra.mxu0 0.0
    %884 = vmatpush.msra.mxu0 0.0
    %885 = vmatpush.msra.mxu0 0.0
    %886 = vmatpush.msra.mxu0 0.0
    %887 = vmatpush.msra.mxu0 0.0
    %888 = vmatpush.msra.mxu0 0.0
    %889 = vmatpush.msra.mxu0 0.0
    %890 = vmatpush.msra.mxu0 0.0
    %891 = vmatpush.msra.mxu0 0.0
    %892 = vmatpush.msra.mxu0 %v222
    %893 = vmatpush.msra.mxu0 %v219
    %894 = vmatmul.f32.gmra.mxu0 %v873
    %v895 = vpop.f32.mrf.mxu0
    %v896 = vadd.f32 0.0, %v895
    %897 = vmatmul.f32.gmra.mxu0 %v876
    %v898 = vpop.f32.mrf.mxu0
    %v899 = vadd.f32 0.0, %v898
    %900 = vdwg.mxu0
    %v902 = vsel %vm318, %v777, 0
    %v905 = vsel %vm318, %v778, 0
    %907 = vmatpush.msra.mxu0 0.0
    %908 = vmatpush.msra.mxu0 0.0
    %909 = vmatpush.msra.mxu0 0.0
    %910 = vmatpush.msra.mxu0 0.0
    %911 = vmatpush.msra.mxu0 0.0
    %912 = vmatpush.msra.mxu0 0.0
    %913 = vmatpush.msra.mxu0 0.0
    %914 = vmatpush.msra.mxu0 0.0
    %915 = vmatpush.msra.mxu0 0.0
    %916 = vmatpush.msra.mxu0 0.0
    %917 = vmatpush.msra.mxu0 0.0
    %918 = vmatpush.msra.mxu0 0.0
    %919 = vmatpush.msra.mxu0 0.0
    %920 = vmatpush.msra.mxu0 0.0
    %921 = vmatpush.msra.mxu0 %v228
    %922 = vmatpush.msra.mxu0 %v225
    %923 = vmatmul.f32.gmra.mxu0 %v902
    %v924 = vpop.f32.mrf.mxu0
    %v925 = vadd.f32 0.0, %v924
    %926 = vmatmul.f32.gmra.mxu0 %v905
    %v927 = vpop.f32.mrf.mxu0
    %v928 = vadd.f32 0.0, %v927
    %929 = vdwg.mxu0
    %v931 = vsel %vm318, %v779, 0
    %v934 = vsel %vm318, %v780, 0
    %936 = vmatpush.msra.mxu0 0.0
    %937 = vmatpush.msra.mxu0 0.0
    %938 = vmatpush.msra.mxu0 0.0
    %939 = vmatpush.msra.mxu0 0.0
    %940 = vmatpush.msra.mxu0 0.0
    %941 = vmatpush.msra.mxu0 0.0
    %942 = vmatpush.msra.mxu0 0.0
    %943 = vmatpush.msra.mxu0 0.0
    %944 = vmatpush.msra.mxu0 0.0
    %945 = vmatpush.msra.mxu0 0.0
    %946 = vmatpush.msra.mxu0 0.0
    %947 = vmatpush.msra.mxu0 0.0
    %948 = vmatpush.msra.mxu0 0.0
    %949 = vmatpush.msra.mxu0 0.0
    %950 = vmatpush.msra.mxu0 %v234
    %951 = vmatpush.msra.mxu0 %v231
    %952 = vmatmul.f32.gmra.mxu0 %v931
    %v953 = vpop.f32.mrf.mxu0
    %v954 = vadd.f32 0.0, %v953
    %955 = vmatmul.f32.gmra.mxu0 %v934
    %v956 = vpop.f32.mrf.mxu0
    %v957 = vadd.f32 0.0, %v956
    %958 = vdwg.mxu0
    %v960 = vsel %vm318, %v781, 0
    %v963 = vsel %vm318, %v782, 0
    %965 = vmatpush.msra.mxu0 0.0
    %966 = vmatpush.msra.mxu0 0.0
    %967 = vmatpush.msra.mxu0 0.0
    %968 = vmatpush.msra.mxu0 0.0
    %969 = vmatpush.msra.mxu0 0.0
    %970 = vmatpush.msra.mxu0 0.0
    %971 = vmatpush.msra.mxu0 0.0
    %972 = vmatpush.msra.mxu0 0.0
    %973 = vmatpush.msra.mxu0 0.0
    %974 = vmatpush.msra.mxu0 0.0
    %975 = vmatpush.msra.mxu0 0.0
    %976 = vmatpush.msra.mxu0 0.0
    %977 = vmatpush.msra.mxu0 0.0
    %978 = vmatpush.msra.mxu0 0.0
    %979 = vmatpush.msra.mxu0 %v240
    %980 = vmatpush.msra.mxu0 %v237
    %981 = vmatmul.f32.gmra.mxu0 %v960
    %v982 = vpop.f32.mrf.mxu0
    %v983 = vadd.f32 0.0, %v982
    %984 = vmatmul.f32.gmra.mxu0 %v963
    %v985 = vpop.f32.mrf.mxu0
    %v986 = vadd.f32 0.0, %v985
    %987 = vdwg.mxu0
    %v989 = vsel %vm318, %v783, 0
    %v992 = vsel %vm318, %v784, 0
    %994 = vmatpush.msra.mxu0 0.0
    %995 = vmatpush.msra.mxu0 0.0
    %996 = vmatpush.msra.mxu0 0.0
    %997 = vmatpush.msra.mxu0 0.0
    %998 = vmatpush.msra.mxu0 0.0
    %999 = vmatpush.msra.mxu0 0.0
    %1000 = vmatpush.msra.mxu0 0.0
    %1001 = vmatpush.msra.mxu0 0.0
    %1002 = vmatpush.msra.mxu0 0.0
    %1003 = vmatpush.msra.mxu0 0.0
    %1004 = vmatpush.msra.mxu0 0.0
    %1005 = vmatpush.msra.mxu0 0.0
    %1006 = vmatpush.msra.mxu0 0.0
    %1007 = vmatpush.msra.mxu0 0.0
    %1008 = vmatpush.msra.mxu0 %v246
    %1009 = vmatpush.msra.mxu0 %v243
    %1010 = vmatmul.f32.gmra.mxu0 %v989
    %v1011 = vpop.f32.mrf.mxu0
    %v1012 = vadd.f32 0.0, %v1011
    %1013 = vmatmul.f32.gmra.mxu0 %v992
    %v1014 = vpop.f32.mrf.mxu0
    %v1015 = vadd.f32 0.0, %v1014
    %1016 = vdwg.mxu0
    %v1017 = vld [vmem:[%s3] sm:$0xff]
    %v1018 = vld [vmem:[%s3 + $0x8] sm:$0xff]
    %1019 = vrot.lane.b32.xlu0 %v136, 112
    %v1020 = vpop.permute.xlu0 %1019
    %1021 = vrot.lane.b32.xlu0 %v139, 112
    %v1022 = vpop.permute.xlu0 %1021
    %1023 = vrot.lane.b32.xlu0 %v136, 48
    %v1024 = vpop.permute.xlu0 %1023
    %1025 = vrot.lane.b32.xlu0 %v139, 48
    %v1026 = vpop.permute.xlu0 %1025
    %v1027 = vsel %vm318, %v1020, 0
    %v1029 = vsel %vm318, %v1022, 0
    %v1031 = vsel %vm318, %v1024, 0
    %v1033 = vsel %vm318, %v1026, 0
    %1035 = vmatpush.xpose.msra.mxu0 0.0
    %1036 = vmatpush.xpose.msra.mxu0 0.0
    %1037 = vmatpush.xpose.msra.mxu0 0.0
    %1038 = vmatpush.xpose.msra.mxu0 0.0
    %1039 = vmatpush.xpose.msra.mxu0 0.0
    %1040 = vmatpush.xpose.msra.mxu0 0.0
    %1041 = vmatpush.xpose.msra.mxu0 0.0
    %1042 = vmatpush.xpose.msra.mxu0 0.0
    %1043 = vmatpush.xpose.msra.mxu0 0.0
    %1044 = vmatpush.xpose.msra.mxu0 0.0
    %1045 = vmatpush.xpose.msra.mxu0 0.0
    %1046 = vmatpush.xpose.msra.mxu0 0.0
    %1047 = vmatpush.xpose.msra.mxu0 0.0
    %1048 = vmatpush.xpose.msra.mxu0 0.0
    %1049 = vmatpush.xpose.msra.mxu0 %v1033
    %1050 = vmatpush.xpose.msra.mxu0 %v1031
    %1051 = vmatmul.f32.gmra.mxu0 %v1027
    %v1052 = vpop.f32.mrf.mxu0
    %v1053 = vadd.f32 %v250, %v1052
    %1054 = vmatmul.f32.gmra.mxu0 %v1029
    %v1055 = vpop.f32.mrf.mxu0
    %v1056 = vadd.f32 %v251, %v1055
    %1057 = vdwg.mxu0
    %1058 = vrot.lane.b32.xlu0 %v142, 112
    %v1059 = vpop.permute.xlu0 %1058
    %1060 = vrot.lane.b32.xlu0 %v145, 112
    %v1061 = vpop.permute.xlu0 %1060
    %1062 = vrot.lane.b32.xlu0 %v142, 48
    %v1063 = vpop.permute.xlu0 %1062
    %1064 = vrot.lane.b32.xlu0 %v145, 48
    %v1065 = vpop.permute.xlu0 %1064
    %v1066 = vsel %vm318, %v1059, 0
    %v1068 = vsel %vm318, %v1061, 0
    %v1070 = vsel %vm318, %v1063, 0
    %v1072 = vsel %vm318, %v1065, 0
    %1074 = vmatpush.xpose.msra.mxu0 0.0
    %1075 = vmatpush.xpose.msra.mxu0 0.0
    %1076 = vmatpush.xpose.msra.mxu0 0.0
    %1077 = vmatpush.xpose.msra.mxu0 0.0
    %1078 = vmatpush.xpose.msra.mxu0 0.0
    %1079 = vmatpush.xpose.msra.mxu0 0.0
    %1080 = vmatpush.xpose.msra.mxu0 0.0
    %1081 = vmatpush.xpose.msra.mxu0 0.0
    %1082 = vmatpush.xpose.msra.mxu0 0.0
    %1083 = vmatpush.xpose.msra.mxu0 0.0
    %1084 = vmatpush.xpose.msra.mxu0 0.0
    %1085 = vmatpush.xpose.msra.mxu0 0.0
    %1086 = vmatpush.xpose.msra.mxu0 0.0
    %1087 = vmatpush.xpose.msra.mxu0 0.0
    %1088 = vmatpush.xpose.msra.mxu0 %v1072
    %1089 = vmatpush.xpose.msra.mxu0 %v1070
    %1090 = vmatmul.f32.gmra.mxu0 %v1066
    %v1091 = vpop.f32.mrf.mxu0
    %v1092 = vadd.f32 %v258, %v1091
    %1093 = vmatmul.f32.gmra.mxu0 %v1068
    %v1094 = vpop.f32.mrf.mxu0
    %v1095 = vadd.f32 %v259, %v1094
    %1096 = vdwg.mxu0
    %1097 = vrot.lane.b32.xlu0 %v148, 112
    %v1098 = vpop.permute.xlu0 %1097
    %1099 = vrot.lane.b32.xlu0 %v151, 112
    %v1100 = vpop.permute.xlu0 %1099
    %1101 = vrot.lane.b32.xlu0 %v148, 48
    %v1102 = vpop.permute.xlu0 %1101
    %1103 = vrot.lane.b32.xlu0 %v151, 48
    %v1104 = vpop.permute.xlu0 %1103
    %v1105 = vsel %vm318, %v1098, 0
    %v1107 = vsel %vm318, %v1100, 0
    %v1109 = vsel %vm318, %v1102, 0
    %v1111 = vsel %vm318, %v1104, 0
    %1113 = vmatpush.xpose.msra.mxu0 0.0
    %1114 = vmatpush.xpose.msra.mxu0 0.0
    %1115 = vmatpush.xpose.msra.mxu0 0.0
    %1116 = vmatpush.xpose.msra.mxu0 0.0
    %1117 = vmatpush.xpose.msra.mxu0 0.0
    %1118 = vmatpush.xpose.msra.mxu0 0.0
    %1119 = vmatpush.xpose.msra.mxu0 0.0
    %1120 = vmatpush.xpose.msra.mxu0 0.0
    %1121 = vmatpush.xpose.msra.mxu0 0.0
    %1122 = vmatpush.xpose.msra.mxu0 0.0
    %1123 = vmatpush.xpose.msra.mxu0 0.0
    %1124 = vmatpush.xpose.msra.mxu0 0.0
    %1125 = vmatpush.xpose.msra.mxu0 0.0
    %1126 = vmatpush.xpose.msra.mxu0 0.0
    %1127 = vmatpush.xpose.msra.mxu0 %v1111
    %1128 = vmatpush.xpose.msra.mxu0 %v1109
    %1129 = vmatmul.f32.gmra.mxu0 %v1105
    %v1130 = vpop.f32.mrf.mxu0
    %v1131 = vadd.f32 %v266, %v1130
    %1132 = vmatmul.f32.gmra.mxu0 %v1107
    %v1133 = vpop.f32.mrf.mxu0
    %v1134 = vadd.f32 %v267, %v1133
    %1135 = vdwg.mxu0
    %1136 = vrot.lane.b32.xlu0 %v154, 112
    %v1137 = vpop.permute.xlu0 %1136
    %1138 = vrot.lane.b32.xlu0 %v157, 112
    %v1139 = vpop.permute.xlu0 %1138
    %1140 = vrot.lane.b32.xlu0 %v154, 48
    %v1141 = vpop.permute.xlu0 %1140
    %1142 = vrot.lane.b32.xlu0 %v157, 48
    %v1143 = vpop.permute.xlu0 %1142
    %v1144 = vsel %vm318, %v1137, 0
    %v1146 = vsel %vm318, %v1139, 0
    %v1148 = vsel %vm318, %v1141, 0
    %v1150 = vsel %vm318, %v1143, 0
    %1152 = vmatpush.xpose.msra.mxu0 0.0
    %1153 = vmatpush.xpose.msra.mxu0 0.0
    %1154 = vmatpush.xpose.msra.mxu0 0.0
    %1155 = vmatpush.xpose.msra.mxu0 0.0
    %1156 = vmatpush.xpose.msra.mxu0 0.0
    %1157 = vmatpush.xpose.msra.mxu0 0.0
    %1158 = vmatpush.xpose.msra.mxu0 0.0
    %1159 = vmatpush.xpose.msra.mxu0 0.0
    %1160 = vmatpush.xpose.msra.mxu0 0.0
    %1161 = vmatpush.xpose.msra.mxu0 0.0
    %1162 = vmatpush.xpose.msra.mxu0 0.0
    %1163 = vmatpush.xpose.msra.mxu0 0.0
    %1164 = vmatpush.xpose.msra.mxu0 0.0
    %1165 = vmatpush.xpose.msra.mxu0 0.0
    %1166 = vmatpush.xpose.msra.mxu0 %v1150
    %1167 = vmatpush.xpose.msra.mxu0 %v1148
    %1168 = vmatmul.f32.gmra.mxu0 %v1144
    %v1169 = vpop.f32.mrf.mxu0
    %v1170 = vadd.f32 %v274, %v1169
    %1171 = vmatmul.f32.gmra.mxu0 %v1146
    %v1172 = vpop.f32.mrf.mxu0
    %v1173 = vadd.f32 %v275, %v1172
    %1174 = vdwg.mxu0
    %1175 = vrot.lane.b32.xlu0 %v160, 112
    %v1176 = vpop.permute.xlu0 %1175
    %1177 = vrot.lane.b32.xlu0 %v163, 112
    %v1178 = vpop.permute.xlu0 %1177
    %1179 = vrot.lane.b32.xlu0 %v160, 48
    %v1180 = vpop.permute.xlu0 %1179
    %1181 = vrot.lane.b32.xlu0 %v163, 48
    %v1182 = vpop.permute.xlu0 %1181
    %v1183 = vsel %vm318, %v1176, 0
    %v1185 = vsel %vm318, %v1178, 0
    %v1187 = vsel %vm318, %v1180, 0
    %v1189 = vsel %vm318, %v1182, 0
    %1191 = vmatpush.xpose.msra.mxu0 0.0
    %1192 = vmatpush.xpose.msra.mxu0 0.0
    %1193 = vmatpush.xpose.msra.mxu0 0.0
    %1194 = vmatpush.xpose.msra.mxu0 0.0
    %1195 = vmatpush.xpose.msra.mxu0 0.0
    %1196 = vmatpush.xpose.msra.mxu0 0.0
    %1197 = vmatpush.xpose.msra.mxu0 0.0
    %1198 = vmatpush.xpose.msra.mxu0 0.0
    %1199 = vmatpush.xpose.msra.mxu0 0.0
    %1200 = vmatpush.xpose.msra.mxu0 0.0
    %1201 = vmatpush.xpose.msra.mxu0 0.0
    %1202 = vmatpush.xpose.msra.mxu0 0.0
    %1203 = vmatpush.xpose.msra.mxu0 0.0
    %1204 = vmatpush.xpose.msra.mxu0 0.0
    %1205 = vmatpush.xpose.msra.mxu0 %v1189
    %1206 = vmatpush.xpose.msra.mxu0 %v1187
    %1207 = vmatmul.f32.gmra.mxu0 %v1183
    %v1208 = vpop.f32.mrf.mxu0
    %v1209 = vadd.f32 %v282, %v1208
    %1210 = vmatmul.f32.gmra.mxu0 %v1185
    %v1211 = vpop.f32.mrf.mxu0
    %v1212 = vadd.f32 %v283, %v1211
    %1213 = vdwg.mxu0
    %1214 = vrot.lane.b32.xlu0 %v166, 112
    %v1215 = vpop.permute.xlu0 %1214
    %1216 = vrot.lane.b32.xlu0 %v169, 112
    %v1217 = vpop.permute.xlu0 %1216
    %1218 = vrot.lane.b32.xlu0 %v166, 48
    %v1219 = vpop.permute.xlu0 %1218
    %1220 = vrot.lane.b32.xlu0 %v169, 48
    %v1221 = vpop.permute.xlu0 %1220
    %v1222 = vsel %vm318, %v1215, 0
    %v1224 = vsel %vm318, %v1217, 0
    %v1226 = vsel %vm318, %v1219, 0
    %v1228 = vsel %vm318, %v1221, 0
    %1230 = vmatpush.xpose.msra.mxu0 0.0
    %1231 = vmatpush.xpose.msra.mxu0 0.0
    %1232 = vmatpush.xpose.msra.mxu0 0.0
    %1233 = vmatpush.xpose.msra.mxu0 0.0
    %1234 = vmatpush.xpose.msra.mxu0 0.0
    %1235 = vmatpush.xpose.msra.mxu0 0.0
    %1236 = vmatpush.xpose.msra.mxu0 0.0
    %1237 = vmatpush.xpose.msra.mxu0 0.0
    %1238 = vmatpush.xpose.msra.mxu0 0.0
    %1239 = vmatpush.xpose.msra.mxu0 0.0
    %1240 = vmatpush.xpose.msra.mxu0 0.0
    %1241 = vmatpush.xpose.msra.mxu0 0.0
    %1242 = vmatpush.xpose.msra.mxu0 0.0
    %1243 = vmatpush.xpose.msra.mxu0 0.0
    %1244 = vmatpush.xpose.msra.mxu0 %v1228
    %1245 = vmatpush.xpose.msra.mxu0 %v1226
    %1246 = vmatmul.f32.gmra.mxu0 %v1222
    %v1247 = vpop.f32.mrf.mxu0
    %v1248 = vadd.f32 %v290, %v1247
    %1249 = vmatmul.f32.gmra.mxu0 %v1224
    %v1250 = vpop.f32.mrf.mxu0
    %v1251 = vadd.f32 %v291, %v1250
    %1252 = vdwg.mxu0
    %1253 = vrot.lane.b32.xlu0 %v172, 112
    %v1254 = vpop.permute.xlu0 %1253
    %1255 = vrot.lane.b32.xlu0 %v175, 112
    %v1256 = vpop.permute.xlu0 %1255
    %1257 = vrot.lane.b32.xlu0 %v172, 48
    %v1258 = vpop.permute.xlu0 %1257
    %1259 = vrot.lane.b32.xlu0 %v175, 48
    %v1260 = vpop.permute.xlu0 %1259
    %v1261 = vsel %vm318, %v1254, 0
    %v1263 = vsel %vm318, %v1256, 0
    %v1265 = vsel %vm318, %v1258, 0
    %v1267 = vsel %vm318, %v1260, 0
    %1269 = vmatpush.xpose.msra.mxu0 0.0
    %1270 = vmatpush.xpose.msra.mxu0 0.0
    %1271 = vmatpush.xpose.msra.mxu0 0.0
    %1272 = vmatpush.xpose.msra.mxu0 0.0
    %1273 = vmatpush.xpose.msra.mxu0 0.0
    %1274 = vmatpush.xpose.msra.mxu0 0.0
    %1275 = vmatpush.xpose.msra.mxu0 0.0
    %1276 = vmatpush.xpose.msra.mxu0 0.0
    %1277 = vmatpush.xpose.msra.mxu0 0.0
    %1278 = vmatpush.xpose.msra.mxu0 0.0
    %1279 = vmatpush.xpose.msra.mxu0 0.0
    %1280 = vmatpush.xpose.msra.mxu0 0.0
    %1281 = vmatpush.xpose.msra.mxu0 0.0
    %1282 = vmatpush.xpose.msra.mxu0 0.0
    %1283 = vmatpush.xpose.msra.mxu0 %v1267
    %1284 = vmatpush.xpose.msra.mxu0 %v1265
    %1285 = vmatmul.f32.gmra.mxu0 %v1261
    %v1286 = vpop.f32.mrf.mxu0
    %v1287 = vadd.f32 %v298, %v1286
    %1288 = vmatmul.f32.gmra.mxu0 %v1263
    %v1289 = vpop.f32.mrf.mxu0
    %v1290 = vadd.f32 %v299, %v1289
    %1291 = vdwg.mxu0
    %1292 = vrot.lane.b32.xlu0 %v178, 112
    %v1293 = vpop.permute.xlu0 %1292
    %1294 = vrot.lane.b32.xlu0 %v181, 112
    %v1295 = vpop.permute.xlu0 %1294
    %1296 = vrot.lane.b32.xlu0 %v178, 48
    %v1297 = vpop.permute.xlu0 %1296
    %1298 = vrot.lane.b32.xlu0 %v181, 48
    %v1299 = vpop.permute.xlu0 %1298
    %v1300 = vsel %vm318, %v1293, 0
    %v1302 = vsel %vm318, %v1295, 0
    %v1304 = vsel %vm318, %v1297, 0
    %v1306 = vsel %vm318, %v1299, 0
    %1308 = vmatpush.xpose.msra.mxu0 0.0
    %1309 = vmatpush.xpose.msra.mxu0 0.0
    %1310 = vmatpush.xpose.msra.mxu0 0.0
    %1311 = vmatpush.xpose.msra.mxu0 0.0
    %1312 = vmatpush.xpose.msra.mxu0 0.0
    %1313 = vmatpush.xpose.msra.mxu0 0.0
    %1314 = vmatpush.xpose.msra.mxu0 0.0
    %1315 = vmatpush.xpose.msra.mxu0 0.0
    %1316 = vmatpush.xpose.msra.mxu0 0.0
    %1317 = vmatpush.xpose.msra.mxu0 0.0
    %1318 = vmatpush.xpose.msra.mxu0 0.0
    %1319 = vmatpush.xpose.msra.mxu0 0.0
    %1320 = vmatpush.xpose.msra.mxu0 0.0
    %1321 = vmatpush.xpose.msra.mxu0 0.0
    %1322 = vmatpush.xpose.msra.mxu0 %v1306
    %1323 = vmatpush.xpose.msra.mxu0 %v1304
    %1324 = vmatmul.f32.gmra.mxu0 %v1300
    %v1325 = vpop.f32.mrf.mxu0
    %v1326 = vadd.f32 %v306, %v1325
    %1327 = vmatmul.f32.gmra.mxu0 %v1302
    %v1328 = vpop.f32.mrf.mxu0
    %v1329 = vadd.f32 %v307, %v1328
    %1330 = vdwg.mxu0
    %v1331 = vsel %vm318, %v1053, -inf
    %1332 = vmax.xlane.f32.xlu0 %v1331
    %v1333 = vpop.xlane.xlu0 %1332
    %v1334 = vsel %vm318, %v1056, -inf
    %1335 = vmax.xlane.f32.xlu0 %v1334
    %v1336 = vpop.xlane.xlu0 %1335
    %v1337 = vsel %vm318, %v1092, -inf
    %1338 = vmax.xlane.f32.xlu0 %v1337
    %v1339 = vpop.xlane.xlu0 %1338
    %v1340 = vsel %vm318, %v1095, -inf
    %1341 = vmax.xlane.f32.xlu0 %v1340
    %v1342 = vpop.xlane.xlu0 %1341
    %v1343 = vsel %vm318, %v1131, -inf
    %1344 = vmax.xlane.f32.xlu0 %v1343
    %v1345 = vpop.xlane.xlu0 %1344
    %v1346 = vsel %vm318, %v1134, -inf
    %1347 = vmax.xlane.f32.xlu0 %v1346
    %v1348 = vpop.xlane.xlu0 %1347
    %v1349 = vsel %vm318, %v1170, -inf
    %1350 = vmax.xlane.f32.xlu0 %v1349
    %v1351 = vpop.xlane.xlu0 %1350
    %v1352 = vsel %vm318, %v1173, -inf
    %1353 = vmax.xlane.f32.xlu0 %v1352
    %v1354 = vpop.xlane.xlu0 %1353
    %v1355 = vsel %vm318, %v1209, -inf
    %1356 = vmax.xlane.f32.xlu0 %v1355
    %v1357 = vpop.xlane.xlu0 %1356
    %v1358 = vsel %vm318, %v1212, -inf
    %1359 = vmax.xlane.f32.xlu0 %v1358
    %v1360 = vpop.xlane.xlu0 %1359
    %v1361 = vsel %vm318, %v1248, -inf
    %1362 = vmax.xlane.f32.xlu0 %v1361
    %v1363 = vpop.xlane.xlu0 %1362
    %v1364 = vsel %vm318, %v1251, -inf
    %1365 = vmax.xlane.f32.xlu0 %v1364
    %v1366 = vpop.xlane.xlu0 %1365
    %v1367 = vsel %vm318, %v1287, -inf
    %1368 = vmax.xlane.f32.xlu0 %v1367
    %v1369 = vpop.xlane.xlu0 %1368
    %v1370 = vsel %vm318, %v1290, -inf
    %1371 = vmax.xlane.f32.xlu0 %v1370
    %v1372 = vpop.xlane.xlu0 %1371
    %v1373 = vsel %vm318, %v1326, -inf
    %1374 = vmax.xlane.f32.xlu0 %v1373
    %v1375 = vpop.xlane.xlu0 %1374
    %v1376 = vsel %vm318, %v1329, -inf
    %1377 = vmax.xlane.f32.xlu0 %v1376
    %v1378 = vpop.xlane.xlu0 %1377
    %v1379 = vsub.f32 %v1053, %v1333
    %v1380 = vsub.f32 %v1056, %v1336
    %v1381 = vsub.f32 %v1092, %v1339
    %v1382 = vsub.f32 %v1095, %v1342
    %v1383 = vsub.f32 %v1131, %v1345
    %v1384 = vsub.f32 %v1134, %v1348
    %v1385 = vsub.f32 %v1170, %v1351
    %v1386 = vsub.f32 %v1173, %v1354
    %v1387 = vsub.f32 %v1209, %v1357
    %v1388 = vsub.f32 %v1212, %v1360
    %v1389 = vsub.f32 %v1248, %v1363
    %v1390 = vsub.f32 %v1251, %v1366
    %v1391 = vsub.f32 %v1287, %v1369
    %v1392 = vsub.f32 %v1290, %v1372
    %v1393 = vsub.f32 %v1326, %v1375
    %v1394 = vsub.f32 %v1329, %v1378
    %v1395 = vmul.f32 %v1379, 1.442695
    %v1396 = vpow.pop %v1395
    %v1397 = vmul.f32 %v1380, 1.442695
    %v1398 = vpow.pop %v1397
    %v1399 = vmul.f32 %v1381, 1.442695
    %v1400 = vpow.pop %v1399
    %v1401 = vmul.f32 %v1382, 1.442695
    %v1402 = vpow.pop %v1401
    %v1403 = vmul.f32 %v1383, 1.442695
    %v1404 = vpow.pop %v1403
    %v1405 = vmul.f32 %v1384, 1.442695
    %v1406 = vpow.pop %v1405
    %v1407 = vmul.f32 %v1385, 1.442695
    %v1408 = vpow.pop %v1407
    %v1409 = vmul.f32 %v1386, 1.442695
    %v1410 = vpow.pop %v1409
    %v1411 = vmul.f32 %v1387, 1.442695
    %v1412 = vpow.pop %v1411
    %v1413 = vmul.f32 %v1388, 1.442695
    %v1414 = vpow.pop %v1413
    %v1415 = vmul.f32 %v1389, 1.442695
    %v1416 = vpow.pop %v1415
    %v1417 = vmul.f32 %v1390, 1.442695
    %v1418 = vpow.pop %v1417
    %v1419 = vmul.f32 %v1391, 1.442695
    %v1420 = vpow.pop %v1419
    %v1421 = vmul.f32 %v1392, 1.442695
    %v1422 = vpow.pop %v1421
    %v1423 = vmul.f32 %v1393, 1.442695
    %v1424 = vpow.pop %v1423
    %v1425 = vmul.f32 %v1394, 1.442695
    %v1426 = vpow.pop %v1425
    %v1427 = vsel %vm318, %v1396, 0.0
    %1428 = vadd.xlane.f32.xlu0 %v1427
    %v1429 = vpop.xlane.xlu0 %1428
    %v1430 = vsel %vm318, %v1398, 0.0
    %1431 = vadd.xlane.f32.xlu0 %v1430
    %v1432 = vpop.xlane.xlu0 %1431
    %v1433 = vsel %vm318, %v1400, 0.0
    %1434 = vadd.xlane.f32.xlu0 %v1433
    %v1435 = vpop.xlane.xlu0 %1434
    %v1436 = vsel %vm318, %v1402, 0.0
    %1437 = vadd.xlane.f32.xlu0 %v1436
    %v1438 = vpop.xlane.xlu0 %1437
    %v1439 = vsel %vm318, %v1404, 0.0
    %1440 = vadd.xlane.f32.xlu0 %v1439
    %v1441 = vpop.xlane.xlu0 %1440
    %v1442 = vsel %vm318, %v1406, 0.0
    %1443 = vadd.xlane.f32.xlu0 %v1442
    %v1444 = vpop.xlane.xlu0 %1443
    %v1445 = vsel %vm318, %v1408, 0.0
    %1446 = vadd.xlane.f32.xlu0 %v1445
    %v1447 = vpop.xlane.xlu0 %1446
    %v1448 = vsel %vm318, %v1410, 0.0
    %1449 = vadd.xlane.f32.xlu0 %v1448
    %v1450 = vpop.xlane.xlu0 %1449
    %v1451 = vsel %vm318, %v1412, 0.0
    %1452 = vadd.xlane.f32.xlu0 %v1451
    %v1453 = vpop.xlane.xlu0 %1452
    %v1454 = vsel %vm318, %v1414, 0.0
    %1455 = vadd.xlane.f32.xlu0 %v1454
    %v1456 = vpop.xlane.xlu0 %1455
    %v1457 = vsel %vm318, %v1416, 0.0
    %1458 = vadd.xlane.f32.xlu0 %v1457
    %v1459 = vpop.xlane.xlu0 %1458
    %v1460 = vsel %vm318, %v1418, 0.0
    %1461 = vadd.xlane.f32.xlu0 %v1460
    %v1462 = vpop.xlane.xlu0 %1461
    %v1463 = vsel %vm318, %v1420, 0.0
    %1464 = vadd.xlane.f32.xlu0 %v1463
    %v1465 = vpop.xlane.xlu0 %1464
    %v1466 = vsel %vm318, %v1422, 0.0
    %1467 = vadd.xlane.f32.xlu0 %v1466
    %v1468 = vpop.xlane.xlu0 %1467
    %v1469 = vsel %vm318, %v1424, 0.0
    %1470 = vadd.xlane.f32.xlu0 %v1469
    %v1471 = vpop.xlane.xlu0 %1470
    %v1472 = vsel %vm318, %v1426, 0.0
    %1473 = vadd.xlane.f32.xlu0 %v1472
    %v1474 = vpop.xlane.xlu0 %1473
    %v1475 = vrcp.pop %v1429
    %v1476 = vrcp.pop %v1432
    %v1477 = vrcp.pop %v1435
    %v1478 = vrcp.pop %v1438
    %v1479 = vrcp.pop %v1441
    %v1480 = vrcp.pop %v1444
    %v1481 = vrcp.pop %v1447
    %v1482 = vrcp.pop %v1450
    %v1483 = vrcp.pop %v1453
    %v1484 = vrcp.pop %v1456
    %v1485 = vrcp.pop %v1459
    %v1486 = vrcp.pop %v1462
    %v1487 = vrcp.pop %v1465
    %v1488 = vrcp.pop %v1468
    %v1489 = vrcp.pop %v1471
    %v1490 = vrcp.pop %v1474
    %v1491 = vmul.f32 %v1396, %v1475
    %v1492 = vmul.f32 %v1398, %v1476
    %v1493 = vmul.f32 %v1400, %v1477
    %v1494 = vmul.f32 %v1402, %v1478
    %v1495 = vmul.f32 %v1404, %v1479
    %v1496 = vmul.f32 %v1406, %v1480
    %v1497 = vmul.f32 %v1408, %v1481
    %v1498 = vmul.f32 %v1410, %v1482
    %v1499 = vmul.f32 %v1412, %v1483
    %v1500 = vmul.f32 %v1414, %v1484
    %v1501 = vmul.f32 %v1416, %v1485
    %v1502 = vmul.f32 %v1418, %v1486
    %v1503 = vmul.f32 %v1420, %v1487
    %v1504 = vmul.f32 %v1422, %v1488
    %v1505 = vmul.f32 %v1424, %v1489
    %v1506 = vmul.f32 %v1426, %v1490
    %1509 = vrot.lane.b32.xlu0 %v201, 112
    %v1510 = vpop.permute.xlu0 %1509
    %1511 = vrot.lane.b32.xlu0 %v204, 112
    %v1512 = vpop.permute.xlu0 %1511
    %v1516 = vsel %vm318, %v1491, 0
    %v1519 = vsel %vm318, %v1492, 0
    %1521 = vmatpush.msra.mxu0 0.0
    %1522 = vmatpush.msra.mxu0 0.0
    %1523 = vmatpush.msra.mxu0 0.0
    %1524 = vmatpush.msra.mxu0 0.0
    %1525 = vmatpush.msra.mxu0 0.0
    %1526 = vmatpush.msra.mxu0 0.0
    %1527 = vmatpush.msra.mxu0 0.0
    %1528 = vmatpush.msra.mxu0 0.0
    %1529 = vmatpush.msra.mxu0 0.0
    %1530 = vmatpush.msra.mxu0 0.0
    %1531 = vmatpush.msra.mxu0 0.0
    %1532 = vmatpush.msra.mxu0 0.0
    %1533 = vmatpush.msra.mxu0 0.0
    %1534 = vmatpush.msra.mxu0 0.0
    %1535 = vmatpush.msra.mxu0 %v1512
    %1536 = vmatpush.msra.mxu0 %v1510
    %1537 = vmatmul.f32.gmra.mxu0 %v1516
    %v1538 = vpop.f32.mrf.mxu0
    %v1539 = vadd.f32 0.0, %v1538
    %1540 = vmatmul.f32.gmra.mxu0 %v1519
    %v1541 = vpop.f32.mrf.mxu0
    %v1542 = vadd.f32 0.0, %v1541
    %1543 = vdwg.mxu0
    %1546 = vrot.lane.b32.xlu0 %v207, 112
    %v1547 = vpop.permute.xlu0 %1546
    %1548 = vrot.lane.b32.xlu0 %v210, 112
    %v1549 = vpop.permute.xlu0 %1548
    %v1553 = vsel %vm318, %v1493, 0
    %v1556 = vsel %vm318, %v1494, 0
    %1558 = vmatpush.msra.mxu0 0.0
    %1559 = vmatpush.msra.mxu0 0.0
    %1560 = vmatpush.msra.mxu0 0.0
    %1561 = vmatpush.msra.mxu0 0.0
    %1562 = vmatpush.msra.mxu0 0.0
    %1563 = vmatpush.msra.mxu0 0.0
    %1564 = vmatpush.msra.mxu0 0.0
    %1565 = vmatpush.msra.mxu0 0.0
    %1566 = vmatpush.msra.mxu0 0.0
    %1567 = vmatpush.msra.mxu0 0.0
    %1568 = vmatpush.msra.mxu0 0.0
    %1569 = vmatpush.msra.mxu0 0.0
    %1570 = vmatpush.msra.mxu0 0.0
    %1571 = vmatpush.msra.mxu0 0.0
    %1572 = vmatpush.msra.mxu0 %v1549
    %1573 = vmatpush.msra.mxu0 %v1547
    %1574 = vmatmul.f32.gmra.mxu0 %v1553
    %v1575 = vpop.f32.mrf.mxu0
    %v1576 = vadd.f32 0.0, %v1575
    %1577 = vmatmul.f32.gmra.mxu0 %v1556
    %v1578 = vpop.f32.mrf.mxu0
    %v1579 = vadd.f32 0.0, %v1578
    %1580 = vdwg.mxu0
    %1583 = vrot.lane.b32.xlu0 %v213, 112
    %v1584 = vpop.permute.xlu0 %1583
    %1585 = vrot.lane.b32.xlu0 %v216, 112
    %v1586 = vpop.permute.xlu0 %1585
    %v1590 = vsel %vm318, %v1495, 0
    %v1593 = vsel %vm318, %v1496, 0
    %1595 = vmatpush.msra.mxu0 0.0
    %1596 = vmatpush.msra.mxu0 0.0
    %1597 = vmatpush.msra.mxu0 0.0
    %1598 = vmatpush.msra.mxu0 0.0
    %1599 = vmatpush.msra.mxu0 0.0
    %1600 = vmatpush.msra.mxu0 0.0
    %1601 = vmatpush.msra.mxu0 0.0
    %1602 = vmatpush.msra.mxu0 0.0
    %1603 = vmatpush.msra.mxu0 0.0
    %1604 = vmatpush.msra.mxu0 0.0
    %1605 = vmatpush.msra.mxu0 0.0
    %1606 = vmatpush.msra.mxu0 0.0
    %1607 = vmatpush.msra.mxu0 0.0
    %1608 = vmatpush.msra.mxu0 0.0
    %1609 = vmatpush.msra.mxu0 %v1586
    %1610 = vmatpush.msra.mxu0 %v1584
    %1611 = vmatmul.f32.gmra.mxu0 %v1590
    %v1612 = vpop.f32.mrf.mxu0
    %v1613 = vadd.f32 0.0, %v1612
    %1614 = vmatmul.f32.gmra.mxu0 %v1593
    %v1615 = vpop.f32.mrf.mxu0
    %v1616 = vadd.f32 0.0, %v1615
    %1617 = vdwg.mxu0
    %1620 = vrot.lane.b32.xlu0 %v219, 112
    %v1621 = vpop.permute.xlu0 %1620
    %1622 = vrot.lane.b32.xlu0 %v222, 112
    %v1623 = vpop.permute.xlu0 %1622
    %v1627 = vsel %vm318, %v1497, 0
    %v1630 = vsel %vm318, %v1498, 0
    %1632 = vmatpush.msra.mxu0 0.0
    %1633 = vmatpush.msra.mxu0 0.0
    %1634 = vmatpush.msra.mxu0 0.0
    %1635 = vmatpush.msra.mxu0 0.0
    %1636 = vmatpush.msra.mxu0 0.0
    %1637 = vmatpush.msra.mxu0 0.0
    %1638 = vmatpush.msra.mxu0 0.0
    %1639 = vmatpush.msra.mxu0 0.0
    %1640 = vmatpush.msra.mxu0 0.0
    %1641 = vmatpush.msra.mxu0 0.0
    %1642 = vmatpush.msra.mxu0 0.0
    %1643 = vmatpush.msra.mxu0 0.0
    %1644 = vmatpush.msra.mxu0 0.0
    %1645 = vmatpush.msra.mxu0 0.0
    %1646 = vmatpush.msra.mxu0 %v1623
    %1647 = vmatpush.msra.mxu0 %v1621
    %1648 = vmatmul.f32.gmra.mxu0 %v1627
    %v1649 = vpop.f32.mrf.mxu0
    %v1650 = vadd.f32 0.0, %v1649
    %1651 = vmatmul.f32.gmra.mxu0 %v1630
    %v1652 = vpop.f32.mrf.mxu0
    %v1653 = vadd.f32 0.0, %v1652
    %1654 = vdwg.mxu0
    %1657 = vrot.lane.b32.xlu0 %v225, 112
    %v1658 = vpop.permute.xlu0 %1657
    %1659 = vrot.lane.b32.xlu0 %v228, 112
    %v1660 = vpop.permute.xlu0 %1659
    %v1664 = vsel %vm318, %v1499, 0
    %v1667 = vsel %vm318, %v1500, 0
    %1669 = vmatpush.msra.mxu0 0.0
    %1670 = vmatpush.msra.mxu0 0.0
    %1671 = vmatpush.msra.mxu0 0.0
    %1672 = vmatpush.msra.mxu0 0.0
    %1673 = vmatpush.msra.mxu0 0.0
    %1674 = vmatpush.msra.mxu0 0.0
    %1675 = vmatpush.msra.mxu0 0.0
    %1676 = vmatpush.msra.mxu0 0.0
    %1677 = vmatpush.msra.mxu0 0.0
    %1678 = vmatpush.msra.mxu0 0.0
    %1679 = vmatpush.msra.mxu0 0.0
    %1680 = vmatpush.msra.mxu0 0.0
    %1681 = vmatpush.msra.mxu0 0.0
    %1682 = vmatpush.msra.mxu0 0.0
    %1683 = vmatpush.msra.mxu0 %v1660
    %1684 = vmatpush.msra.mxu0 %v1658
    %1685 = vmatmul.f32.gmra.mxu0 %v1664
    %v1686 = vpop.f32.mrf.mxu0
    %v1687 = vadd.f32 0.0, %v1686
    %1688 = vmatmul.f32.gmra.mxu0 %v1667
    %v1689 = vpop.f32.mrf.mxu0
    %v1690 = vadd.f32 0.0, %v1689
    %1691 = vdwg.mxu0
    %1694 = vrot.lane.b32.xlu0 %v231, 112
    %v1695 = vpop.permute.xlu0 %1694
    %1696 = vrot.lane.b32.xlu0 %v234, 112
    %v1697 = vpop.permute.xlu0 %1696
    %v1701 = vsel %vm318, %v1501, 0
    %v1704 = vsel %vm318, %v1502, 0
    %1706 = vmatpush.msra.mxu0 0.0
    %1707 = vmatpush.msra.mxu0 0.0
    %1708 = vmatpush.msra.mxu0 0.0
    %1709 = vmatpush.msra.mxu0 0.0
    %1710 = vmatpush.msra.mxu0 0.0
    %1711 = vmatpush.msra.mxu0 0.0
    %1712 = vmatpush.msra.mxu0 0.0
    %1713 = vmatpush.msra.mxu0 0.0
    %1714 = vmatpush.msra.mxu0 0.0
    %1715 = vmatpush.msra.mxu0 0.0
    %1716 = vmatpush.msra.mxu0 0.0
    %1717 = vmatpush.msra.mxu0 0.0
    %1718 = vmatpush.msra.mxu0 0.0
    %1719 = vmatpush.msra.mxu0 0.0
    %1720 = vmatpush.msra.mxu0 %v1697
    %1721 = vmatpush.msra.mxu0 %v1695
    %1722 = vmatmul.f32.gmra.mxu0 %v1701
    %v1723 = vpop.f32.mrf.mxu0
    %v1724 = vadd.f32 0.0, %v1723
    %1725 = vmatmul.f32.gmra.mxu0 %v1704
    %v1726 = vpop.f32.mrf.mxu0
    %v1727 = vadd.f32 0.0, %v1726
    %1728 = vdwg.mxu0
    %1731 = vrot.lane.b32.xlu0 %v237, 112
    %v1732 = vpop.permute.xlu0 %1731
    %1733 = vrot.lane.b32.xlu0 %v240, 112
    %v1734 = vpop.permute.xlu0 %1733
    %v1738 = vsel %vm318, %v1503, 0
    %v1741 = vsel %vm318, %v1504, 0
    %1743 = vmatpush.msra.mxu0 0.0
    %1744 = vmatpush.msra.mxu0 0.0
    %1745 = vmatpush.msra.mxu0 0.0
    %1746 = vmatpush.msra.mxu0 0.0
    %1747 = vmatpush.msra.mxu0 0.0
    %1748 = vmatpush.msra.mxu0 0.0
    %1749 = vmatpush.msra.mxu0 0.0
    %1750 = vmatpush.msra.mxu0 0.0
    %1751 = vmatpush.msra.mxu0 0.0
    %1752 = vmatpush.msra.mxu0 0.0
    %1753 = vmatpush.msra.mxu0 0.0
    %1754 = vmatpush.msra.mxu0 0.0
    %1755 = vmatpush.msra.mxu0 0.0
    %1756 = vmatpush.msra.mxu0 0.0
    %1757 = vmatpush.msra.mxu0 %v1734
    %1758 = vmatpush.msra.mxu0 %v1732
    %1759 = vmatmul.f32.gmra.mxu0 %v1738
    %v1760 = vpop.f32.mrf.mxu0
    %v1761 = vadd.f32 0.0, %v1760
    %1762 = vmatmul.f32.gmra.mxu0 %v1741
    %v1763 = vpop.f32.mrf.mxu0
    %v1764 = vadd.f32 0.0, %v1763
    %1765 = vdwg.mxu0
    %1768 = vrot.lane.b32.xlu0 %v243, 112
    %v1769 = vpop.permute.xlu0 %1768
    %1770 = vrot.lane.b32.xlu0 %v246, 112
    %v1771 = vpop.permute.xlu0 %1770
    %v1775 = vsel %vm318, %v1505, 0
    %v1778 = vsel %vm318, %v1506, 0
    %1780 = vmatpush.msra.mxu0 0.0
    %1781 = vmatpush.msra.mxu0 0.0
    %1782 = vmatpush.msra.mxu0 0.0
    %1783 = vmatpush.msra.mxu0 0.0
    %1784 = vmatpush.msra.mxu0 0.0
    %1785 = vmatpush.msra.mxu0 0.0
    %1786 = vmatpush.msra.mxu0 0.0
    %1787 = vmatpush.msra.mxu0 0.0
    %1788 = vmatpush.msra.mxu0 0.0
    %1789 = vmatpush.msra.mxu0 0.0
    %1790 = vmatpush.msra.mxu0 0.0
    %1791 = vmatpush.msra.mxu0 0.0
    %1792 = vmatpush.msra.mxu0 0.0
    %1793 = vmatpush.msra.mxu0 0.0
    %1794 = vmatpush.msra.mxu0 %v1771
    %1795 = vmatpush.msra.mxu0 %v1769
    %1796 = vmatmul.f32.gmra.mxu0 %v1775
    %v1797 = vpop.f32.mrf.mxu0
    %v1798 = vadd.f32 0.0, %v1797
    %1799 = vmatmul.f32.gmra.mxu0 %v1778
    %v1800 = vpop.f32.mrf.mxu0
    %v1801 = vadd.f32 0.0, %v1800
    %1802 = vdwg.mxu0
    %s1803 = scalar_lea.vmem %s3, 16
    %v1804 = vld [vmem:[%s1803] sm:$0xff]
    %v1805 = vld [vmem:[%s1803 + $0x8] sm:$0xff]
    %v1807 = vsel %vm318, %v1539, 0
    %v1810 = vsel %vm318, %v1542, 0
    %v1813 = vsel %vm318, %v1576, 0
    %v1816 = vsel %vm318, %v1579, 0
    %v1819 = vsel %vm318, %v1613, 0
    %v1822 = vsel %vm318, %v1616, 0
    %v1825 = vsel %vm318, %v1650, 0
    %v1828 = vsel %vm318, %v1653, 0
    %v1831 = vsel %vm318, %v1687, 0
    %v1834 = vsel %vm318, %v1690, 0
    %v1837 = vsel %vm318, %v1724, 0
    %v1840 = vsel %vm318, %v1727, 0
    %v1843 = vsel %vm318, %v1761, 0
    %v1846 = vsel %vm318, %v1764, 0
    %v1849 = vsel %vm318, %v1798, 0
    %v1852 = vsel %vm318, %v1801, 0
    %1854 = vmatpush.msra.mxu0 0.0
    %1855 = vmatpush.msra.mxu0 0.0
    %1856 = vmatpush.msra.mxu0 0.0
    %1857 = vmatpush.msra.mxu0 0.0
    %1858 = vmatpush.msra.mxu0 0.0
    %1859 = vmatpush.msra.mxu0 0.0
    %1860 = vmatpush.msra.mxu0 0.0
    %1861 = vmatpush.msra.mxu0 0.0
    %1862 = vmatpush.msra.mxu0 0.0
    %1863 = vmatpush.msra.mxu0 0.0
    %1864 = vmatpush.msra.mxu0 0.0
    %1865 = vmatpush.msra.mxu0 0.0
    %1866 = vmatpush.msra.mxu0 0.0
    %1867 = vmatpush.msra.mxu0 0.0
    %1868 = vmatpush.msra.mxu0 %v1805
    %1869 = vmatpush.msra.mxu0 %v1804
    %1870 = vmatmul.f32.gmra.mxu0 %v1807
    %v1871 = vpop.f32.mrf.mxu0
    %v1872 = vadd.f32 0.0, %v1871
    %1873 = vmatmul.f32.gmra.mxu0 %v1810
    %v1874 = vpop.f32.mrf.mxu0
    %v1875 = vadd.f32 0.0, %v1874
    %1876 = vmatmul.f32.gmra.mxu0 %v1813
    %v1877 = vpop.f32.mrf.mxu0
    %v1878 = vadd.f32 0.0, %v1877
    %1879 = vmatmul.f32.gmra.mxu0 %v1816
    %v1880 = vpop.f32.mrf.mxu0
    %v1881 = vadd.f32 0.0, %v1880
    %1882 = vmatmul.f32.gmra.mxu0 %v1819
    %v1883 = vpop.f32.mrf.mxu0
    %v1884 = vadd.f32 0.0, %v1883
    %1885 = vmatmul.f32.gmra.mxu0 %v1822
    %v1886 = vpop.f32.mrf.mxu0
    %v1887 = vadd.f32 0.0, %v1886
    %1888 = vmatmul.f32.gmra.mxu0 %v1825
    %v1889 = vpop.f32.mrf.mxu0
    %v1890 = vadd.f32 0.0, %v1889
    %1891 = vmatmul.f32.gmra.mxu0 %v1828
    %v1892 = vpop.f32.mrf.mxu0
    %v1893 = vadd.f32 0.0, %v1892
    %1894 = vmatmul.f32.gmra.mxu0 %v1831
    %v1895 = vpop.f32.mrf.mxu0
    %v1896 = vadd.f32 0.0, %v1895
    %1897 = vmatmul.f32.gmra.mxu0 %v1834
    %v1898 = vpop.f32.mrf.mxu0
    %v1899 = vadd.f32 0.0, %v1898
    %1900 = vmatmul.f32.gmra.mxu0 %v1837
    %v1901 = vpop.f32.mrf.mxu0
    %v1902 = vadd.f32 0.0, %v1901
    %1903 = vmatmul.f32.gmra.mxu0 %v1840
    %v1904 = vpop.f32.mrf.mxu0
    %v1905 = vadd.f32 0.0, %v1904
    %1906 = vmatmul.f32.gmra.mxu0 %v1843
    %v1907 = vpop.f32.mrf.mxu0
    %v1908 = vadd.f32 0.0, %v1907
    %1909 = vmatmul.f32.gmra.mxu0 %v1846
    %v1910 = vpop.f32.mrf.mxu0
    %v1911 = vadd.f32 0.0, %v1910
    %1912 = vmatmul.f32.gmra.mxu0 %v1849
    %v1913 = vpop.f32.mrf.mxu0
    %v1914 = vadd.f32 0.0, %v1913
    %1915 = vmatmul.f32.gmra.mxu0 %v1852
    %v1916 = vpop.f32.mrf.mxu0
    %v1917 = vadd.f32 0.0, %v1916
    %1918 = vdwg.mxu0
    %v1920 = vsel %vm318, %v809, 0
    %v1923 = vsel %vm318, %v812, 0
    %v1926 = vsel %vm318, %v838, 0
    %v1929 = vsel %vm318, %v841, 0
    %v1932 = vsel %vm318, %v867, 0
    %v1935 = vsel %vm318, %v870, 0
    %v1938 = vsel %vm318, %v896, 0
    %v1941 = vsel %vm318, %v899, 0
    %v1944 = vsel %vm318, %v925, 0
    %v1947 = vsel %vm318, %v928, 0
    %v1950 = vsel %vm318, %v954, 0
    %v1953 = vsel %vm318, %v957, 0
    %v1956 = vsel %vm318, %v983, 0
    %v1959 = vsel %vm318, %v986, 0
    %v1962 = vsel %vm318, %v1012, 0
    %v1965 = vsel %vm318, %v1015, 0
    %1967 = vmatpush.msra.mxu0 0.0
    %1968 = vmatpush.msra.mxu0 0.0
    %1969 = vmatpush.msra.mxu0 0.0
    %1970 = vmatpush.msra.mxu0 0.0
    %1971 = vmatpush.msra.mxu0 0.0
    %1972 = vmatpush.msra.mxu0 0.0
    %1973 = vmatpush.msra.mxu0 0.0
    %1974 = vmatpush.msra.mxu0 0.0
    %1975 = vmatpush.msra.mxu0 0.0
    %1976 = vmatpush.msra.mxu0 0.0
    %1977 = vmatpush.msra.mxu0 0.0
    %1978 = vmatpush.msra.mxu0 0.0
    %1979 = vmatpush.msra.mxu0 0.0
    %1980 = vmatpush.msra.mxu0 0.0
    %1981 = vmatpush.msra.mxu0 %v1018
    %1982 = vmatpush.msra.mxu0 %v1017
    %1983 = vmatmul.f32.gmra.mxu0 %v1920
    %v1984 = vpop.f32.mrf.mxu0
    %v1985 = vadd.f32 %v1872, %v1984
    %1986 = vmatmul.f32.gmra.mxu0 %v1923
    %v1987 = vpop.f32.mrf.mxu0
    %v1988 = vadd.f32 %v1875, %v1987
    %1989 = vmatmul.f32.gmra.mxu0 %v1926
    %v1990 = vpop.f32.mrf.mxu0
    %v1991 = vadd.f32 %v1878, %v1990
    %1992 = vmatmul.f32.gmra.mxu0 %v1929
    %v1993 = vpop.f32.mrf.mxu0
    %v1994 = vadd.f32 %v1881, %v1993
    %1995 = vmatmul.f32.gmra.mxu0 %v1932
    %v1996 = vpop.f32.mrf.mxu0
    %v1997 = vadd.f32 %v1884, %v1996
    %1998 = vmatmul.f32.gmra.mxu0 %v1935
    %v1999 = vpop.f32.mrf.mxu0
    %v2000 = vadd.f32 %v1887, %v1999
    %2001 = vmatmul.f32.gmra.mxu0 %v1938
    %v2002 = vpop.f32.mrf.mxu0
    %v2003 = vadd.f32 %v1890, %v2002
    %2004 = vmatmul.f32.gmra.mxu0 %v1941
    %v2005 = vpop.f32.mrf.mxu0
    %v2006 = vadd.f32 %v1893, %v2005
    %2007 = vmatmul.f32.gmra.mxu0 %v1944
    %v2008 = vpop.f32.mrf.mxu0
    %v2009 = vadd.f32 %v1896, %v2008
    %2010 = vmatmul.f32.gmra.mxu0 %v1947
    %v2011 = vpop.f32.mrf.mxu0
    %v2012 = vadd.f32 %v1899, %v2011
    %2013 = vmatmul.f32.gmra.mxu0 %v1950
    %v2014 = vpop.f32.mrf.mxu0
    %v2015 = vadd.f32 %v1902, %v2014
    %2016 = vmatmul.f32.gmra.mxu0 %v1953
    %v2017 = vpop.f32.mrf.mxu0
    %v2018 = vadd.f32 %v1905, %v2017
    %2019 = vmatmul.f32.gmra.mxu0 %v1956
    %v2020 = vpop.f32.mrf.mxu0
    %v2021 = vadd.f32 %v1908, %v2020
    %2022 = vmatmul.f32.gmra.mxu0 %v1959
    %v2023 = vpop.f32.mrf.mxu0
    %v2024 = vadd.f32 %v1911, %v2023
    %2025 = vmatmul.f32.gmra.mxu0 %v1962
    %v2026 = vpop.f32.mrf.mxu0
    %v2027 = vadd.f32 %v1914, %v2026
    %2028 = vmatmul.f32.gmra.mxu0 %v1965
    %v2029 = vpop.f32.mrf.mxu0
    %v2030 = vadd.f32 %v1917, %v2029
    %2031 = vdwg.mxu0
    %2032 = vrot.lane.b32.xlu0 %v136, 96
    %v2033 = vpop.permute.xlu0 %2032
    %2034 = vrot.lane.b32.xlu0 %v139, 96
    %v2035 = vpop.permute.xlu0 %2034
    %2036 = vrot.lane.b32.xlu0 %v136, 32
    %v2037 = vpop.permute.xlu0 %2036
    %2038 = vrot.lane.b32.xlu0 %v139, 32
    %v2039 = vpop.permute.xlu0 %2038
    %v2040 = vsel %vm318, %v2033, 0
    %v2042 = vsel %vm318, %v2035, 0
    %v2044 = vsel %vm318, %v2037, 0
    %v2046 = vsel %vm318, %v2039, 0
    %2048 = vmatpush.xpose.msra.mxu0 0.0
    %2049 = vmatpush.xpose.msra.mxu0 0.0
    %2050 = vmatpush.xpose.msra.mxu0 0.0
    %2051 = vmatpush.xpose.msra.mxu0 0.0
    %2052 = vmatpush.xpose.msra.mxu0 0.0
    %2053 = vmatpush.xpose.msra.mxu0 0.0
    %2054 = vmatpush.xpose.msra.mxu0 0.0
    %2055 = vmatpush.xpose.msra.mxu0 0.0
    %2056 = vmatpush.xpose.msra.mxu0 0.0
    %2057 = vmatpush.xpose.msra.mxu0 0.0
    %2058 = vmatpush.xpose.msra.mxu0 0.0
    %2059 = vmatpush.xpose.msra.mxu0 0.0
    %2060 = vmatpush.xpose.msra.mxu0 0.0
    %2061 = vmatpush.xpose.msra.mxu0 0.0
    %2062 = vmatpush.xpose.msra.mxu0 %v2046
    %2063 = vmatpush.xpose.msra.mxu0 %v2044
    %2064 = vmatmul.f32.gmra.mxu0 %v2040
    %v2065 = vpop.f32.mrf.mxu0
    %v2066 = vadd.f32 %v252, %v2065
    %2067 = vmatmul.f32.gmra.mxu0 %v2042
    %v2068 = vpop.f32.mrf.mxu0
    %v2069 = vadd.f32 %v253, %v2068
    %2070 = vdwg.mxu0
    %2071 = vrot.lane.b32.xlu0 %v142, 96
    %v2072 = vpop.permute.xlu0 %2071
    %2073 = vrot.lane.b32.xlu0 %v145, 96
    %v2074 = vpop.permute.xlu0 %2073
    %2075 = vrot.lane.b32.xlu0 %v142, 32
    %v2076 = vpop.permute.xlu0 %2075
    %2077 = vrot.lane.b32.xlu0 %v145, 32
    %v2078 = vpop.permute.xlu0 %2077
    %v2079 = vsel %vm318, %v2072, 0
    %v2081 = vsel %vm318, %v2074, 0
    %v2083 = vsel %vm318, %v2076, 0
    %v2085 = vsel %vm318, %v2078, 0
    %2087 = vmatpush.xpose.msra.mxu0 0.0
    %2088 = vmatpush.xpose.msra.mxu0 0.0
    %2089 = vmatpush.xpose.msra.mxu0 0.0
    %2090 = vmatpush.xpose.msra.mxu0 0.0
    %2091 = vmatpush.xpose.msra.mxu0 0.0
    %2092 = vmatpush.xpose.msra.mxu0 0.0
    %2093 = vmatpush.xpose.msra.mxu0 0.0
    %2094 = vmatpush.xpose.msra.mxu0 0.0
    %2095 = vmatpush.xpose.msra.mxu0 0.0
    %2096 = vmatpush.xpose.msra.mxu0 0.0
    %2097 = vmatpush.xpose.msra.mxu0 0.0
    %2098 = vmatpush.xpose.msra.mxu0 0.0
    %2099 = vmatpush.xpose.msra.mxu0 0.0
    %2100 = vmatpush.xpose.msra.mxu0 0.0
    %2101 = vmatpush.xpose.msra.mxu0 %v2085
    %2102 = vmatpush.xpose.msra.mxu0 %v2083
    %2103 = vmatmul.f32.gmra.mxu0 %v2079
    %v2104 = vpop.f32.mrf.mxu0
    %v2105 = vadd.f32 %v260, %v2104
    %2106 = vmatmul.f32.gmra.mxu0 %v2081
    %v2107 = vpop.f32.mrf.mxu0
    %v2108 = vadd.f32 %v261, %v2107
    %2109 = vdwg.mxu0
    %2110 = vrot.lane.b32.xlu0 %v148, 96
    %v2111 = vpop.permute.xlu0 %2110
    %2112 = vrot.lane.b32.xlu0 %v151, 96
    %v2113 = vpop.permute.xlu0 %2112
    %2114 = vrot.lane.b32.xlu0 %v148, 32
    %v2115 = vpop.permute.xlu0 %2114
    %2116 = vrot.lane.b32.xlu0 %v151, 32
    %v2117 = vpop.permute.xlu0 %2116
    %v2118 = vsel %vm318, %v2111, 0
    %v2120 = vsel %vm318, %v2113, 0
    %v2122 = vsel %vm318, %v2115, 0
    %v2124 = vsel %vm318, %v2117, 0
    %2126 = vmatpush.xpose.msra.mxu0 0.0
    %2127 = vmatpush.xpose.msra.mxu0 0.0
    %2128 = vmatpush.xpose.msra.mxu0 0.0
    %2129 = vmatpush.xpose.msra.mxu0 0.0
    %2130 = vmatpush.xpose.msra.mxu0 0.0
    %2131 = vmatpush.xpose.msra.mxu0 0.0
    %2132 = vmatpush.xpose.msra.mxu0 0.0
    %2133 = vmatpush.xpose.msra.mxu0 0.0
    %2134 = vmatpush.xpose.msra.mxu0 0.0
    %2135 = vmatpush.xpose.msra.mxu0 0.0
    %2136 = vmatpush.xpose.msra.mxu0 0.0
    %2137 = vmatpush.xpose.msra.mxu0 0.0
    %2138 = vmatpush.xpose.msra.mxu0 0.0
    %2139 = vmatpush.xpose.msra.mxu0 0.0
    %2140 = vmatpush.xpose.msra.mxu0 %v2124
    %2141 = vmatpush.xpose.msra.mxu0 %v2122
    %2142 = vmatmul.f32.gmra.mxu0 %v2118
    %v2143 = vpop.f32.mrf.mxu0
    %v2144 = vadd.f32 %v268, %v2143
    %2145 = vmatmul.f32.gmra.mxu0 %v2120
    %v2146 = vpop.f32.mrf.mxu0
    %v2147 = vadd.f32 %v269, %v2146
    %2148 = vdwg.mxu0
    %2149 = vrot.lane.b32.xlu0 %v154, 96
    %v2150 = vpop.permute.xlu0 %2149
    %2151 = vrot.lane.b32.xlu0 %v157, 96
    %v2152 = vpop.permute.xlu0 %2151
    %2153 = vrot.lane.b32.xlu0 %v154, 32
    %v2154 = vpop.permute.xlu0 %2153
    %2155 = vrot.lane.b32.xlu0 %v157, 32
    %v2156 = vpop.permute.xlu0 %2155
    %v2157 = vsel %vm318, %v2150, 0
    %v2159 = vsel %vm318, %v2152, 0
    %v2161 = vsel %vm318, %v2154, 0
    %v2163 = vsel %vm318, %v2156, 0
    %2165 = vmatpush.xpose.msra.mxu0 0.0
    %2166 = vmatpush.xpose.msra.mxu0 0.0
    %2167 = vmatpush.xpose.msra.mxu0 0.0
    %2168 = vmatpush.xpose.msra.mxu0 0.0
    %2169 = vmatpush.xpose.msra.mxu0 0.0
    %2170 = vmatpush.xpose.msra.mxu0 0.0
    %2171 = vmatpush.xpose.msra.mxu0 0.0
    %2172 = vmatpush.xpose.msra.mxu0 0.0
    %2173 = vmatpush.xpose.msra.mxu0 0.0
    %2174 = vmatpush.xpose.msra.mxu0 0.0
    %2175 = vmatpush.xpose.msra.mxu0 0.0
    %2176 = vmatpush.xpose.msra.mxu0 0.0
    %2177 = vmatpush.xpose.msra.mxu0 0.0
    %2178 = vmatpush.xpose.msra.mxu0 0.0
    %2179 = vmatpush.xpose.msra.mxu0 %v2163
    %2180 = vmatpush.xpose.msra.mxu0 %v2161
    %2181 = vmatmul.f32.gmra.mxu0 %v2157
    %v2182 = vpop.f32.mrf.mxu0
    %v2183 = vadd.f32 %v276, %v2182
    %2184 = vmatmul.f32.gmra.mxu0 %v2159
    %v2185 = vpop.f32.mrf.mxu0
    %v2186 = vadd.f32 %v277, %v2185
    %2187 = vdwg.mxu0
    %2188 = vrot.lane.b32.xlu0 %v160, 96
    %v2189 = vpop.permute.xlu0 %2188
    %2190 = vrot.lane.b32.xlu0 %v163, 96
    %v2191 = vpop.permute.xlu0 %2190
    %2192 = vrot.lane.b32.xlu0 %v160, 32
    %v2193 = vpop.permute.xlu0 %2192
    %2194 = vrot.lane.b32.xlu0 %v163, 32
    %v2195 = vpop.permute.xlu0 %2194
    %v2196 = vsel %vm318, %v2189, 0
    %v2198 = vsel %vm318, %v2191, 0
    %v2200 = vsel %vm318, %v2193, 0
    %v2202 = vsel %vm318, %v2195, 0
    %2204 = vmatpush.xpose.msra.mxu0 0.0
    %2205 = vmatpush.xpose.msra.mxu0 0.0
    %2206 = vmatpush.xpose.msra.mxu0 0.0
    %2207 = vmatpush.xpose.msra.mxu0 0.0
    %2208 = vmatpush.xpose.msra.mxu0 0.0
    %2209 = vmatpush.xpose.msra.mxu0 0.0
    %2210 = vmatpush.xpose.msra.mxu0 0.0
    %2211 = vmatpush.xpose.msra.mxu0 0.0
    %2212 = vmatpush.xpose.msra.mxu0 0.0
    %2213 = vmatpush.xpose.msra.mxu0 0.0
    %2214 = vmatpush.xpose.msra.mxu0 0.0
    %2215 = vmatpush.xpose.msra.mxu0 0.0
    %2216 = vmatpush.xpose.msra.mxu0 0.0
    %2217 = vmatpush.xpose.msra.mxu0 0.0
    %2218 = vmatpush.xpose.msra.mxu0 %v2202
    %2219 = vmatpush.xpose.msra.mxu0 %v2200
    %2220 = vmatmul.f32.gmra.mxu0 %v2196
    %v2221 = vpop.f32.mrf.mxu0
    %v2222 = vadd.f32 %v284, %v2221
    %2223 = vmatmul.f32.gmra.mxu0 %v2198
    %v2224 = vpop.f32.mrf.mxu0
    %v2225 = vadd.f32 %v285, %v2224
    %2226 = vdwg.mxu0
    %2227 = vrot.lane.b32.xlu0 %v166, 96
    %v2228 = vpop.permute.xlu0 %2227
    %2229 = vrot.lane.b32.xlu0 %v169, 96
    %v2230 = vpop.permute.xlu0 %2229
    %2231 = vrot.lane.b32.xlu0 %v166, 32
    %v2232 = vpop.permute.xlu0 %2231
    %2233 = vrot.lane.b32.xlu0 %v169, 32
    %v2234 = vpop.permute.xlu0 %2233
    %v2235 = vsel %vm318, %v2228, 0
    %v2237 = vsel %vm318, %v2230, 0
    %v2239 = vsel %vm318, %v2232, 0
    %v2241 = vsel %vm318, %v2234, 0
    %2243 = vmatpush.xpose.msra.mxu0 0.0
    %2244 = vmatpush.xpose.msra.mxu0 0.0
    %2245 = vmatpush.xpose.msra.mxu0 0.0
    %2246 = vmatpush.xpose.msra.mxu0 0.0
    %2247 = vmatpush.xpose.msra.mxu0 0.0
    %2248 = vmatpush.xpose.msra.mxu0 0.0
    %2249 = vmatpush.xpose.msra.mxu0 0.0
    %2250 = vmatpush.xpose.msra.mxu0 0.0
    %2251 = vmatpush.xpose.msra.mxu0 0.0
    %2252 = vmatpush.xpose.msra.mxu0 0.0
    %2253 = vmatpush.xpose.msra.mxu0 0.0
    %2254 = vmatpush.xpose.msra.mxu0 0.0
    %2255 = vmatpush.xpose.msra.mxu0 0.0
    %2256 = vmatpush.xpose.msra.mxu0 0.0
    %2257 = vmatpush.xpose.msra.mxu0 %v2241
    %2258 = vmatpush.xpose.msra.mxu0 %v2239
    %2259 = vmatmul.f32.gmra.mxu0 %v2235
    %v2260 = vpop.f32.mrf.mxu0
    %v2261 = vadd.f32 %v292, %v2260
    %2262 = vmatmul.f32.gmra.mxu0 %v2237
    %v2263 = vpop.f32.mrf.mxu0
    %v2264 = vadd.f32 %v293, %v2263
    %2265 = vdwg.mxu0
    %2266 = vrot.lane.b32.xlu0 %v172, 96
    %v2267 = vpop.permute.xlu0 %2266
    %2268 = vrot.lane.b32.xlu0 %v175, 96
    %v2269 = vpop.permute.xlu0 %2268
    %2270 = vrot.lane.b32.xlu0 %v172, 32
    %v2271 = vpop.permute.xlu0 %2270
    %2272 = vrot.lane.b32.xlu0 %v175, 32
    %v2273 = vpop.permute.xlu0 %2272
    %v2274 = vsel %vm318, %v2267, 0
    %v2276 = vsel %vm318, %v2269, 0
    %v2278 = vsel %vm318, %v2271, 0
    %v2280 = vsel %vm318, %v2273, 0
    %2282 = vmatpush.xpose.msra.mxu0 0.0
    %2283 = vmatpush.xpose.msra.mxu0 0.0
    %2284 = vmatpush.xpose.msra.mxu0 0.0
    %2285 = vmatpush.xpose.msra.mxu0 0.0
    %2286 = vmatpush.xpose.msra.mxu0 0.0
    %2287 = vmatpush.xpose.msra.mxu0 0.0
    %2288 = vmatpush.xpose.msra.mxu0 0.0
    %2289 = vmatpush.xpose.msra.mxu0 0.0
    %2290 = vmatpush.xpose.msra.mxu0 0.0
    %2291 = vmatpush.xpose.msra.mxu0 0.0
    %2292 = vmatpush.xpose.msra.mxu0 0.0
    %2293 = vmatpush.xpose.msra.mxu0 0.0
    %2294 = vmatpush.xpose.msra.mxu0 0.0
    %2295 = vmatpush.xpose.msra.mxu0 0.0
    %2296 = vmatpush.xpose.msra.mxu0 %v2280
    %2297 = vmatpush.xpose.msra.mxu0 %v2278
    %2298 = vmatmul.f32.gmra.mxu0 %v2274
    %v2299 = vpop.f32.mrf.mxu0
    %v2300 = vadd.f32 %v300, %v2299
    %2301 = vmatmul.f32.gmra.mxu0 %v2276
    %v2302 = vpop.f32.mrf.mxu0
    %v2303 = vadd.f32 %v301, %v2302
    %2304 = vdwg.mxu0
    %2305 = vrot.lane.b32.xlu0 %v178, 96
    %v2306 = vpop.permute.xlu0 %2305
    %2307 = vrot.lane.b32.xlu0 %v181, 96
    %v2308 = vpop.permute.xlu0 %2307
    %2309 = vrot.lane.b32.xlu0 %v178, 32
    %v2310 = vpop.permute.xlu0 %2309
    %2311 = vrot.lane.b32.xlu0 %v181, 32
    %v2312 = vpop.permute.xlu0 %2311
    %v2313 = vsel %vm318, %v2306, 0
    %v2315 = vsel %vm318, %v2308, 0
    %v2317 = vsel %vm318, %v2310, 0
    %v2319 = vsel %vm318, %v2312, 0
    %2321 = vmatpush.xpose.msra.mxu0 0.0
    %2322 = vmatpush.xpose.msra.mxu0 0.0
    %2323 = vmatpush.xpose.msra.mxu0 0.0
    %2324 = vmatpush.xpose.msra.mxu0 0.0
    %2325 = vmatpush.xpose.msra.mxu0 0.0
    %2326 = vmatpush.xpose.msra.mxu0 0.0
    %2327 = vmatpush.xpose.msra.mxu0 0.0
    %2328 = vmatpush.xpose.msra.mxu0 0.0
    %2329 = vmatpush.xpose.msra.mxu0 0.0
    %2330 = vmatpush.xpose.msra.mxu0 0.0
    %2331 = vmatpush.xpose.msra.mxu0 0.0
    %2332 = vmatpush.xpose.msra.mxu0 0.0
    %2333 = vmatpush.xpose.msra.mxu0 0.0
    %2334 = vmatpush.xpose.msra.mxu0 0.0
    %2335 = vmatpush.xpose.msra.mxu0 %v2319
    %2336 = vmatpush.xpose.msra.mxu0 %v2317
    %2337 = vmatmul.f32.gmra.mxu0 %v2313
    %v2338 = vpop.f32.mrf.mxu0
    %v2339 = vadd.f32 %v308, %v2338
    %2340 = vmatmul.f32.gmra.mxu0 %v2315
    %v2341 = vpop.f32.mrf.mxu0
    %v2342 = vadd.f32 %v309, %v2341
    %2343 = vdwg.mxu0
    %v2344 = vsel %vm318, %v2066, -inf
    %2345 = vmax.xlane.f32.xlu0 %v2344
    %v2346 = vpop.xlane.xlu0 %2345
    %v2347 = vsel %vm318, %v2069, -inf
    %2348 = vmax.xlane.f32.xlu0 %v2347
    %v2349 = vpop.xlane.xlu0 %2348
    %v2350 = vsel %vm318, %v2105, -inf
    %2351 = vmax.xlane.f32.xlu0 %v2350
    %v2352 = vpop.xlane.xlu0 %2351
    %v2353 = vsel %vm318, %v2108, -inf
    %2354 = vmax.xlane.f32.xlu0 %v2353
    %v2355 = vpop.xlane.xlu0 %2354
    %v2356 = vsel %vm318, %v2144, -inf
    %2357 = vmax.xlane.f32.xlu0 %v2356
    %v2358 = vpop.xlane.xlu0 %2357
    %v2359 = vsel %vm318, %v2147, -inf
    %2360 = vmax.xlane.f32.xlu0 %v2359
    %v2361 = vpop.xlane.xlu0 %2360
    %v2362 = vsel %vm318, %v2183, -inf
    %2363 = vmax.xlane.f32.xlu0 %v2362
    %v2364 = vpop.xlane.xlu0 %2363
    %v2365 = vsel %vm318, %v2186, -inf
    %2366 = vmax.xlane.f32.xlu0 %v2365
    %v2367 = vpop.xlane.xlu0 %2366
    %v2368 = vsel %vm318, %v2222, -inf
    %2369 = vmax.xlane.f32.xlu0 %v2368
    %v2370 = vpop.xlane.xlu0 %2369
    %v2371 = vsel %vm318, %v2225, -inf
    %2372 = vmax.xlane.f32.xlu0 %v2371
    %v2373 = vpop.xlane.xlu0 %2372
    %v2374 = vsel %vm318, %v2261, -inf
    %2375 = vmax.xlane.f32.xlu0 %v2374
    %v2376 = vpop.xlane.xlu0 %2375
    %v2377 = vsel %vm318, %v2264, -inf
    %2378 = vmax.xlane.f32.xlu0 %v2377
    %v2379 = vpop.xlane.xlu0 %2378
    %v2380 = vsel %vm318, %v2300, -inf
    %2381 = vmax.xlane.f32.xlu0 %v2380
    %v2382 = vpop.xlane.xlu0 %2381
    %v2383 = vsel %vm318, %v2303, -inf
    %2384 = vmax.xlane.f32.xlu0 %v2383
    %v2385 = vpop.xlane.xlu0 %2384
    %v2386 = vsel %vm318, %v2339, -inf
    %2387 = vmax.xlane.f32.xlu0 %v2386
    %v2388 = vpop.xlane.xlu0 %2387
    %v2389 = vsel %vm318, %v2342, -inf
    %2390 = vmax.xlane.f32.xlu0 %v2389
    %v2391 = vpop.xlane.xlu0 %2390
    %v2392 = vsub.f32 %v2066, %v2346
    %v2393 = vsub.f32 %v2069, %v2349
    %v2394 = vsub.f32 %v2105, %v2352
    %v2395 = vsub.f32 %v2108, %v2355
    %v2396 = vsub.f32 %v2144, %v2358
    %v2397 = vsub.f32 %v2147, %v2361
    %v2398 = vsub.f32 %v2183, %v2364
    %v2399 = vsub.f32 %v2186, %v2367
    %v2400 = vsub.f32 %v2222, %v2370
    %v2401 = vsub.f32 %v2225, %v2373
    %v2402 = vsub.f32 %v2261, %v2376
    %v2403 = vsub.f32 %v2264, %v2379
    %v2404 = vsub.f32 %v2300, %v2382
    %v2405 = vsub.f32 %v2303, %v2385
    %v2406 = vsub.f32 %v2339, %v2388
    %v2407 = vsub.f32 %v2342, %v2391
    %v2408 = vmul.f32 %v2392, 1.442695
    %v2409 = vpow.pop %v2408
    %v2410 = vmul.f32 %v2393, 1.442695
    %v2411 = vpow.pop %v2410
    %v2412 = vmul.f32 %v2394, 1.442695
    %v2413 = vpow.pop %v2412
    %v2414 = vmul.f32 %v2395, 1.442695
    %v2415 = vpow.pop %v2414
    %v2416 = vmul.f32 %v2396, 1.442695
    %v2417 = vpow.pop %v2416
    %v2418 = vmul.f32 %v2397, 1.442695
    %v2419 = vpow.pop %v2418
    %v2420 = vmul.f32 %v2398, 1.442695
    %v2421 = vpow.pop %v2420
    %v2422 = vmul.f32 %v2399, 1.442695
    %v2423 = vpow.pop %v2422
    %v2424 = vmul.f32 %v2400, 1.442695
    %v2425 = vpow.pop %v2424
    %v2426 = vmul.f32 %v2401, 1.442695
    %v2427 = vpow.pop %v2426
    %v2428 = vmul.f32 %v2402, 1.442695
    %v2429 = vpow.pop %v2428
    %v2430 = vmul.f32 %v2403, 1.442695
    %v2431 = vpow.pop %v2430
    %v2432 = vmul.f32 %v2404, 1.442695
    %v2433 = vpow.pop %v2432
    %v2434 = vmul.f32 %v2405, 1.442695
    %v2435 = vpow.pop %v2434
    %v2436 = vmul.f32 %v2406, 1.442695
    %v2437 = vpow.pop %v2436
    %v2438 = vmul.f32 %v2407, 1.442695
    %v2439 = vpow.pop %v2438
    %v2440 = vsel %vm318, %v2409, 0.0
    %2441 = vadd.xlane.f32.xlu0 %v2440
    %v2442 = vpop.xlane.xlu0 %2441
    %v2443 = vsel %vm318, %v2411, 0.0
    %2444 = vadd.xlane.f32.xlu0 %v2443
    %v2445 = vpop.xlane.xlu0 %2444
    %v2446 = vsel %vm318, %v2413, 0.0
    %2447 = vadd.xlane.f32.xlu0 %v2446
    %v2448 = vpop.xlane.xlu0 %2447
    %v2449 = vsel %vm318, %v2415, 0.0
    %2450 = vadd.xlane.f32.xlu0 %v2449
    %v2451 = vpop.xlane.xlu0 %2450
    %v2452 = vsel %vm318, %v2417, 0.0
    %2453 = vadd.xlane.f32.xlu0 %v2452
    %v2454 = vpop.xlane.xlu0 %2453
    %v2455 = vsel %vm318, %v2419, 0.0
    %2456 = vadd.xlane.f32.xlu0 %v2455
    %v2457 = vpop.xlane.xlu0 %2456
    %v2458 = vsel %vm318, %v2421, 0.0
    %2459 = vadd.xlane.f32.xlu0 %v2458
    %v2460 = vpop.xlane.xlu0 %2459
    %v2461 = vsel %vm318, %v2423, 0.0
    %2462 = vadd.xlane.f32.xlu0 %v2461
    %v2463 = vpop.xlane.xlu0 %2462
    %v2464 = vsel %vm318, %v2425, 0.0
    %2465 = vadd.xlane.f32.xlu0 %v2464
    %v2466 = vpop.xlane.xlu0 %2465
    %v2467 = vsel %vm318, %v2427, 0.0
    %2468 = vadd.xlane.f32.xlu0 %v2467
    %v2469 = vpop.xlane.xlu0 %2468
    %v2470 = vsel %vm318, %v2429, 0.0
    %2471 = vadd.xlane.f32.xlu0 %v2470
    %v2472 = vpop.xlane.xlu0 %2471
    %v2473 = vsel %vm318, %v2431, 0.0
    %2474 = vadd.xlane.f32.xlu0 %v2473
    %v2475 = vpop.xlane.xlu0 %2474
    %v2476 = vsel %vm318, %v2433, 0.0
    %2477 = vadd.xlane.f32.xlu0 %v2476
    %v2478 = vpop.xlane.xlu0 %2477
    %v2479 = vsel %vm318, %v2435, 0.0
    %2480 = vadd.xlane.f32.xlu0 %v2479
    %v2481 = vpop.xlane.xlu0 %2480
    %v2482 = vsel %vm318, %v2437, 0.0
    %2483 = vadd.xlane.f32.xlu0 %v2482
    %v2484 = vpop.xlane.xlu0 %2483
    %v2485 = vsel %vm318, %v2439, 0.0
    %2486 = vadd.xlane.f32.xlu0 %v2485
    %v2487 = vpop.xlane.xlu0 %2486
    %v2488 = vrcp.pop %v2442
    %v2489 = vrcp.pop %v2445
    %v2490 = vrcp.pop %v2448
    %v2491 = vrcp.pop %v2451
    %v2492 = vrcp.pop %v2454
    %v2493 = vrcp.pop %v2457
    %v2494 = vrcp.pop %v2460
    %v2495 = vrcp.pop %v2463
    %v2496 = vrcp.pop %v2466
    %v2497 = vrcp.pop %v2469
    %v2498 = vrcp.pop %v2472
    %v2499 = vrcp.pop %v2475
    %v2500 = vrcp.pop %v2478
    %v2501 = vrcp.pop %v2481
    %v2502 = vrcp.pop %v2484
    %v2503 = vrcp.pop %v2487
    %v2504 = vmul.f32 %v2409, %v2488
    %v2505 = vmul.f32 %v2411, %v2489
    %v2506 = vmul.f32 %v2413, %v2490
    %v2507 = vmul.f32 %v2415, %v2491
    %v2508 = vmul.f32 %v2417, %v2492
    %v2509 = vmul.f32 %v2419, %v2493
    %v2510 = vmul.f32 %v2421, %v2494
    %v2511 = vmul.f32 %v2423, %v2495
    %v2512 = vmul.f32 %v2425, %v2496
    %v2513 = vmul.f32 %v2427, %v2497
    %v2514 = vmul.f32 %v2429, %v2498
    %v2515 = vmul.f32 %v2431, %v2499
    %v2516 = vmul.f32 %v2433, %v2500
    %v2517 = vmul.f32 %v2435, %v2501
    %v2518 = vmul.f32 %v2437, %v2502
    %v2519 = vmul.f32 %v2439, %v2503
    %2520 = vrot.lane.b32.xlu0 %v201, 96
    %v2521 = vpop.permute.xlu0 %2520
    %2522 = vrot.lane.b32.xlu0 %v204, 96
    %v2523 = vpop.permute.xlu0 %2522
    %v2527 = vsel %vm318, %v2504, 0
    %v2530 = vsel %vm318, %v2505, 0
    %2532 = vmatpush.msra.mxu0 0.0
    %2533 = vmatpush.msra.mxu0 0.0
    %2534 = vmatpush.msra.mxu0 0.0
    %2535 = vmatpush.msra.mxu0 0.0
    %2536 = vmatpush.msra.mxu0 0.0
    %2537 = vmatpush.msra.mxu0 0.0
    %2538 = vmatpush.msra.mxu0 0.0
    %2539 = vmatpush.msra.mxu0 0.0
    %2540 = vmatpush.msra.mxu0 0.0
    %2541 = vmatpush.msra.mxu0 0.0
    %2542 = vmatpush.msra.mxu0 0.0
    %2543 = vmatpush.msra.mxu0 0.0
    %2544 = vmatpush.msra.mxu0 0.0
    %2545 = vmatpush.msra.mxu0 0.0
    %2546 = vmatpush.msra.mxu0 %v2523
    %2547 = vmatpush.msra.mxu0 %v2521
    %2548 = vmatmul.f32.gmra.mxu0 %v2527
    %v2549 = vpop.f32.mrf.mxu0
    %v2550 = vadd.f32 0.0, %v2549
    %2551 = vmatmul.f32.gmra.mxu0 %v2530
    %v2552 = vpop.f32.mrf.mxu0
    %v2553 = vadd.f32 0.0, %v2552
    %2554 = vdwg.mxu0
    %2555 = vrot.lane.b32.xlu0 %v207, 96
    %v2556 = vpop.permute.xlu0 %2555
    %2557 = vrot.lane.b32.xlu0 %v210, 96
    %v2558 = vpop.permute.xlu0 %2557
    %v2562 = vsel %vm318, %v2506, 0
    %v2565 = vsel %vm318, %v2507, 0
    %2567 = vmatpush.msra.mxu0 0.0
    %2568 = vmatpush.msra.mxu0 0.0
    %2569 = vmatpush.msra.mxu0 0.0
    %2570 = vmatpush.msra.mxu0 0.0
    %2571 = vmatpush.msra.mxu0 0.0
    %2572 = vmatpush.msra.mxu0 0.0
    %2573 = vmatpush.msra.mxu0 0.0
    %2574 = vmatpush.msra.mxu0 0.0
    %2575 = vmatpush.msra.mxu0 0.0
    %2576 = vmatpush.msra.mxu0 0.0
    %2577 = vmatpush.msra.mxu0 0.0
    %2578 = vmatpush.msra.mxu0 0.0
    %2579 = vmatpush.msra.mxu0 0.0
    %2580 = vmatpush.msra.mxu0 0.0
    %2581 = vmatpush.msra.mxu0 %v2558
    %2582 = vmatpush.msra.mxu0 %v2556
    %2583 = vmatmul.f32.gmra.mxu0 %v2562
    %v2584 = vpop.f32.mrf.mxu0
    %v2585 = vadd.f32 0.0, %v2584
    %2586 = vmatmul.f32.gmra.mxu0 %v2565
    %v2587 = vpop.f32.mrf.mxu0
    %v2588 = vadd.f32 0.0, %v2587
    %2589 = vdwg.mxu0
    %2590 = vrot.lane.b32.xlu0 %v213, 96
    %v2591 = vpop.permute.xlu0 %2590
    %2592 = vrot.lane.b32.xlu0 %v216, 96
    %v2593 = vpop.permute.xlu0 %2592
    %v2597 = vsel %vm318, %v2508, 0
    %v2600 = vsel %vm318, %v2509, 0
    %2602 = vmatpush.msra.mxu0 0.0
    %2603 = vmatpush.msra.mxu0 0.0
    %2604 = vmatpush.msra.mxu0 0.0
    %2605 = vmatpush.msra.mxu0 0.0
    %2606 = vmatpush.msra.mxu0 0.0
    %2607 = vmatpush.msra.mxu0 0.0
    %2608 = vmatpush.msra.mxu0 0.0
    %2609 = vmatpush.msra.mxu0 0.0
    %2610 = vmatpush.msra.mxu0 0.0
    %2611 = vmatpush.msra.mxu0 0.0
    %2612 = vmatpush.msra.mxu0 0.0
    %2613 = vmatpush.msra.mxu0 0.0
    %2614 = vmatpush.msra.mxu0 0.0
    %2615 = vmatpush.msra.mxu0 0.0
    %2616 = vmatpush.msra.mxu0 %v2593
    %2617 = vmatpush.msra.mxu0 %v2591
    %2618 = vmatmul.f32.gmra.mxu0 %v2597
    %v2619 = vpop.f32.mrf.mxu0
    %v2620 = vadd.f32 0.0, %v2619
    %2621 = vmatmul.f32.gmra.mxu0 %v2600
    %v2622 = vpop.f32.mrf.mxu0
    %v2623 = vadd.f32 0.0, %v2622
    %2624 = vdwg.mxu0
    %2625 = vrot.lane.b32.xlu0 %v219, 96
    %v2626 = vpop.permute.xlu0 %2625
    %2627 = vrot.lane.b32.xlu0 %v222, 96
    %v2628 = vpop.permute.xlu0 %2627
    %v2632 = vsel %vm318, %v2510, 0
    %v2635 = vsel %vm318, %v2511, 0
    %2637 = vmatpush.msra.mxu0 0.0
    %2638 = vmatpush.msra.mxu0 0.0
    %2639 = vmatpush.msra.mxu0 0.0
    %2640 = vmatpush.msra.mxu0 0.0
    %2641 = vmatpush.msra.mxu0 0.0
    %2642 = vmatpush.msra.mxu0 0.0
    %2643 = vmatpush.msra.mxu0 0.0
    %2644 = vmatpush.msra.mxu0 0.0
    %2645 = vmatpush.msra.mxu0 0.0
    %2646 = vmatpush.msra.mxu0 0.0
    %2647 = vmatpush.msra.mxu0 0.0
    %2648 = vmatpush.msra.mxu0 0.0
    %2649 = vmatpush.msra.mxu0 0.0
    %2650 = vmatpush.msra.mxu0 0.0
    %2651 = vmatpush.msra.mxu0 %v2628
    %2652 = vmatpush.msra.mxu0 %v2626
    %2653 = vmatmul.f32.gmra.mxu0 %v2632
    %v2654 = vpop.f32.mrf.mxu0
    %v2655 = vadd.f32 0.0, %v2654
    %2656 = vmatmul.f32.gmra.mxu0 %v2635
    %v2657 = vpop.f32.mrf.mxu0
    %v2658 = vadd.f32 0.0, %v2657
    %2659 = vdwg.mxu0
    %2660 = vrot.lane.b32.xlu0 %v225, 96
    %v2661 = vpop.permute.xlu0 %2660
    %2662 = vrot.lane.b32.xlu0 %v228, 96
    %v2663 = vpop.permute.xlu0 %2662
    %v2667 = vsel %vm318, %v2512, 0
    %v2670 = vsel %vm318, %v2513, 0
    %2672 = vmatpush.msra.mxu0 0.0
    %2673 = vmatpush.msra.mxu0 0.0
    %2674 = vmatpush.msra.mxu0 0.0
    %2675 = vmatpush.msra.mxu0 0.0
    %2676 = vmatpush.msra.mxu0 0.0
    %2677 = vmatpush.msra.mxu0 0.0
    %2678 = vmatpush.msra.mxu0 0.0
    %2679 = vmatpush.msra.mxu0 0.0
    %2680 = vmatpush.msra.mxu0 0.0
    %2681 = vmatpush.msra.mxu0 0.0
    %2682 = vmatpush.msra.mxu0 0.0
    %2683 = vmatpush.msra.mxu0 0.0
    %2684 = vmatpush.msra.mxu0 0.0
    %2685 = vmatpush.msra.mxu0 0.0
    %2686 = vmatpush.msra.mxu0 %v2663
    %2687 = vmatpush.msra.mxu0 %v2661
    %2688 = vmatmul.f32.gmra.mxu0 %v2667
    %v2689 = vpop.f32.mrf.mxu0
    %v2690 = vadd.f32 0.0, %v2689
    %2691 = vmatmul.f32.gmra.mxu0 %v2670
    %v2692 = vpop.f32.mrf.mxu0
    %v2693 = vadd.f32 0.0, %v2692
    %2694 = vdwg.mxu0
    %2695 = vrot.lane.b32.xlu0 %v231, 96
    %v2696 = vpop.permute.xlu0 %2695
    %2697 = vrot.lane.b32.xlu0 %v234, 96
    %v2698 = vpop.permute.xlu0 %2697
    %v2702 = vsel %vm318, %v2514, 0
    %v2705 = vsel %vm318, %v2515, 0
    %2707 = vmatpush.msra.mxu0 0.0
    %2708 = vmatpush.msra.mxu0 0.0
    %2709 = vmatpush.msra.mxu0 0.0
    %2710 = vmatpush.msra.mxu0 0.0
    %2711 = vmatpush.msra.mxu0 0.0
    %2712 = vmatpush.msra.mxu0 0.0
    %2713 = vmatpush.msra.mxu0 0.0
    %2714 = vmatpush.msra.mxu0 0.0
    %2715 = vmatpush.msra.mxu0 0.0
    %2716 = vmatpush.msra.mxu0 0.0
    %2717 = vmatpush.msra.mxu0 0.0
    %2718 = vmatpush.msra.mxu0 0.0
    %2719 = vmatpush.msra.mxu0 0.0
    %2720 = vmatpush.msra.mxu0 0.0
    %2721 = vmatpush.msra.mxu0 %v2698
    %2722 = vmatpush.msra.mxu0 %v2696
    %2723 = vmatmul.f32.gmra.mxu0 %v2702
    %v2724 = vpop.f32.mrf.mxu0
    %v2725 = vadd.f32 0.0, %v2724
    %2726 = vmatmul.f32.gmra.mxu0 %v2705
    %v2727 = vpop.f32.mrf.mxu0
    %v2728 = vadd.f32 0.0, %v2727
    %2729 = vdwg.mxu0
    %2730 = vrot.lane.b32.xlu0 %v237, 96
    %v2731 = vpop.permute.xlu0 %2730
    %2732 = vrot.lane.b32.xlu0 %v240, 96
    %v2733 = vpop.permute.xlu0 %2732
    %v2737 = vsel %vm318, %v2516, 0
    %v2740 = vsel %vm318, %v2517, 0
    %2742 = vmatpush.msra.mxu0 0.0
    %2743 = vmatpush.msra.mxu0 0.0
    %2744 = vmatpush.msra.mxu0 0.0
    %2745 = vmatpush.msra.mxu0 0.0
    %2746 = vmatpush.msra.mxu0 0.0
    %2747 = vmatpush.msra.mxu0 0.0
    %2748 = vmatpush.msra.mxu0 0.0
    %2749 = vmatpush.msra.mxu0 0.0
    %2750 = vmatpush.msra.mxu0 0.0
    %2751 = vmatpush.msra.mxu0 0.0
    %2752 = vmatpush.msra.mxu0 0.0
    %2753 = vmatpush.msra.mxu0 0.0
    %2754 = vmatpush.msra.mxu0 0.0
    %2755 = vmatpush.msra.mxu0 0.0
    %2756 = vmatpush.msra.mxu0 %v2733
    %2757 = vmatpush.msra.mxu0 %v2731
    %2758 = vmatmul.f32.gmra.mxu0 %v2737
    %v2759 = vpop.f32.mrf.mxu0
    %v2760 = vadd.f32 0.0, %v2759
    %2761 = vmatmul.f32.gmra.mxu0 %v2740
    %v2762 = vpop.f32.mrf.mxu0
    %v2763 = vadd.f32 0.0, %v2762
    %2764 = vdwg.mxu0
    %2765 = vrot.lane.b32.xlu0 %v243, 96
    %v2766 = vpop.permute.xlu0 %2765
    %2767 = vrot.lane.b32.xlu0 %v246, 96
    %v2768 = vpop.permute.xlu0 %2767
    %v2772 = vsel %vm318, %v2518, 0
    %v2775 = vsel %vm318, %v2519, 0
    %2777 = vmatpush.msra.mxu0 0.0
    %2778 = vmatpush.msra.mxu0 0.0
    %2779 = vmatpush.msra.mxu0 0.0
    %2780 = vmatpush.msra.mxu0 0.0
    %2781 = vmatpush.msra.mxu0 0.0
    %2782 = vmatpush.msra.mxu0 0.0
    %2783 = vmatpush.msra.mxu0 0.0
    %2784 = vmatpush.msra.mxu0 0.0
    %2785 = vmatpush.msra.mxu0 0.0
    %2786 = vmatpush.msra.mxu0 0.0
    %2787 = vmatpush.msra.mxu0 0.0
    %2788 = vmatpush.msra.mxu0 0.0
    %2789 = vmatpush.msra.mxu0 0.0
    %2790 = vmatpush.msra.mxu0 0.0
    %2791 = vmatpush.msra.mxu0 %v2768
    %2792 = vmatpush.msra.mxu0 %v2766
    %2793 = vmatmul.f32.gmra.mxu0 %v2772
    %v2794 = vpop.f32.mrf.mxu0
    %v2795 = vadd.f32 0.0, %v2794
    %2796 = vmatmul.f32.gmra.mxu0 %v2775
    %v2797 = vpop.f32.mrf.mxu0
    %v2798 = vadd.f32 0.0, %v2797
    %2799 = vdwg.mxu0
    %s2800 = scalar_lea.vmem %s3, 32
    %v2801 = vld [vmem:[%s2800] sm:$0xff]
    %v2802 = vld [vmem:[%s2800 + $0x8] sm:$0xff]
    %v2804 = vsel %vm318, %v2550, 0
    %v2807 = vsel %vm318, %v2553, 0
    %v2810 = vsel %vm318, %v2585, 0
    %v2813 = vsel %vm318, %v2588, 0
    %v2816 = vsel %vm318, %v2620, 0
    %v2819 = vsel %vm318, %v2623, 0
    %v2822 = vsel %vm318, %v2655, 0
    %v2825 = vsel %vm318, %v2658, 0
    %v2828 = vsel %vm318, %v2690, 0
    %v2831 = vsel %vm318, %v2693, 0
    %v2834 = vsel %vm318, %v2725, 0
    %v2837 = vsel %vm318, %v2728, 0
    %v2840 = vsel %vm318, %v2760, 0
    %v2843 = vsel %vm318, %v2763, 0
    %v2846 = vsel %vm318, %v2795, 0
    %v2849 = vsel %vm318, %v2798, 0
    %2851 = vmatpush.msra.mxu0 0.0
    %2852 = vmatpush.msra.mxu0 0.0
    %2853 = vmatpush.msra.mxu0 0.0
    %2854 = vmatpush.msra.mxu0 0.0
    %2855 = vmatpush.msra.mxu0 0.0
    %2856 = vmatpush.msra.mxu0 0.0
    %2857 = vmatpush.msra.mxu0 0.0
    %2858 = vmatpush.msra.mxu0 0.0
    %2859 = vmatpush.msra.mxu0 0.0
    %2860 = vmatpush.msra.mxu0 0.0
    %2861 = vmatpush.msra.mxu0 0.0
    %2862 = vmatpush.msra.mxu0 0.0
    %2863 = vmatpush.msra.mxu0 0.0
    %2864 = vmatpush.msra.mxu0 0.0
    %2865 = vmatpush.msra.mxu0 %v2802
    %2866 = vmatpush.msra.mxu0 %v2801
    %2867 = vmatmul.f32.gmra.mxu0 %v2804
    %v2868 = vpop.f32.mrf.mxu0
    %v2869 = vadd.f32 0.0, %v2868
    %2870 = vmatmul.f32.gmra.mxu0 %v2807
    %v2871 = vpop.f32.mrf.mxu0
    %v2872 = vadd.f32 0.0, %v2871
    %2873 = vmatmul.f32.gmra.mxu0 %v2810
    %v2874 = vpop.f32.mrf.mxu0
    %v2875 = vadd.f32 0.0, %v2874
    %2876 = vmatmul.f32.gmra.mxu0 %v2813
    %v2877 = vpop.f32.mrf.mxu0
    %v2878 = vadd.f32 0.0, %v2877
    %2879 = vmatmul.f32.gmra.mxu0 %v2816
    %v2880 = vpop.f32.mrf.mxu0
    %v2881 = vadd.f32 0.0, %v2880
    %2882 = vmatmul.f32.gmra.mxu0 %v2819
    %v2883 = vpop.f32.mrf.mxu0
    %v2884 = vadd.f32 0.0, %v2883
    %2885 = vmatmul.f32.gmra.mxu0 %v2822
    %v2886 = vpop.f32.mrf.mxu0
    %v2887 = vadd.f32 0.0, %v2886
    %2888 = vmatmul.f32.gmra.mxu0 %v2825
    %v2889 = vpop.f32.mrf.mxu0
    %v2890 = vadd.f32 0.0, %v2889
    %2891 = vmatmul.f32.gmra.mxu0 %v2828
    %v2892 = vpop.f32.mrf.mxu0
    %v2893 = vadd.f32 0.0, %v2892
    %2894 = vmatmul.f32.gmra.mxu0 %v2831
    %v2895 = vpop.f32.mrf.mxu0
    %v2896 = vadd.f32 0.0, %v2895
    %2897 = vmatmul.f32.gmra.mxu0 %v2834
    %v2898 = vpop.f32.mrf.mxu0
    %v2899 = vadd.f32 0.0, %v2898
    %2900 = vmatmul.f32.gmra.mxu0 %v2837
    %v2901 = vpop.f32.mrf.mxu0
    %v2902 = vadd.f32 0.0, %v2901
    %2903 = vmatmul.f32.gmra.mxu0 %v2840
    %v2904 = vpop.f32.mrf.mxu0
    %v2905 = vadd.f32 0.0, %v2904
    %2906 = vmatmul.f32.gmra.mxu0 %v2843
    %v2907 = vpop.f32.mrf.mxu0
    %v2908 = vadd.f32 0.0, %v2907
    %2909 = vmatmul.f32.gmra.mxu0 %v2846
    %v2910 = vpop.f32.mrf.mxu0
    %v2911 = vadd.f32 0.0, %v2910
    %2912 = vmatmul.f32.gmra.mxu0 %v2849
    %v2913 = vpop.f32.mrf.mxu0
    %v2914 = vadd.f32 0.0, %v2913
    %2915 = vdwg.mxu0
    %v2916 = vadd.f32 %v1985, %v2869
    %v2917 = vadd.f32 %v1988, %v2872
    %v2918 = vadd.f32 %v1991, %v2875
    %v2919 = vadd.f32 %v1994, %v2878
    %v2920 = vadd.f32 %v1997, %v2881
    %v2921 = vadd.f32 %v2000, %v2884
    %v2922 = vadd.f32 %v2003, %v2887
    %v2923 = vadd.f32 %v2006, %v2890
    %v2924 = vadd.f32 %v2009, %v2893
    %v2925 = vadd.f32 %v2012, %v2896
    %v2926 = vadd.f32 %v2015, %v2899
    %v2927 = vadd.f32 %v2018, %v2902
    %v2928 = vadd.f32 %v2021, %v2905
    %v2929 = vadd.f32 %v2024, %v2908
    %v2930 = vadd.f32 %v2027, %v2911
    %v2931 = vadd.f32 %v2030, %v2914
    %2932 = vrot.lane.b32.xlu0 %v136, 80
    %v2933 = vpop.permute.xlu0 %2932
    %2934 = vrot.lane.b32.xlu0 %v139, 80
    %v2935 = vpop.permute.xlu0 %2934
    %2936 = vrot.lane.b32.xlu0 %v136, 16
    %v2937 = vpop.permute.xlu0 %2936
    %2938 = vrot.lane.b32.xlu0 %v139, 16
    %v2939 = vpop.permute.xlu0 %2938
    %v2940 = vsel %vm318, %v2933, 0
    %v2942 = vsel %vm318, %v2935, 0
    %v2944 = vsel %vm318, %v2937, 0
    %v2946 = vsel %vm318, %v2939, 0
    %2948 = vmatpush.xpose.msra.mxu0 0.0
    %2949 = vmatpush.xpose.msra.mxu0 0.0
    %2950 = vmatpush.xpose.msra.mxu0 0.0
    %2951 = vmatpush.xpose.msra.mxu0 0.0
    %2952 = vmatpush.xpose.msra.mxu0 0.0
    %2953 = vmatpush.xpose.msra.mxu0 0.0
    %2954 = vmatpush.xpose.msra.mxu0 0.0
    %2955 = vmatpush.xpose.msra.mxu0 0.0
    %2956 = vmatpush.xpose.msra.mxu0 0.0
    %2957 = vmatpush.xpose.msra.mxu0 0.0
    %2958 = vmatpush.xpose.msra.mxu0 0.0
    %2959 = vmatpush.xpose.msra.mxu0 0.0
    %2960 = vmatpush.xpose.msra.mxu0 0.0
    %2961 = vmatpush.xpose.msra.mxu0 0.0
    %2962 = vmatpush.xpose.msra.mxu0 %v2946
    %2963 = vmatpush.xpose.msra.mxu0 %v2944
    %2964 = vmatmul.f32.gmra.mxu0 %v2940
    %v2965 = vpop.f32.mrf.mxu0
    %v2966 = vadd.f32 %v254, %v2965
    %2967 = vmatmul.f32.gmra.mxu0 %v2942
    %v2968 = vpop.f32.mrf.mxu0
    %v2969 = vadd.f32 %v255, %v2968
    %2970 = vdwg.mxu0
    %2971 = vrot.lane.b32.xlu0 %v142, 80
    %v2972 = vpop.permute.xlu0 %2971
    %2973 = vrot.lane.b32.xlu0 %v145, 80
    %v2974 = vpop.permute.xlu0 %2973
    %2975 = vrot.lane.b32.xlu0 %v142, 16
    %v2976 = vpop.permute.xlu0 %2975
    %2977 = vrot.lane.b32.xlu0 %v145, 16
    %v2978 = vpop.permute.xlu0 %2977
    %v2979 = vsel %vm318, %v2972, 0
    %v2981 = vsel %vm318, %v2974, 0
    %v2983 = vsel %vm318, %v2976, 0
    %v2985 = vsel %vm318, %v2978, 0
    %2987 = vmatpush.xpose.msra.mxu0 0.0
    %2988 = vmatpush.xpose.msra.mxu0 0.0
    %2989 = vmatpush.xpose.msra.mxu0 0.0
    %2990 = vmatpush.xpose.msra.mxu0 0.0
    %2991 = vmatpush.xpose.msra.mxu0 0.0
    %2992 = vmatpush.xpose.msra.mxu0 0.0
    %2993 = vmatpush.xpose.msra.mxu0 0.0
    %2994 = vmatpush.xpose.msra.mxu0 0.0
    %2995 = vmatpush.xpose.msra.mxu0 0.0
    %2996 = vmatpush.xpose.msra.mxu0 0.0
    %2997 = vmatpush.xpose.msra.mxu0 0.0
    %2998 = vmatpush.xpose.msra.mxu0 0.0
    %2999 = vmatpush.xpose.msra.mxu0 0.0
    %3000 = vmatpush.xpose.msra.mxu0 0.0
    %3001 = vmatpush.xpose.msra.mxu0 %v2985
    %3002 = vmatpush.xpose.msra.mxu0 %v2983
    %3003 = vmatmul.f32.gmra.mxu0 %v2979
    %v3004 = vpop.f32.mrf.mxu0
    %v3005 = vadd.f32 %v262, %v3004
    %3006 = vmatmul.f32.gmra.mxu0 %v2981
    %v3007 = vpop.f32.mrf.mxu0
    %v3008 = vadd.f32 %v263, %v3007
    %3009 = vdwg.mxu0
    %3010 = vrot.lane.b32.xlu0 %v148, 80
    %v3011 = vpop.permute.xlu0 %3010
    %3012 = vrot.lane.b32.xlu0 %v151, 80
    %v3013 = vpop.permute.xlu0 %3012
    %3014 = vrot.lane.b32.xlu0 %v148, 16
    %v3015 = vpop.permute.xlu0 %3014
    %3016 = vrot.lane.b32.xlu0 %v151, 16
    %v3017 = vpop.permute.xlu0 %3016
    %v3018 = vsel %vm318, %v3011, 0
    %v3020 = vsel %vm318, %v3013, 0
    %v3022 = vsel %vm318, %v3015, 0
    %v3024 = vsel %vm318, %v3017, 0
    %3026 = vmatpush.xpose.msra.mxu0 0.0
    %3027 = vmatpush.xpose.msra.mxu0 0.0
    %3028 = vmatpush.xpose.msra.mxu0 0.0
    %3029 = vmatpush.xpose.msra.mxu0 0.0
    %3030 = vmatpush.xpose.msra.mxu0 0.0
    %3031 = vmatpush.xpose.msra.mxu0 0.0
    %3032 = vmatpush.xpose.msra.mxu0 0.0
    %3033 = vmatpush.xpose.msra.mxu0 0.0
    %3034 = vmatpush.xpose.msra.mxu0 0.0
    %3035 = vmatpush.xpose.msra.mxu0 0.0
    %3036 = vmatpush.xpose.msra.mxu0 0.0
    %3037 = vmatpush.xpose.msra.mxu0 0.0
    %3038 = vmatpush.xpose.msra.mxu0 0.0
    %3039 = vmatpush.xpose.msra.mxu0 0.0
    %3040 = vmatpush.xpose.msra.mxu0 %v3024
    %3041 = vmatpush.xpose.msra.mxu0 %v3022
    %3042 = vmatmul.f32.gmra.mxu0 %v3018
    %v3043 = vpop.f32.mrf.mxu0
    %v3044 = vadd.f32 %v270, %v3043
    %3045 = vmatmul.f32.gmra.mxu0 %v3020
    %v3046 = vpop.f32.mrf.mxu0
    %v3047 = vadd.f32 %v271, %v3046
    %3048 = vdwg.mxu0
    %3049 = vrot.lane.b32.xlu0 %v154, 80
    %v3050 = vpop.permute.xlu0 %3049
    %3051 = vrot.lane.b32.xlu0 %v157, 80
    %v3052 = vpop.permute.xlu0 %3051
    %3053 = vrot.lane.b32.xlu0 %v154, 16
    %v3054 = vpop.permute.xlu0 %3053
    %3055 = vrot.lane.b32.xlu0 %v157, 16
    %v3056 = vpop.permute.xlu0 %3055
    %v3057 = vsel %vm318, %v3050, 0
    %v3059 = vsel %vm318, %v3052, 0
    %v3061 = vsel %vm318, %v3054, 0
    %v3063 = vsel %vm318, %v3056, 0
    %3065 = vmatpush.xpose.msra.mxu0 0.0
    %3066 = vmatpush.xpose.msra.mxu0 0.0
    %3067 = vmatpush.xpose.msra.mxu0 0.0
    %3068 = vmatpush.xpose.msra.mxu0 0.0
    %3069 = vmatpush.xpose.msra.mxu0 0.0
    %3070 = vmatpush.xpose.msra.mxu0 0.0
    %3071 = vmatpush.xpose.msra.mxu0 0.0
    %3072 = vmatpush.xpose.msra.mxu0 0.0
    %3073 = vmatpush.xpose.msra.mxu0 0.0
    %3074 = vmatpush.xpose.msra.mxu0 0.0
    %3075 = vmatpush.xpose.msra.mxu0 0.0
    %3076 = vmatpush.xpose.msra.mxu0 0.0
    %3077 = vmatpush.xpose.msra.mxu0 0.0
    %3078 = vmatpush.xpose.msra.mxu0 0.0
    %3079 = vmatpush.xpose.msra.mxu0 %v3063
    %3080 = vmatpush.xpose.msra.mxu0 %v3061
    %3081 = vmatmul.f32.gmra.mxu0 %v3057
    %v3082 = vpop.f32.mrf.mxu0
    %v3083 = vadd.f32 %v278, %v3082
    %3084 = vmatmul.f32.gmra.mxu0 %v3059
    %v3085 = vpop.f32.mrf.mxu0
    %v3086 = vadd.f32 %v279, %v3085
    %3087 = vdwg.mxu0
    %3088 = vrot.lane.b32.xlu0 %v160, 80
    %v3089 = vpop.permute.xlu0 %3088
    %3090 = vrot.lane.b32.xlu0 %v163, 80
    %v3091 = vpop.permute.xlu0 %3090
    %3092 = vrot.lane.b32.xlu0 %v160, 16
    %v3093 = vpop.permute.xlu0 %3092
    %3094 = vrot.lane.b32.xlu0 %v163, 16
    %v3095 = vpop.permute.xlu0 %3094
    %v3096 = vsel %vm318, %v3089, 0
    %v3098 = vsel %vm318, %v3091, 0
    %v3100 = vsel %vm318, %v3093, 0
    %v3102 = vsel %vm318, %v3095, 0
    %3104 = vmatpush.xpose.msra.mxu0 0.0
    %3105 = vmatpush.xpose.msra.mxu0 0.0
    %3106 = vmatpush.xpose.msra.mxu0 0.0
    %3107 = vmatpush.xpose.msra.mxu0 0.0
    %3108 = vmatpush.xpose.msra.mxu0 0.0
    %3109 = vmatpush.xpose.msra.mxu0 0.0
    %3110 = vmatpush.xpose.msra.mxu0 0.0
    %3111 = vmatpush.xpose.msra.mxu0 0.0
    %3112 = vmatpush.xpose.msra.mxu0 0.0
    %3113 = vmatpush.xpose.msra.mxu0 0.0
    %3114 = vmatpush.xpose.msra.mxu0 0.0
    %3115 = vmatpush.xpose.msra.mxu0 0.0
    %3116 = vmatpush.xpose.msra.mxu0 0.0
    %3117 = vmatpush.xpose.msra.mxu0 0.0
    %3118 = vmatpush.xpose.msra.mxu0 %v3102
    %3119 = vmatpush.xpose.msra.mxu0 %v3100
    %3120 = vmatmul.f32.gmra.mxu0 %v3096
    %v3121 = vpop.f32.mrf.mxu0
    %v3122 = vadd.f32 %v286, %v3121
    %3123 = vmatmul.f32.gmra.mxu0 %v3098
    %v3124 = vpop.f32.mrf.mxu0
    %v3125 = vadd.f32 %v287, %v3124
    %3126 = vdwg.mxu0
    %3127 = vrot.lane.b32.xlu0 %v166, 80
    %v3128 = vpop.permute.xlu0 %3127
    %3129 = vrot.lane.b32.xlu0 %v169, 80
    %v3130 = vpop.permute.xlu0 %3129
    %3131 = vrot.lane.b32.xlu0 %v166, 16
    %v3132 = vpop.permute.xlu0 %3131
    %3133 = vrot.lane.b32.xlu0 %v169, 16
    %v3134 = vpop.permute.xlu0 %3133
    %v3135 = vsel %vm318, %v3128, 0
    %v3137 = vsel %vm318, %v3130, 0
    %v3139 = vsel %vm318, %v3132, 0
    %v3141 = vsel %vm318, %v3134, 0
    %3143 = vmatpush.xpose.msra.mxu0 0.0
    %3144 = vmatpush.xpose.msra.mxu0 0.0
    %3145 = vmatpush.xpose.msra.mxu0 0.0
    %3146 = vmatpush.xpose.msra.mxu0 0.0
    %3147 = vmatpush.xpose.msra.mxu0 0.0
    %3148 = vmatpush.xpose.msra.mxu0 0.0
    %3149 = vmatpush.xpose.msra.mxu0 0.0
    %3150 = vmatpush.xpose.msra.mxu0 0.0
    %3151 = vmatpush.xpose.msra.mxu0 0.0
    %3152 = vmatpush.xpose.msra.mxu0 0.0
    %3153 = vmatpush.xpose.msra.mxu0 0.0
    %3154 = vmatpush.xpose.msra.mxu0 0.0
    %3155 = vmatpush.xpose.msra.mxu0 0.0
    %3156 = vmatpush.xpose.msra.mxu0 0.0
    %3157 = vmatpush.xpose.msra.mxu0 %v3141
    %3158 = vmatpush.xpose.msra.mxu0 %v3139
    %3159 = vmatmul.f32.gmra.mxu0 %v3135
    %v3160 = vpop.f32.mrf.mxu0
    %v3161 = vadd.f32 %v294, %v3160
    %3162 = vmatmul.f32.gmra.mxu0 %v3137
    %v3163 = vpop.f32.mrf.mxu0
    %v3164 = vadd.f32 %v295, %v3163
    %3165 = vdwg.mxu0
    %3166 = vrot.lane.b32.xlu0 %v172, 80
    %v3167 = vpop.permute.xlu0 %3166
    %3168 = vrot.lane.b32.xlu0 %v175, 80
    %v3169 = vpop.permute.xlu0 %3168
    %3170 = vrot.lane.b32.xlu0 %v172, 16
    %v3171 = vpop.permute.xlu0 %3170
    %3172 = vrot.lane.b32.xlu0 %v175, 16
    %v3173 = vpop.permute.xlu0 %3172
    %v3174 = vsel %vm318, %v3167, 0
    %v3176 = vsel %vm318, %v3169, 0
    %v3178 = vsel %vm318, %v3171, 0
    %v3180 = vsel %vm318, %v3173, 0
    %3182 = vmatpush.xpose.msra.mxu0 0.0
    %3183 = vmatpush.xpose.msra.mxu0 0.0
    %3184 = vmatpush.xpose.msra.mxu0 0.0
    %3185 = vmatpush.xpose.msra.mxu0 0.0
    %3186 = vmatpush.xpose.msra.mxu0 0.0
    %3187 = vmatpush.xpose.msra.mxu0 0.0
    %3188 = vmatpush.xpose.msra.mxu0 0.0
    %3189 = vmatpush.xpose.msra.mxu0 0.0
    %3190 = vmatpush.xpose.msra.mxu0 0.0
    %3191 = vmatpush.xpose.msra.mxu0 0.0
    %3192 = vmatpush.xpose.msra.mxu0 0.0
    %3193 = vmatpush.xpose.msra.mxu0 0.0
    %3194 = vmatpush.xpose.msra.mxu0 0.0
    %3195 = vmatpush.xpose.msra.mxu0 0.0
    %3196 = vmatpush.xpose.msra.mxu0 %v3180
    %3197 = vmatpush.xpose.msra.mxu0 %v3178
    %3198 = vmatmul.f32.gmra.mxu0 %v3174
    %v3199 = vpop.f32.mrf.mxu0
    %v3200 = vadd.f32 %v302, %v3199
    %3201 = vmatmul.f32.gmra.mxu0 %v3176
    %v3202 = vpop.f32.mrf.mxu0
    %v3203 = vadd.f32 %v303, %v3202
    %3204 = vdwg.mxu0
    %3205 = vrot.lane.b32.xlu0 %v178, 80
    %v3206 = vpop.permute.xlu0 %3205
    %3207 = vrot.lane.b32.xlu0 %v181, 80
    %v3208 = vpop.permute.xlu0 %3207
    %3209 = vrot.lane.b32.xlu0 %v178, 16
    %v3210 = vpop.permute.xlu0 %3209
    %3211 = vrot.lane.b32.xlu0 %v181, 16
    %v3212 = vpop.permute.xlu0 %3211
    %v3213 = vsel %vm318, %v3206, 0
    %v3215 = vsel %vm318, %v3208, 0
    %v3217 = vsel %vm318, %v3210, 0
    %v3219 = vsel %vm318, %v3212, 0
    %3221 = vmatpush.xpose.msra.mxu0 0.0
    %3222 = vmatpush.xpose.msra.mxu0 0.0
    %3223 = vmatpush.xpose.msra.mxu0 0.0
    %3224 = vmatpush.xpose.msra.mxu0 0.0
    %3225 = vmatpush.xpose.msra.mxu0 0.0
    %3226 = vmatpush.xpose.msra.mxu0 0.0
    %3227 = vmatpush.xpose.msra.mxu0 0.0
    %3228 = vmatpush.xpose.msra.mxu0 0.0
    %3229 = vmatpush.xpose.msra.mxu0 0.0
    %3230 = vmatpush.xpose.msra.mxu0 0.0
    %3231 = vmatpush.xpose.msra.mxu0 0.0
    %3232 = vmatpush.xpose.msra.mxu0 0.0
    %3233 = vmatpush.xpose.msra.mxu0 0.0
    %3234 = vmatpush.xpose.msra.mxu0 0.0
    %3235 = vmatpush.xpose.msra.mxu0 %v3219
    %3236 = vmatpush.xpose.msra.mxu0 %v3217
    %3237 = vmatmul.f32.gmra.mxu0 %v3213
    %v3238 = vpop.f32.mrf.mxu0
    %v3239 = vadd.f32 %v310, %v3238
    %3240 = vmatmul.f32.gmra.mxu0 %v3215
    %v3241 = vpop.f32.mrf.mxu0
    %v3242 = vadd.f32 %v311, %v3241
    %3243 = vdwg.mxu0
    %v3244 = vsel %vm318, %v2966, -inf
    %3245 = vmax.xlane.f32.xlu0 %v3244
    %v3246 = vpop.xlane.xlu0 %3245
    %v3247 = vsel %vm318, %v2969, -inf
    %3248 = vmax.xlane.f32.xlu0 %v3247
    %v3249 = vpop.xlane.xlu0 %3248
    %v3250 = vsel %vm318, %v3005, -inf
    %3251 = vmax.xlane.f32.xlu0 %v3250
    %v3252 = vpop.xlane.xlu0 %3251
    %v3253 = vsel %vm318, %v3008, -inf
    %3254 = vmax.xlane.f32.xlu0 %v3253
    %v3255 = vpop.xlane.xlu0 %3254
    %v3256 = vsel %vm318, %v3044, -inf
    %3257 = vmax.xlane.f32.xlu0 %v3256
    %v3258 = vpop.xlane.xlu0 %3257
    %v3259 = vsel %vm318, %v3047, -inf
    %3260 = vmax.xlane.f32.xlu0 %v3259
    %v3261 = vpop.xlane.xlu0 %3260
    %v3262 = vsel %vm318, %v3083, -inf
    %3263 = vmax.xlane.f32.xlu0 %v3262
    %v3264 = vpop.xlane.xlu0 %3263
    %v3265 = vsel %vm318, %v3086, -inf
    %3266 = vmax.xlane.f32.xlu0 %v3265
    %v3267 = vpop.xlane.xlu0 %3266
    %v3268 = vsel %vm318, %v3122, -inf
    %3269 = vmax.xlane.f32.xlu0 %v3268
    %v3270 = vpop.xlane.xlu0 %3269
    %v3271 = vsel %vm318, %v3125, -inf
    %3272 = vmax.xlane.f32.xlu0 %v3271
    %v3273 = vpop.xlane.xlu0 %3272
    %v3274 = vsel %vm318, %v3161, -inf
    %3275 = vmax.xlane.f32.xlu0 %v3274
    %v3276 = vpop.xlane.xlu0 %3275
    %v3277 = vsel %vm318, %v3164, -inf
    %3278 = vmax.xlane.f32.xlu0 %v3277
    %v3279 = vpop.xlane.xlu0 %3278
    %v3280 = vsel %vm318, %v3200, -inf
    %3281 = vmax.xlane.f32.xlu0 %v3280
    %v3282 = vpop.xlane.xlu0 %3281
    %v3283 = vsel %vm318, %v3203, -inf
    %3284 = vmax.xlane.f32.xlu0 %v3283
    %v3285 = vpop.xlane.xlu0 %3284
    %v3286 = vsel %vm318, %v3239, -inf
    %3287 = vmax.xlane.f32.xlu0 %v3286
    %v3288 = vpop.xlane.xlu0 %3287
    %v3289 = vsel %vm318, %v3242, -inf
    %3290 = vmax.xlane.f32.xlu0 %v3289
    %v3291 = vpop.xlane.xlu0 %3290
    %v3292 = vsub.f32 %v2966, %v3246
    %v3293 = vsub.f32 %v2969, %v3249
    %v3294 = vsub.f32 %v3005, %v3252
    %v3295 = vsub.f32 %v3008, %v3255
    %v3296 = vsub.f32 %v3044, %v3258
    %v3297 = vsub.f32 %v3047, %v3261
    %v3298 = vsub.f32 %v3083, %v3264
    %v3299 = vsub.f32 %v3086, %v3267
    %v3300 = vsub.f32 %v3122, %v3270
    %v3301 = vsub.f32 %v3125, %v3273
    %v3302 = vsub.f32 %v3161, %v3276
    %v3303 = vsub.f32 %v3164, %v3279
    %v3304 = vsub.f32 %v3200, %v3282
    %v3305 = vsub.f32 %v3203, %v3285
    %v3306 = vsub.f32 %v3239, %v3288
    %v3307 = vsub.f32 %v3242, %v3291
    %v3308 = vmul.f32 %v3292, 1.442695
    %v3309 = vpow.pop %v3308
    %v3310 = vmul.f32 %v3293, 1.442695
    %v3311 = vpow.pop %v3310
    %v3312 = vmul.f32 %v3294, 1.442695
    %v3313 = vpow.pop %v3312
    %v3314 = vmul.f32 %v3295, 1.442695
    %v3315 = vpow.pop %v3314
    %v3316 = vmul.f32 %v3296, 1.442695
    %v3317 = vpow.pop %v3316
    %v3318 = vmul.f32 %v3297, 1.442695
    %v3319 = vpow.pop %v3318
    %v3320 = vmul.f32 %v3298, 1.442695
    %v3321 = vpow.pop %v3320
    %v3322 = vmul.f32 %v3299, 1.442695
    %v3323 = vpow.pop %v3322
    %v3324 = vmul.f32 %v3300, 1.442695
    %v3325 = vpow.pop %v3324
    %v3326 = vmul.f32 %v3301, 1.442695
    %v3327 = vpow.pop %v3326
    %v3328 = vmul.f32 %v3302, 1.442695
    %v3329 = vpow.pop %v3328
    %v3330 = vmul.f32 %v3303, 1.442695
    %v3331 = vpow.pop %v3330
    %v3332 = vmul.f32 %v3304, 1.442695
    %v3333 = vpow.pop %v3332
    %v3334 = vmul.f32 %v3305, 1.442695
    %v3335 = vpow.pop %v3334
    %v3336 = vmul.f32 %v3306, 1.442695
    %v3337 = vpow.pop %v3336
    %v3338 = vmul.f32 %v3307, 1.442695
    %v3339 = vpow.pop %v3338
    %v3340 = vsel %vm318, %v3309, 0.0
    %3341 = vadd.xlane.f32.xlu0 %v3340
    %v3342 = vpop.xlane.xlu0 %3341
    %v3343 = vsel %vm318, %v3311, 0.0
    %3344 = vadd.xlane.f32.xlu0 %v3343
    %v3345 = vpop.xlane.xlu0 %3344
    %v3346 = vsel %vm318, %v3313, 0.0
    %3347 = vadd.xlane.f32.xlu0 %v3346
    %v3348 = vpop.xlane.xlu0 %3347
    %v3349 = vsel %vm318, %v3315, 0.0
    %3350 = vadd.xlane.f32.xlu0 %v3349
    %v3351 = vpop.xlane.xlu0 %3350
    %v3352 = vsel %vm318, %v3317, 0.0
    %3353 = vadd.xlane.f32.xlu0 %v3352
    %v3354 = vpop.xlane.xlu0 %3353
    %v3355 = vsel %vm318, %v3319, 0.0
    %3356 = vadd.xlane.f32.xlu0 %v3355
    %v3357 = vpop.xlane.xlu0 %3356
    %v3358 = vsel %vm318, %v3321, 0.0
    %3359 = vadd.xlane.f32.xlu0 %v3358
    %v3360 = vpop.xlane.xlu0 %3359
    %v3361 = vsel %vm318, %v3323, 0.0
    %3362 = vadd.xlane.f32.xlu0 %v3361
    %v3363 = vpop.xlane.xlu0 %3362
    %v3364 = vsel %vm318, %v3325, 0.0
    %3365 = vadd.xlane.f32.xlu0 %v3364
    %v3366 = vpop.xlane.xlu0 %3365
    %v3367 = vsel %vm318, %v3327, 0.0
    %3368 = vadd.xlane.f32.xlu0 %v3367
    %v3369 = vpop.xlane.xlu0 %3368
    %v3370 = vsel %vm318, %v3329, 0.0
    %3371 = vadd.xlane.f32.xlu0 %v3370
    %v3372 = vpop.xlane.xlu0 %3371
    %v3373 = vsel %vm318, %v3331, 0.0
    %3374 = vadd.xlane.f32.xlu0 %v3373
    %v3375 = vpop.xlane.xlu0 %3374
    %v3376 = vsel %vm318, %v3333, 0.0
    %3377 = vadd.xlane.f32.xlu0 %v3376
    %v3378 = vpop.xlane.xlu0 %3377
    %v3379 = vsel %vm318, %v3335, 0.0
    %3380 = vadd.xlane.f32.xlu0 %v3379
    %v3381 = vpop.xlane.xlu0 %3380
    %v3382 = vsel %vm318, %v3337, 0.0
    %3383 = vadd.xlane.f32.xlu0 %v3382
    %v3384 = vpop.xlane.xlu0 %3383
    %v3385 = vsel %vm318, %v3339, 0.0
    %3386 = vadd.xlane.f32.xlu0 %v3385
    %v3387 = vpop.xlane.xlu0 %3386
    %v3388 = vrcp.pop %v3342
    %v3389 = vrcp.pop %v3345
    %v3390 = vrcp.pop %v3348
    %v3391 = vrcp.pop %v3351
    %v3392 = vrcp.pop %v3354
    %v3393 = vrcp.pop %v3357
    %v3394 = vrcp.pop %v3360
    %v3395 = vrcp.pop %v3363
    %v3396 = vrcp.pop %v3366
    %v3397 = vrcp.pop %v3369
    %v3398 = vrcp.pop %v3372
    %v3399 = vrcp.pop %v3375
    %v3400 = vrcp.pop %v3378
    %v3401 = vrcp.pop %v3381
    %v3402 = vrcp.pop %v3384
    %v3403 = vrcp.pop %v3387
    %v3404 = vmul.f32 %v3309, %v3388
    %v3405 = vmul.f32 %v3311, %v3389
    %v3406 = vmul.f32 %v3313, %v3390
    %v3407 = vmul.f32 %v3315, %v3391
    %v3408 = vmul.f32 %v3317, %v3392
    %v3409 = vmul.f32 %v3319, %v3393
    %v3410 = vmul.f32 %v3321, %v3394
    %v3411 = vmul.f32 %v3323, %v3395
    %v3412 = vmul.f32 %v3325, %v3396
    %v3413 = vmul.f32 %v3327, %v3397
    %v3414 = vmul.f32 %v3329, %v3398
    %v3415 = vmul.f32 %v3331, %v3399
    %v3416 = vmul.f32 %v3333, %v3400
    %v3417 = vmul.f32 %v3335, %v3401
    %v3418 = vmul.f32 %v3337, %v3402
    %v3419 = vmul.f32 %v3339, %v3403
    %3420 = vrot.lane.b32.xlu0 %v201, 80
    %v3421 = vpop.permute.xlu0 %3420
    %3422 = vrot.lane.b32.xlu0 %v204, 80
    %v3423 = vpop.permute.xlu0 %3422
    %v3427 = vsel %vm318, %v3404, 0
    %v3430 = vsel %vm318, %v3405, 0
    %3432 = vmatpush.msra.mxu0 0.0
    %3433 = vmatpush.msra.mxu0 0.0
    %3434 = vmatpush.msra.mxu0 0.0
    %3435 = vmatpush.msra.mxu0 0.0
    %3436 = vmatpush.msra.mxu0 0.0
    %3437 = vmatpush.msra.mxu0 0.0
    %3438 = vmatpush.msra.mxu0 0.0
    %3439 = vmatpush.msra.mxu0 0.0
    %3440 = vmatpush.msra.mxu0 0.0
    %3441 = vmatpush.msra.mxu0 0.0
    %3442 = vmatpush.msra.mxu0 0.0
    %3443 = vmatpush.msra.mxu0 0.0
    %3444 = vmatpush.msra.mxu0 0.0
    %3445 = vmatpush.msra.mxu0 0.0
    %3446 = vmatpush.msra.mxu0 %v3423
    %3447 = vmatpush.msra.mxu0 %v3421
    %3448 = vmatmul.f32.gmra.mxu0 %v3427
    %v3449 = vpop.f32.mrf.mxu0
    %v3450 = vadd.f32 0.0, %v3449
    %3451 = vmatmul.f32.gmra.mxu0 %v3430
    %v3452 = vpop.f32.mrf.mxu0
    %v3453 = vadd.f32 0.0, %v3452
    %3454 = vdwg.mxu0
    %3455 = vrot.lane.b32.xlu0 %v207, 80
    %v3456 = vpop.permute.xlu0 %3455
    %3457 = vrot.lane.b32.xlu0 %v210, 80
    %v3458 = vpop.permute.xlu0 %3457
    %v3462 = vsel %vm318, %v3406, 0
    %v3465 = vsel %vm318, %v3407, 0
    %3467 = vmatpush.msra.mxu0 0.0
    %3468 = vmatpush.msra.mxu0 0.0
    %3469 = vmatpush.msra.mxu0 0.0
    %3470 = vmatpush.msra.mxu0 0.0
    %3471 = vmatpush.msra.mxu0 0.0
    %3472 = vmatpush.msra.mxu0 0.0
    %3473 = vmatpush.msra.mxu0 0.0
    %3474 = vmatpush.msra.mxu0 0.0
    %3475 = vmatpush.msra.mxu0 0.0
    %3476 = vmatpush.msra.mxu0 0.0
    %3477 = vmatpush.msra.mxu0 0.0
    %3478 = vmatpush.msra.mxu0 0.0
    %3479 = vmatpush.msra.mxu0 0.0
    %3480 = vmatpush.msra.mxu0 0.0
    %3481 = vmatpush.msra.mxu0 %v3458
    %3482 = vmatpush.msra.mxu0 %v3456
    %3483 = vmatmul.f32.gmra.mxu0 %v3462
    %v3484 = vpop.f32.mrf.mxu0
    %v3485 = vadd.f32 0.0, %v3484
    %3486 = vmatmul.f32.gmra.mxu0 %v3465
    %v3487 = vpop.f32.mrf.mxu0
    %v3488 = vadd.f32 0.0, %v3487
    %3489 = vdwg.mxu0
    %3490 = vrot.lane.b32.xlu0 %v213, 80
    %v3491 = vpop.permute.xlu0 %3490
    %3492 = vrot.lane.b32.xlu0 %v216, 80
    %v3493 = vpop.permute.xlu0 %3492
    %v3497 = vsel %vm318, %v3408, 0
    %v3500 = vsel %vm318, %v3409, 0
    %3502 = vmatpush.msra.mxu0 0.0
    %3503 = vmatpush.msra.mxu0 0.0
    %3504 = vmatpush.msra.mxu0 0.0
    %3505 = vmatpush.msra.mxu0 0.0
    %3506 = vmatpush.msra.mxu0 0.0
    %3507 = vmatpush.msra.mxu0 0.0
    %3508 = vmatpush.msra.mxu0 0.0
    %3509 = vmatpush.msra.mxu0 0.0
    %3510 = vmatpush.msra.mxu0 0.0
    %3511 = vmatpush.msra.mxu0 0.0
    %3512 = vmatpush.msra.mxu0 0.0
    %3513 = vmatpush.msra.mxu0 0.0
    %3514 = vmatpush.msra.mxu0 0.0
    %3515 = vmatpush.msra.mxu0 0.0
    %3516 = vmatpush.msra.mxu0 %v3493
    %3517 = vmatpush.msra.mxu0 %v3491
    %3518 = vmatmul.f32.gmra.mxu0 %v3497
    %v3519 = vpop.f32.mrf.mxu0
    %v3520 = vadd.f32 0.0, %v3519
    %3521 = vmatmul.f32.gmra.mxu0 %v3500
    %v3522 = vpop.f32.mrf.mxu0
    %v3523 = vadd.f32 0.0, %v3522
    %3524 = vdwg.mxu0
    %3525 = vrot.lane.b32.xlu0 %v219, 80
    %v3526 = vpop.permute.xlu0 %3525
    %3527 = vrot.lane.b32.xlu0 %v222, 80
    %v3528 = vpop.permute.xlu0 %3527
    %v3532 = vsel %vm318, %v3410, 0
    %v3535 = vsel %vm318, %v3411, 0
    %3537 = vmatpush.msra.mxu0 0.0
    %3538 = vmatpush.msra.mxu0 0.0
    %3539 = vmatpush.msra.mxu0 0.0
    %3540 = vmatpush.msra.mxu0 0.0
    %3541 = vmatpush.msra.mxu0 0.0
    %3542 = vmatpush.msra.mxu0 0.0
    %3543 = vmatpush.msra.mxu0 0.0
    %3544 = vmatpush.msra.mxu0 0.0
    %3545 = vmatpush.msra.mxu0 0.0
    %3546 = vmatpush.msra.mxu0 0.0
    %3547 = vmatpush.msra.mxu0 0.0
    %3548 = vmatpush.msra.mxu0 0.0
    %3549 = vmatpush.msra.mxu0 0.0
    %3550 = vmatpush.msra.mxu0 0.0
    %3551 = vmatpush.msra.mxu0 %v3528
    %3552 = vmatpush.msra.mxu0 %v3526
    %3553 = vmatmul.f32.gmra.mxu0 %v3532
    %v3554 = vpop.f32.mrf.mxu0
    %v3555 = vadd.f32 0.0, %v3554
    %3556 = vmatmul.f32.gmra.mxu0 %v3535
    %v3557 = vpop.f32.mrf.mxu0
    %v3558 = vadd.f32 0.0, %v3557
    %3559 = vdwg.mxu0
    %3560 = vrot.lane.b32.xlu0 %v225, 80
    %v3561 = vpop.permute.xlu0 %3560
    %3562 = vrot.lane.b32.xlu0 %v228, 80
    %v3563 = vpop.permute.xlu0 %3562
    %v3567 = vsel %vm318, %v3412, 0
    %v3570 = vsel %vm318, %v3413, 0
    %3572 = vmatpush.msra.mxu0 0.0
    %3573 = vmatpush.msra.mxu0 0.0
    %3574 = vmatpush.msra.mxu0 0.0
    %3575 = vmatpush.msra.mxu0 0.0
    %3576 = vmatpush.msra.mxu0 0.0
    %3577 = vmatpush.msra.mxu0 0.0
    %3578 = vmatpush.msra.mxu0 0.0
    %3579 = vmatpush.msra.mxu0 0.0
    %3580 = vmatpush.msra.mxu0 0.0
    %3581 = vmatpush.msra.mxu0 0.0
    %3582 = vmatpush.msra.mxu0 0.0
    %3583 = vmatpush.msra.mxu0 0.0
    %3584 = vmatpush.msra.mxu0 0.0
    %3585 = vmatpush.msra.mxu0 0.0
    %3586 = vmatpush.msra.mxu0 %v3563
    %3587 = vmatpush.msra.mxu0 %v3561
    %3588 = vmatmul.f32.gmra.mxu0 %v3567
    %v3589 = vpop.f32.mrf.mxu0
    %v3590 = vadd.f32 0.0, %v3589
    %3591 = vmatmul.f32.gmra.mxu0 %v3570
    %v3592 = vpop.f32.mrf.mxu0
    %v3593 = vadd.f32 0.0, %v3592
    %3594 = vdwg.mxu0
    %3595 = vrot.lane.b32.xlu0 %v231, 80
    %v3596 = vpop.permute.xlu0 %3595
    %3597 = vrot.lane.b32.xlu0 %v234, 80
    %v3598 = vpop.permute.xlu0 %3597
    %v3602 = vsel %vm318, %v3414, 0
    %v3605 = vsel %vm318, %v3415, 0
    %3607 = vmatpush.msra.mxu0 0.0
    %3608 = vmatpush.msra.mxu0 0.0
    %3609 = vmatpush.msra.mxu0 0.0
    %3610 = vmatpush.msra.mxu0 0.0
    %3611 = vmatpush.msra.mxu0 0.0
    %3612 = vmatpush.msra.mxu0 0.0
    %3613 = vmatpush.msra.mxu0 0.0
    %3614 = vmatpush.msra.mxu0 0.0
    %3615 = vmatpush.msra.mxu0 0.0
    %3616 = vmatpush.msra.mxu0 0.0
    %3617 = vmatpush.msra.mxu0 0.0
    %3618 = vmatpush.msra.mxu0 0.0
    %3619 = vmatpush.msra.mxu0 0.0
    %3620 = vmatpush.msra.mxu0 0.0
    %3621 = vmatpush.msra.mxu0 %v3598
    %3622 = vmatpush.msra.mxu0 %v3596
    %3623 = vmatmul.f32.gmra.mxu0 %v3602
    %v3624 = vpop.f32.mrf.mxu0
    %v3625 = vadd.f32 0.0, %v3624
    %3626 = vmatmul.f32.gmra.mxu0 %v3605
    %v3627 = vpop.f32.mrf.mxu0
    %v3628 = vadd.f32 0.0, %v3627
    %3629 = vdwg.mxu0
    %3630 = vrot.lane.b32.xlu0 %v237, 80
    %v3631 = vpop.permute.xlu0 %3630
    %3632 = vrot.lane.b32.xlu0 %v240, 80
    %v3633 = vpop.permute.xlu0 %3632
    %v3637 = vsel %vm318, %v3416, 0
    %v3640 = vsel %vm318, %v3417, 0
    %3642 = vmatpush.msra.mxu0 0.0
    %3643 = vmatpush.msra.mxu0 0.0
    %3644 = vmatpush.msra.mxu0 0.0
    %3645 = vmatpush.msra.mxu0 0.0
    %3646 = vmatpush.msra.mxu0 0.0
    %3647 = vmatpush.msra.mxu0 0.0
    %3648 = vmatpush.msra.mxu0 0.0
    %3649 = vmatpush.msra.mxu0 0.0
    %3650 = vmatpush.msra.mxu0 0.0
    %3651 = vmatpush.msra.mxu0 0.0
    %3652 = vmatpush.msra.mxu0 0.0
    %3653 = vmatpush.msra.mxu0 0.0
    %3654 = vmatpush.msra.mxu0 0.0
    %3655 = vmatpush.msra.mxu0 0.0
    %3656 = vmatpush.msra.mxu0 %v3633
    %3657 = vmatpush.msra.mxu0 %v3631
    %3658 = vmatmul.f32.gmra.mxu0 %v3637
    %v3659 = vpop.f32.mrf.mxu0
    %v3660 = vadd.f32 0.0, %v3659
    %3661 = vmatmul.f32.gmra.mxu0 %v3640
    %v3662 = vpop.f32.mrf.mxu0
    %v3663 = vadd.f32 0.0, %v3662
    %3664 = vdwg.mxu0
    %3665 = vrot.lane.b32.xlu0 %v243, 80
    %v3666 = vpop.permute.xlu0 %3665
    %3667 = vrot.lane.b32.xlu0 %v246, 80
    %v3668 = vpop.permute.xlu0 %3667
    %v3672 = vsel %vm318, %v3418, 0
    %v3675 = vsel %vm318, %v3419, 0
    %3677 = vmatpush.msra.mxu0 0.0
    %3678 = vmatpush.msra.mxu0 0.0
    %3679 = vmatpush.msra.mxu0 0.0
    %3680 = vmatpush.msra.mxu0 0.0
    %3681 = vmatpush.msra.mxu0 0.0
    %3682 = vmatpush.msra.mxu0 0.0
    %3683 = vmatpush.msra.mxu0 0.0
    %3684 = vmatpush.msra.mxu0 0.0
    %3685 = vmatpush.msra.mxu0 0.0
    %3686 = vmatpush.msra.mxu0 0.0
    %3687 = vmatpush.msra.mxu0 0.0
    %3688 = vmatpush.msra.mxu0 0.0
    %3689 = vmatpush.msra.mxu0 0.0
    %3690 = vmatpush.msra.mxu0 0.0
    %3691 = vmatpush.msra.mxu0 %v3668
    %3692 = vmatpush.msra.mxu0 %v3666
    %3693 = vmatmul.f32.gmra.mxu0 %v3672
    %v3694 = vpop.f32.mrf.mxu0
    %v3695 = vadd.f32 0.0, %v3694
    %3696 = vmatmul.f32.gmra.mxu0 %v3675
    %v3697 = vpop.f32.mrf.mxu0
    %v3698 = vadd.f32 0.0, %v3697
    %3699 = vdwg.mxu0
    %s3700 = scalar_lea.vmem %s3, 48
    %v3701 = vld [vmem:[%s3700] sm:$0xff]
    %v3702 = vld [vmem:[%s3700 + $0x8] sm:$0xff]
    %v3704 = vsel %vm318, %v3450, 0
    %v3707 = vsel %vm318, %v3453, 0
    %v3710 = vsel %vm318, %v3485, 0
    %v3713 = vsel %vm318, %v3488, 0
    %v3716 = vsel %vm318, %v3520, 0
    %v3719 = vsel %vm318, %v3523, 0
    %v3722 = vsel %vm318, %v3555, 0
    %v3725 = vsel %vm318, %v3558, 0
    %v3728 = vsel %vm318, %v3590, 0
    %v3731 = vsel %vm318, %v3593, 0
    %v3734 = vsel %vm318, %v3625, 0
    %v3737 = vsel %vm318, %v3628, 0
    %v3740 = vsel %vm318, %v3660, 0
    %v3743 = vsel %vm318, %v3663, 0
    %v3746 = vsel %vm318, %v3695, 0
    %v3749 = vsel %vm318, %v3698, 0
    %3751 = vmatpush.msra.mxu0 0.0
    %3752 = vmatpush.msra.mxu0 0.0
    %3753 = vmatpush.msra.mxu0 0.0
    %3754 = vmatpush.msra.mxu0 0.0
    %3755 = vmatpush.msra.mxu0 0.0
    %3756 = vmatpush.msra.mxu0 0.0
    %3757 = vmatpush.msra.mxu0 0.0
    %3758 = vmatpush.msra.mxu0 0.0
    %3759 = vmatpush.msra.mxu0 0.0
    %3760 = vmatpush.msra.mxu0 0.0
    %3761 = vmatpush.msra.mxu0 0.0
    %3762 = vmatpush.msra.mxu0 0.0
    %3763 = vmatpush.msra.mxu0 0.0
    %3764 = vmatpush.msra.mxu0 0.0
    %3765 = vmatpush.msra.mxu0 %v3702
    %3766 = vmatpush.msra.mxu0 %v3701
    %3767 = vmatmul.f32.gmra.mxu0 %v3704
    %v3768 = vpop.f32.mrf.mxu0
    %v3769 = vadd.f32 0.0, %v3768
    %3770 = vmatmul.f32.gmra.mxu0 %v3707
    %v3771 = vpop.f32.mrf.mxu0
    %v3772 = vadd.f32 0.0, %v3771
    %3773 = vmatmul.f32.gmra.mxu0 %v3710
    %v3774 = vpop.f32.mrf.mxu0
    %v3775 = vadd.f32 0.0, %v3774
    %3776 = vmatmul.f32.gmra.mxu0 %v3713
    %v3777 = vpop.f32.mrf.mxu0
    %v3778 = vadd.f32 0.0, %v3777
    %3779 = vmatmul.f32.gmra.mxu0 %v3716
    %v3780 = vpop.f32.mrf.mxu0
    %v3781 = vadd.f32 0.0, %v3780
    %3782 = vmatmul.f32.gmra.mxu0 %v3719
    %v3783 = vpop.f32.mrf.mxu0
    %v3784 = vadd.f32 0.0, %v3783
    %3785 = vmatmul.f32.gmra.mxu0 %v3722
    %v3786 = vpop.f32.mrf.mxu0
    %v3787 = vadd.f32 0.0, %v3786
    %3788 = vmatmul.f32.gmra.mxu0 %v3725
    %v3789 = vpop.f32.mrf.mxu0
    %v3790 = vadd.f32 0.0, %v3789
    %3791 = vmatmul.f32.gmra.mxu0 %v3728
    %v3792 = vpop.f32.mrf.mxu0
    %v3793 = vadd.f32 0.0, %v3792
    %3794 = vmatmul.f32.gmra.mxu0 %v3731
    %v3795 = vpop.f32.mrf.mxu0
    %v3796 = vadd.f32 0.0, %v3795
    %3797 = vmatmul.f32.gmra.mxu0 %v3734
    %v3798 = vpop.f32.mrf.mxu0
    %v3799 = vadd.f32 0.0, %v3798
    %3800 = vmatmul.f32.gmra.mxu0 %v3737
    %v3801 = vpop.f32.mrf.mxu0
    %v3802 = vadd.f32 0.0, %v3801
    %3803 = vmatmul.f32.gmra.mxu0 %v3740
    %v3804 = vpop.f32.mrf.mxu0
    %v3805 = vadd.f32 0.0, %v3804
    %3806 = vmatmul.f32.gmra.mxu0 %v3743
    %v3807 = vpop.f32.mrf.mxu0
    %v3808 = vadd.f32 0.0, %v3807
    %3809 = vmatmul.f32.gmra.mxu0 %v3746
    %v3810 = vpop.f32.mrf.mxu0
    %v3811 = vadd.f32 0.0, %v3810
    %3812 = vmatmul.f32.gmra.mxu0 %v3749
    %v3813 = vpop.f32.mrf.mxu0
    %v3814 = vadd.f32 0.0, %v3813
    %3815 = vdwg.mxu0
    %v3816 = vadd.f32 %v2916, %v3769
    %v3817 = vadd.f32 %v2917, %v3772
    %v3818 = vadd.f32 %v2918, %v3775
    %v3819 = vadd.f32 %v2919, %v3778
    %v3820 = vadd.f32 %v2920, %v3781
    %v3821 = vadd.f32 %v2921, %v3784
    %v3822 = vadd.f32 %v2922, %v3787
    %v3823 = vadd.f32 %v2923, %v3790
    %v3824 = vadd.f32 %v2924, %v3793
    %v3825 = vadd.f32 %v2925, %v3796
    %v3826 = vadd.f32 %v2926, %v3799
    %v3827 = vadd.f32 %v2927, %v3802
    %v3828 = vadd.f32 %v2928, %v3805
    %v3829 = vadd.f32 %v2929, %v3808
    %v3830 = vadd.f32 %v2930, %v3811
    %v3831 = vadd.f32 %v2931, %v3814
    %v3832 = vld [vmem:[%s4] sm:$0x1]
    %v3834 = vperm.slane %v3832, 0
    %v3836 = vadd.f32 %v3816, %v3834
    %v3837 = vadd.f32 %v3817, %v3834
    %v3838 = vadd.f32 %v3818, %v3834
    %v3839 = vadd.f32 %v3819, %v3834
    %v3840 = vadd.f32 %v3820, %v3834
    %v3841 = vadd.f32 %v3821, %v3834
    %v3842 = vadd.f32 %v3822, %v3834
    %v3843 = vadd.f32 %v3823, %v3834
    %v3844 = vadd.f32 %v3824, %v3834
    %v3845 = vadd.f32 %v3825, %v3834
    %v3846 = vadd.f32 %v3826, %v3834
    %v3847 = vadd.f32 %v3827, %v3834
    %v3848 = vadd.f32 %v3828, %v3834
    %v3849 = vadd.f32 %v3829, %v3834
    %v3850 = vadd.f32 %v3830, %v3834
    %v3851 = vadd.f32 %v3831, %v3834
    %3852 = vst.msk [vmem:[%s6] sm:$0xff] %vm69, %v3836
    %3853 = vst.msk [vmem:[%s6 + $0x8] sm:$0xff] %vm69, %v3837
    %3854 = vst.msk [vmem:[%s6 + $0x10] sm:$0xff] %vm69, %v3838
    %3855 = vst.msk [vmem:[%s6 + $0x18] sm:$0xff] %vm69, %v3839
    %3856 = vst.msk [vmem:[%s6 + $0x20] sm:$0xff] %vm69, %v3840
    %3857 = vst.msk [vmem:[%s6 + $0x28] sm:$0xff] %vm69, %v3841
    %3858 = vst.msk [vmem:[%s6 + $0x30] sm:$0xff] %vm69, %v3842
    %3859 = vst.msk [vmem:[%s6 + $0x38] sm:$0xff] %vm69, %v3843
    %3860 = vst.msk [vmem:[%s6 + $0x40] sm:$0xff] %vm69, %v3844
    %3861 = vst.msk [vmem:[%s6 + $0x48] sm:$0xff] %vm69, %v3845
    %3862 = vst.msk [vmem:[%s6 + $0x50] sm:$0xff] %vm69, %v3846
    %3863 = vst.msk [vmem:[%s6 + $0x58] sm:$0xff] %vm69, %v3847
    %3864 = vst.msk [vmem:[%s6 + $0x60] sm:$0xff] %vm69, %v3848
    %3865 = vst.msk [vmem:[%s6 + $0x68] sm:$0xff] %vm69, %v3849
    %3866 = vst.msk [vmem:[%s6 + $0x70] sm:$0xff] %vm69, %v3850
    %3867 = vst.msk [vmem:[%s6 + $0x78] sm:$0xff] %vm69, %v3851
    // Predicated region
    $region30: #{tpu_custom_call.1} parent=1 // pred_check
      _
    $region31: #{tpu_custom_call.1} parent=1 // pred_check_branch
      %3869 = sbr.rel (0) target = $region33
    $region32: #{tpu_custom_call.1} parent=1 // pred_region
      _
    $region33: #{tpu_custom_call.1} parent=1 // pred_fallthru
      _
    // Predicated region
    $region34: #{tpu_custom_call.1} parent=1 // pred_check
      _
    $region35: #{tpu_custom_call.1} parent=1 // pred_check_branch
      %3871 = sbr.rel (0) target = $region37
    $region36: #{tpu_custom_call.1} parent=1 // pred_region
      _
    $region37: #{tpu_custom_call.1} parent=1 // pred_fallthru
      _
    %3872 = vsyncpa [#allocation3], 1

</llo_original>
